<compile_context>
chip_gen: v7x
topology: tpu7x:2x2x1
jax: 0.10.0
libtpu: 0.0.40
codegen_flags: <defaults>
</compile_context>

<pallas_src>
import jax
import jax.numpy as jnp
from jax import lax
from jax.experimental import pallas as pl
from jax.experimental.pallas import tpu as pltpu

# ----------------------------- configuration -------------------------------
B = 2                  # batch
OBS_DIM = 16           # observation_shape = (16,)
H = W = 8              # environment-attribute grid
INPUT_CHANNELS = 2     # Actor.input_channels (one-hot classes)
LATENT = 15            # Actor.latent_size
C1, C2 = 32, 64        # Actor.arch_env_encoder
HIDDEN = (64, 64)      # backbone arch (small stand-in for the (512, 512) default)
ACTION_PARAMS = 8      # action_output.input_size (e.g. mean & log_std of a 4-d action)

OH1, OW1 = H - 2, W - 2          # 6, 6   (3x3 VALID conv #1)
OH2, OW2 = OH1 - 2, OW1 - 2      # 4, 4   (3x3 VALID conv #2)
P2 = OH2 * OW2                   # 16
CNN_FLAT = P2 * C2               # 1024
OUT_LANES = 128                  # lane-dense output slab width


# ------------------------------- fused kernel -------------------------------
def _actor_fused_kernel(acols_ref, o_ref, g_ref,
                        dw1_ref, base1_ref,
                        cw2_ref, cb2_ref, cw3_ref, cb3_ref,
                        w1o_ref, w1g_ref, w1l_ref, b1_ref,
                        w2_ref, b2_ref, w3_ref, b3_ref,
                        out_ref,
                        h1_s, cols2_s, flat_s):
    f32 = jnp.float32

    # ---- conv1 (exploits the 2-class one-hot algebraically) ----------------
    # h1[row=(b,i,j), c] = relu(base[c] + sum_tap attr[b,i+kh,j+kw] * dw[tap,c])
    h1 = (jnp.dot(acols_ref[...], dw1_ref[...], preferred_element_type=f32)
          + base1_ref[...])
    h1_s[...] = jnp.maximum(h1, 0.0)                       # [B*OH1*OW1, C1]

    # ---- conv2: build im2col in VMEM scratch via 2D ref-slice copies --------
    for b in range(B):
        for kh in range(3):
            for oh2 in range(OH2):
                src = b * OH1 * OW1 + (oh2 + kh) * OW1
                dst = b * P2 + oh2 * OW2
                for kw in range(3):
                    tap = kh * 3 + kw
                    cols2_s[dst:dst + OW2, tap * C1:(tap + 1) * C1] = (
                        h1_s[src + kw:src + kw + OW2, :])

    cw2 = cw2_ref[...].astype(f32)                         # bf16 -> f32 in VMEM
    h2 = jnp.dot(cols2_s[...], cw2, preferred_element_type=f32) + cb2_ref[...]
    h2 = jnp.maximum(h2, 0.0)                              # [B*P2, C2], rows b-major

    # ---- NHWC flatten -> [B, CNN_FLAT] via scratch (no in-kernel reshape) ---
    for b in range(B):
        for p in range(P2):
            flat_s[b:b + 1, p * C2:(p + 1) * C2] = h2[b * P2 + p:b * P2 + p + 1, :]

    # ---- CNN head linear -> latent ------------------------------------------
    cw3 = cw3_ref[...].astype(f32)
    latent = jnp.dot(flat_s[...], cw3, preferred_element_type=f32) + cb3_ref[...]

    # ---- MLP backbone; first-layer concat realized as a split matmul --------
    h = (jnp.dot(o_ref[...], w1o_ref[...], preferred_element_type=f32)
         + jnp.dot(g_ref[...], w1g_ref[...], preferred_element_type=f32)
         + jnp.dot(latent, w1l_ref[...], preferred_element_type=f32)
         + b1_ref[...])
    h = jnp.maximum(h, 0.0)
    h = jnp.maximum(jnp.dot(h, w2_ref[...], preferred_element_type=f32)
                    + b2_ref[...], 0.0)
    action_params = (jnp.dot(h, w3_ref[...], preferred_element_type=f32)
                     + b3_ref[...])

    # ---- lane-dense [B, 128] output slab ------------------------------------
    out_ref[:, 0:ACTION_PARAMS] = action_params
    out_ref[:, ACTION_PARAMS:ACTION_PARAMS + HIDDEN[1]] = h
    out_ref[:, ACTION_PARAMS + HIDDEN[1]:] = jnp.zeros(
        (B, OUT_LANES - ACTION_PARAMS - HIDDEN[1]), f32)


def _full_spec(shape):
    nd = len(shape)
    return pl.BlockSpec(shape, lambda i, _nd=nd: (0,) * _nd)


def actor_fused(kp, acols, o, g):
    args = (acols, o, g,
            kp['dw1'], kp['base1'], kp['cw2k'], kp['cb2'], kp['cw3k'], kp['cb3'],
            kp['w1o'], kp['w1g'], kp['w1l'], kp['b1'],
            kp['w2'], kp['b2'], kp['w3'], kp['b3'])
    return pl.pallas_call(
        _actor_fused_kernel,
        out_shape=jax.ShapeDtypeStruct((B, OUT_LANES), jnp.float32),
        grid=(1,),
        in_specs=[_full_spec(a.shape) for a in args],
        out_specs=_full_spec((B, OUT_LANES)),
        scratch_shapes=[pltpu.VMEM((B * OH1 * OW1, C1), jnp.float32),   # h1
                        pltpu.VMEM((B * P2, 9 * C1), jnp.float32),      # conv2 im2col
                        pltpu.VMEM((B, CNN_FLAT), jnp.float32)],        # cnn_flat
        compiler_params=pltpu.CompilerParams(dimension_semantics=("arbitrary",)),
    )(*args)


# ------------------------------ wrapper (plain JAX) --------------------------
def actor_forward(kp, o, g, env_attr):
    # 9-tap im2col of the raw *integer* attribute grid (tiny, ~2.6 KB); this is
    # the only host-side glue and replaces one_hot + NCHW permute + float
    # im2col of the original pipeline.
    a = env_attr.astype(jnp.float32)
    cols = jnp.stack([a[:, kh:kh + OH1, kw:kw + OW1]
                      for kh in range(3) for kw in range(3)], axis=-1)  # [B,6,6,9]
    acols = cols.reshape(B * OH1 * OW1, 9)

    slab = actor_fused(kp, acols, o, g)
    out = slab[:, :ACTION_PARAMS]
    hid = slab[:, ACTION_PARAMS:ACTION_PARAMS + HIDDEN[1]]
    # TODO(synk): action_output wraps `out` in a torch Distribution (e.g.
    # TanhNormal); no Pallas equivalent, so raw distribution parameters are
    # returned (hid is exposed only for validation, since w3 is zero-init).
    return out, hid


def prepare_params(p):
    """One-time offline re-layout of module params into the kernel layout."""
    w0 = p['cw1'][:, :, 0, :].reshape(9, C1)               # one-hot channel 0
    w1 = p['cw1'][:, :, 1, :].reshape(9, C1)               # one-hot channel 1
    return dict(
        dw1=(w1 - w0).astype(jnp.float32),                                   # [9, C1]
        base1=(p['cb1'] + w0.sum(axis=0, keepdims=True)).astype(jnp.float32),  # [1, C1]
        cw2k=p['cw2'].reshape(9 * C1, C2),                 # bf16, (kh,kw,ci)-major rows
        cb2=p['cb2'],
        cw3k=p['cw3'],                                     # bf16, [CNN_FLAT, LATENT]
        cb3=p['cb3'],
        w1o=p['w1'][:OBS_DIM],
        w1g=p['w1'][OBS_DIM:2 * OBS_DIM],
        w1l=p['w1'][2 * OBS_DIM:],
        b1=p['b1'], w2=p['w2'], b2=p['b2'], w3=p['w3'], b3=p['b3'],
    )


# ------------------------------- reference ----------------------------------
def reference_forward(p, o, g, env_attr):
    # Follows the PyTorch module: stack([o,g]) -> identity encoding -> flatten
    # (== concat), one_hot conv CNN, concat with latent, ReLU MLP.
    # NOTE: NHWC flatten order is used consistently on both sides; porting
    # trained PyTorch (NCHW-flatten) weights requires permuting cw3's rows.
    x = jax.nn.one_hot(env_attr.astype(jnp.int32), INPUT_CHANNELS, dtype=jnp.float32)
    dn = ('NHWC', 'HWIO', 'NHWC')
    h1 = jax.nn.relu(lax.conv_general_dilated(x, p['cw1'], (1, 1), 'VALID',
                                              dimension_numbers=dn)
                     + p['cb1'].reshape(1, 1, 1, -1))
    h2 = jax.nn.relu(lax.conv_general_dilated(h1, p['cw2'].astype(jnp.float32), (1, 1),
                                              'VALID', dimension_numbers=dn)
                     + p['cb2'].reshape(1, 1, 1, -1))
    cnn_flat = h2.reshape(h2.shape[0], -1)
    latent = cnn_flat @ p['cw3'].astype(jnp.float32) + p['cb3']
    xin = jnp.concatenate([o, g, latent], axis=-1)
    h = jax.nn.relu(xin @ p['w1'] + p['b1'])
    h = jax.nn.relu(h @ p['w2'] + p['b2'])
    out = h @ p['w3'] + p['b3']
    return out, h


# ------------------------------- parameters ---------------------------------
def init_params(key):
    ks = jax.random.split(key, 6)

    def winit(k, shape, fan_in, dtype=jnp.float32):
        return (jax.random.normal(k, shape, jnp.float32)
                / jnp.sqrt(float(fan_in))).astype(dtype)

    return dict(
        # CNN env_encoder (large weights stored bf16; f32 math everywhere)
        cw1=winit(ks[0], (3, 3, INPUT_CHANNELS, C1), 9 * INPUT_CHANNELS),
        cb1=jnp.zeros((1, C1), jnp.float32),
        cw2=winit(ks[1], (3, 3, C1, C2), 9 * C1, jnp.bfloat16),
        cb2=jnp.zeros((1, C2), jnp.float32),
        cw3=winit(ks[2], (CNN_FLAT, LATENT), CNN_FLAT, jnp.bfloat16),
        cb3=winit(ks[3], (1, LATENT), CNN_FLAT),
        # MLP backbone
        w1=winit(ks[4], (2 * OBS_DIM + LATENT, HIDDEN[0]), 2 * OBS_DIM + LATENT),
        b1=jnp.zeros((1, HIDDEN[0]), jnp.float32),
        w2=winit(ks[5], (HIDDEN[0], HIDDEN[1]), HIDDEN[0]),
        b2=jnp.zeros((1, HIDDEN[1]), jnp.float32),
        # zero_init_last_fc=True
        w3=jnp.zeros((HIDDEN[1], ACTION_PARAMS), jnp.float32),
        b3=jnp.zeros((1, ACTION_PARAMS), jnp.float32),
    )


# --------------------------------- main --------------------------------------
if __name__ == "__main__":
    key = jax.random.PRNGKey(0)
    k_par, k_o, k_g, k_a, k_w3, k_b3 = jax.random.split(key, 6)

    params = init_params(k_par)
    kparams = prepare_params(params)

    o = jax.random.normal(k_o, (B, OBS_DIM), jnp.float32)
    g = jax.random.normal(k_g, (B, OBS_DIM), jnp.float32)
    env_attr = jax.random.randint(k_a, (B, H, W), 0, INPUT_CHANNELS)

    fwd = jax.jit(actor_forward)
    out, hid = fwd(kparams, o, g, env_attr)
    out = jax.block_until_ready(out)
    hid = jax.block_until_ready(hid)

    ref_out, ref_hid = reference_forward(params, o, g, env_attr)
    assert out.shape == (B, ACTION_PARAMS)
    assert jnp.allclose(hid, ref_hid, rtol=2e-3, atol=2e-3), "hidden mismatch"
    assert jnp.allclose(out, ref_out, rtol=2e-3, atol=2e-3), "output mismatch"

    # zero_init_last_fc makes `out == 0`, so also validate the head matmul with
    # a non-zero last layer (addresses the vacuous-check concern).
    params2 = dict(params,
                   w3=0.1 * jax.random.normal(k_w3, (HIDDEN[1], ACTION_PARAMS),
                                              jnp.float32),
                   b3=0.1 * jax.random.normal(k_b3, (1, ACTION_PARAMS), jnp.float32))
    out2, _ = fwd(prepare_params(params2), o, g, env_attr)
    out2 = jax.block_until_ready(out2)
    ref_out2, _ = reference_forward(params2, o, g, env_attr)
    assert jnp.allclose(out2, ref_out2, rtol=2e-3, atol=2e-3), \
        "output mismatch (non-zero last fc)"

    print("KERNEL_OK")
</pallas_src>

<mosaic_0001>
module attributes {stable_mosaic.version = 11 : i64} {
  func.func @_actor_fused_kernel(%arg0: i32, %arg1: memref<72x9xf32, #tpu.memory_space<vmem>>, %arg2: memref<2x16xf32, #tpu.memory_space<vmem>>, %arg3: memref<2x16xf32, #tpu.memory_space<vmem>>, %arg4: memref<9x32xf32, #tpu.memory_space<vmem>>, %arg5: memref<1x32xf32, #tpu.memory_space<vmem>>, %arg6: memref<288x64xbf16, #tpu.memory_space<vmem>>, %arg7: memref<1x64xf32, #tpu.memory_space<vmem>>, %arg8: memref<1024x15xbf16, #tpu.memory_space<vmem>>, %arg9: memref<1x15xf32, #tpu.memory_space<vmem>>, %arg10: memref<16x64xf32, #tpu.memory_space<vmem>>, %arg11: memref<16x64xf32, #tpu.memory_space<vmem>>, %arg12: memref<15x64xf32, #tpu.memory_space<vmem>>, %arg13: memref<1x64xf32, #tpu.memory_space<vmem>>, %arg14: memref<64x64xf32, #tpu.memory_space<vmem>>, %arg15: memref<1x64xf32, #tpu.memory_space<vmem>>, %arg16: memref<64x8xf32, #tpu.memory_space<vmem>>, %arg17: memref<1x8xf32, #tpu.memory_space<vmem>>, %arg18: memref<2x128xf32, #tpu.memory_space<vmem>>, %arg19: memref<72x32xf32, #tpu.memory_space<vmem>>, %arg20: memref<32x288xf32, #tpu.memory_space<vmem>>, %arg21: memref<2x1024xf32, #tpu.memory_space<vmem>>) attributes {dimension_semantics = [#tpu.dimension_semantics<arbitrary>], iteration_bounds = array<i64: 1>, scalar_prefetch = 0 : i64, scratch_operands = 3 : i64, tpu.core_type = #tpu.core_type<tc>, window_params = [{pipeline_mode = #tpu.pipeline_mode<synchronous>, transform_indices = @transform_0, window_bounds = array<i64: 72, 9>}, {pipeline_mode = #tpu.pipeline_mode<synchronous>, transform_indices = @transform_1, window_bounds = array<i64: 2, 16>}, {pipeline_mode = #tpu.pipeline_mode<synchronous>, transform_indices = @transform_2, window_bounds = array<i64: 2, 16>}, {pipeline_mode = #tpu.pipeline_mode<synchronous>, transform_indices = @transform_3, window_bounds = array<i64: 9, 32>}, {pipeline_mode = #tpu.pipeline_mode<synchronous>, transform_indices = @transform_4, window_bounds = array<i64: 1, 32>}, {pipeline_mode = #tpu.pipeline_mode<synchronous>, transform_indices = @transform_5, window_bounds = array<i64: 288, 64>}, {pipeline_mode = #tpu.pipeline_mode<synchronous>, transform_indices = @transform_6, window_bounds = array<i64: 1, 64>}, {pipeline_mode = #tpu.pipeline_mode<synchronous>, transform_indices = @transform_7, window_bounds = array<i64: 1024, 15>}, {pipeline_mode = #tpu.pipeline_mode<synchronous>, transform_indices = @transform_8, window_bounds = array<i64: 1, 15>}, {pipeline_mode = #tpu.pipeline_mode<synchronous>, transform_indices = @transform_9, window_bounds = array<i64: 16, 64>}, {pipeline_mode = #tpu.pipeline_mode<synchronous>, transform_indices = @transform_10, window_bounds = array<i64: 16, 64>}, {pipeline_mode = #tpu.pipeline_mode<synchronous>, transform_indices = @transform_11, window_bounds = array<i64: 15, 64>}, {pipeline_mode = #tpu.pipeline_mode<synchronous>, transform_indices = @transform_12, window_bounds = array<i64: 1, 64>}, {pipeline_mode = #tpu.pipeline_mode<synchronous>, transform_indices = @transform_13, window_bounds = array<i64: 64, 64>}, {pipeline_mode = #tpu.pipeline_mode<synchronous>, transform_indices = @transform_14, window_bounds = array<i64: 1, 64>}, {pipeline_mode = #tpu.pipeline_mode<synchronous>, transform_indices = @transform_15, window_bounds = array<i64: 64, 8>}, {pipeline_mode = #tpu.pipeline_mode<synchronous>, transform_indices = @transform_16, window_bounds = array<i64: 1, 8>}, {pipeline_mode = #tpu.pipeline_mode<synchronous>, transform_indices = @transform_17, window_bounds = array<i64: 2, 128>}]} {
    %c0 = arith.constant 0 : index
    %c0_0 = arith.constant 0 : index
    %0 = vector.load %arg1[%c0, %c0_0] : memref<72x9xf32, #tpu.memory_space<vmem>>, vector<72x9xf32>
    %c0_1 = arith.constant 0 : index
    %c0_2 = arith.constant 0 : index
    %1 = vector.load %arg4[%c0_1, %c0_2] : memref<9x32xf32, #tpu.memory_space<vmem>>, vector<9x32xf32>
    %cst = arith.constant dense<0.000000e+00> : vector<72x32xf32>
    %2 = tpu.matmul %0, %1, %cst {dimension_numbers = #tpu.dot_dimension_numbers<[1], [0], [0], [1], [0, 0, 1, 1], [], []>} : vector<72x9xf32>, vector<9x32xf32>, vector<72x32xf32> -> vector<72x32xf32>
    %c0_3 = arith.constant 0 : index
    %c0_4 = arith.constant 0 : index
    %3 = vector.load %arg5[%c0_3, %c0_4] : memref<1x32xf32, #tpu.memory_space<vmem>>, vector<1x32xf32>
    %4 = vector.broadcast %3 : vector<1x32xf32> to vector<72x32xf32>
    %5 = arith.addf %2, %4 : vector<72x32xf32>
    %cst_5 = arith.constant 0.000000e+00 : f32
    %6 = vector.broadcast %cst_5 : f32 to vector<72x32xf32>
    %7 = arith.maximumf %5, %6 : vector<72x32xf32>
    %c0_6 = arith.constant 0 : index
    %c0_7 = arith.constant 0 : index
    %8 = vector.load %arg19[%c0_6, %c0_7] : memref<72x32xf32, #tpu.memory_space<vmem>>, vector<72x32xf32>
    tpu.vector_store %arg19[%c0_6, %c0_7], %7 {strides = array<i32>} : memref<72x32xf32, #tpu.memory_space<vmem>>, vector<72x32xf32>,
    %c0_8 = arith.constant 0 : index
    %c0_9 = arith.constant 0 : index
    %9 = vector.load %arg19[%c0_8, %c0_9] : memref<72x32xf32, #tpu.memory_space<vmem>>, vector<4x32xf32>
    %c0_10 = arith.constant 0 : index
    %c0_11 = arith.constant 0 : index
    %10 = vector.load %arg20[%c0_10, %c0_11] : memref<32x288xf32, #tpu.memory_space<vmem>>, vector<4x32xf32>
    tpu.vector_store %arg20[%c0_10, %c0_11], %9 {strides = array<i32>} : memref<32x288xf32, #tpu.memory_space<vmem>>, vector<4x32xf32>,
    %c1 = arith.constant 1 : index
    %c0_12 = arith.constant 0 : index
    %11 = vector.load %arg19[%c1, %c0_12] : memref<72x32xf32, #tpu.memory_space<vmem>>, vector<4x32xf32>
    %c0_13 = arith.constant 0 : index
    %c32 = arith.constant 32 : index
    %12 = vector.load %arg20[%c0_13, %c32] : memref<32x288xf32, #tpu.memory_space<vmem>>, vector<4x32xf32>
    tpu.vector_store %arg20[%c0_13, %c32], %11 {strides = array<i32>} : memref<32x288xf32, #tpu.memory_space<vmem>>, vector<4x32xf32>,
    %c2 = arith.constant 2 : index
    %c0_14 = arith.constant 0 : index
    %13 = vector.load %arg19[%c2, %c0_14] : memref<72x32xf32, #tpu.memory_space<vmem>>, vector<4x32xf32>
    %c0_15 = arith.constant 0 : index
    %c64 = arith.constant 64 : index
    %14 = vector.load %arg20[%c0_15, %c64] : memref<32x288xf32, #tpu.memory_space<vmem>>, vector<4x32xf32>
    tpu.vector_store %arg20[%c0_15, %c64], %13 {strides = array<i32>} : memref<32x288xf32, #tpu.memory_space<vmem>>, vector<4x32xf32>,
    %c6 = arith.constant 6 : index
    %c0_16 = arith.constant 0 : index
    %15 = vector.load %arg19[%c6, %c0_16] : memref<72x32xf32, #tpu.memory_space<vmem>>, vector<4x32xf32>
    %c4 = arith.constant 4 : index
    %c0_17 = arith.constant 0 : index
    %16 = vector.load %arg20[%c4, %c0_17] : memref<32x288xf32, #tpu.memory_space<vmem>>, vector<4x32xf32>
    tpu.vector_store %arg20[%c4, %c0_17], %15 {strides = array<i32>} : memref<32x288xf32, #tpu.memory_space<vmem>>, vector<4x32xf32>,
    %c7 = arith.constant 7 : index
    %c0_18 = arith.constant 0 : index
    %17 = vector.load %arg19[%c7, %c0_18] : memref<72x32xf32, #tpu.memory_space<vmem>>, vector<4x32xf32>
    %c4_19 = arith.constant 4 : index
    %c32_20 = arith.constant 32 : index
    %18 = vector.load %arg20[%c4_19, %c32_20] : memref<32x288xf32, #tpu.memory_space<vmem>>, vector<4x32xf32>
    tpu.vector_store %arg20[%c4_19, %c32_20], %17 {strides = array<i32>} : memref<32x288xf32, #tpu.memory_space<vmem>>, vector<4x32xf32>,
    %c8 = arith.constant 8 : index
    %c0_21 = arith.constant 0 : index
    %19 = vector.load %arg19[%c8, %c0_21] : memref<72x32xf32, #tpu.memory_space<vmem>>, vector<4x32xf32>
    %c4_22 = arith.constant 4 : index
    %c64_23 = arith.constant 64 : index
    %20 = vector.load %arg20[%c4_22, %c64_23] : memref<32x288xf32, #tpu.memory_space<vmem>>, vector<4x32xf32>
    tpu.vector_store %arg20[%c4_22, %c64_23], %19 {strides = array<i32>} : memref<32x288xf32, #tpu.memory_space<vmem>>, vector<4x32xf32>,
    %c12 = arith.constant 12 : index
    %c0_24 = arith.constant 0 : index
    %21 = vector.load %arg19[%c12, %c0_24] : memref<72x32xf32, #tpu.memory_space<vmem>>, vector<4x32xf32>
    %c8_25 = arith.constant 8 : index
    %c0_26 = arith.constant 0 : index
    %22 = vector.load %arg20[%c8_25, %c0_26] : memref<32x288xf32, #tpu.memory_space<vmem>>, vector<4x32xf32>
    tpu.vector_store %arg20[%c8_25, %c0_26], %21 {strides = array<i32>} : memref<32x288xf32, #tpu.memory_space<vmem>>, vector<4x32xf32>,
    %c13 = arith.constant 13 : index
    %c0_27 = arith.constant 0 : index
    %23 = vector.load %arg19[%c13, %c0_27] : memref<72x32xf32, #tpu.memory_space<vmem>>, vector<4x32xf32>
    %c8_28 = arith.constant 8 : index
    %c32_29 = arith.constant 32 : index
    %24 = vector.load %arg20[%c8_28, %c32_29] : memref<32x288xf32, #tpu.memory_space<vmem>>, vector<4x32xf32>
    tpu.vector_store %arg20[%c8_28, %c32_29], %23 {strides = array<i32>} : memref<32x288xf32, #tpu.memory_space<vmem>>, vector<4x32xf32>,
    %c14 = arith.constant 14 : index
    %c0_30 = arith.constant 0 : index
    %25 = vector.load %arg19[%c14, %c0_30] : memref<72x32xf32, #tpu.memory_space<vmem>>, vector<4x32xf32>
    %c8_31 = arith.constant 8 : index
    %c64_32 = arith.constant 64 : index
    %26 = vector.load %arg20[%c8_31, %c64_32] : memref<32x288xf32, #tpu.memory_space<vmem>>, vector<4x32xf32>
    tpu.vector_store %arg20[%c8_31, %c64_32], %25 {strides = array<i32>} : memref<32x288xf32, #tpu.memory_space<vmem>>, vector<4x32xf32>,
    %c18 = arith.constant 18 : index
    %c0_33 = arith.constant 0 : index
    %27 = vector.load %arg19[%c18, %c0_33] : memref<72x32xf32, #tpu.memory_space<vmem>>, vector<4x32xf32>
    %c12_34 = arith.constant 12 : index
    %c0_35 = arith.constant 0 : index
    %28 = vector.load %arg20[%c12_34, %c0_35] : memref<32x288xf32, #tpu.memory_space<vmem>>, vector<4x32xf32>
    tpu.vector_store %arg20[%c12_34, %c0_35], %27 {strides = array<i32>} : memref<32x288xf32, #tpu.memory_space<vmem>>, vector<4x32xf32>,
    %c19 = arith.constant 19 : index
    %c0_36 = arith.constant 0 : index
    %29 = vector.load %arg19[%c19, %c0_36] : memref<72x32xf32, #tpu.memory_space<vmem>>, vector<4x32xf32>
    %c12_37 = arith.constant 12 : index
    %c32_38 = arith.constant 32 : index
    %30 = vector.load %arg20[%c12_37, %c32_38] : memref<32x288xf32, #tpu.memory_space<vmem>>, vector<4x32xf32>
    tpu.vector_store %arg20[%c12_37, %c32_38], %29 {strides = array<i32>} : memref<32x288xf32, #tpu.memory_space<vmem>>, vector<4x32xf32>,
    %c20 = arith.constant 20 : index
    %c0_39 = arith.constant 0 : index
    %31 = vector.load %arg19[%c20, %c0_39] : memref<72x32xf32, #tpu.memory_space<vmem>>, vector<4x32xf32>
    %c12_40 = arith.constant 12 : index
    %c64_41 = arith.constant 64 : index
    %32 = vector.load %arg20[%c12_40, %c64_41] : memref<32x288xf32, #tpu.memory_space<vmem>>, vector<4x32xf32>
    tpu.vector_store %arg20[%c12_40, %c64_41], %31 {strides = array<i32>} : memref<32x288xf32, #tpu.memory_space<vmem>>, vector<4x32xf32>,
    %c6_42 = arith.constant 6 : index
    %c0_43 = arith.constant 0 : index
    %33 = vector.load %arg19[%c6_42, %c0_43] : memref<72x32xf32, #tpu.memory_space<vmem>>, vector<4x32xf32>
    %c0_44 = arith.constant 0 : index
    %c96 = arith.constant 96 : index
    %34 = vector.load %arg20[%c0_44, %c96] : memref<32x288xf32, #tpu.memory_space<vmem>>, vector<4x32xf32>
    tpu.vector_store %arg20[%c0_44, %c96], %33 {strides = array<i32>} : memref<32x288xf32, #tpu.memory_space<vmem>>, vector<4x32xf32>,
    %c7_45 = arith.constant 7 : index
    %c0_46 = arith.constant 0 : index
    %35 = vector.load %arg19[%c7_45, %c0_46] : memref<72x32xf32, #tpu.memory_space<vmem>>, vector<4x32xf32>
    %c0_47 = arith.constant 0 : index
    %c128 = arith.constant 128 : index
    %36 = vector.load %arg20[%c0_47, %c128] : memref<32x288xf32, #tpu.memory_space<vmem>>, vector<4x32xf32>
    tpu.vector_store %arg20[%c0_47, %c128], %35 {strides = array<i32>} : memref<32x288xf32, #tpu.memory_space<vmem>>, vector<4x32xf32>,
    %c8_48 = arith.constant 8 : index
    %c0_49 = arith.constant 0 : index
    %37 = vector.load %arg19[%c8_48, %c0_49] : memref<72x32xf32, #tpu.memory_space<vmem>>, vector<4x32xf32>
    %c0_50 = arith.constant 0 : index
    %c160 = arith.constant 160 : index
    %38 = vector.load %arg20[%c0_50, %c160] : memref<32x288xf32, #tpu.memory_space<vmem>>, vector<4x32xf32>
    tpu.vector_store %arg20[%c0_50, %c160], %37 {strides = array<i32>} : memref<32x288xf32, #tpu.memory_space<vmem>>, vector<4x32xf32>,
    %c12_51 = arith.constant 12 : index
    %c0_52 = arith.constant 0 : index
    %39 = vector.load %arg19[%c12_51, %c0_52] : memref<72x32xf32, #tpu.memory_space<vmem>>, vector<4x32xf32>
    %c4_53 = arith.constant 4 : index
    %c96_54 = arith.constant 96 : index
    %40 = vector.load %arg20[%c4_53, %c96_54] : memref<32x288xf32, #tpu.memory_space<vmem>>, vector<4x32xf32>
    tpu.vector_store %arg20[%c4_53, %c96_54], %39 {strides = array<i32>} : memref<32x288xf32, #tpu.memory_space<vmem>>, vector<4x32xf32>,
    %c13_55 = arith.constant 13 : index
    %c0_56 = arith.constant 0 : index
    %41 = vector.load %arg19[%c13_55, %c0_56] : memref<72x32xf32, #tpu.memory_space<vmem>>, vector<4x32xf32>
    %c4_57 = arith.constant 4 : index
    %c128_58 = arith.constant 128 : index
    %42 = vector.load %arg20[%c4_57, %c128_58] : memref<32x288xf32, #tpu.memory_space<vmem>>, vector<4x32xf32>
    tpu.vector_store %arg20[%c4_57, %c128_58], %41 {strides = array<i32>} : memref<32x288xf32, #tpu.memory_space<vmem>>, vector<4x32xf32>,
    %c14_59 = arith.constant 14 : index
    %c0_60 = arith.constant 0 : index
    %43 = vector.load %arg19[%c14_59, %c0_60] : memref<72x32xf32, #tpu.memory_space<vmem>>, vector<4x32xf32>
    %c4_61 = arith.constant 4 : index
    %c160_62 = arith.constant 160 : index
    %44 = vector.load %arg20[%c4_61, %c160_62] : memref<32x288xf32, #tpu.memory_space<vmem>>, vector<4x32xf32>
    tpu.vector_store %arg20[%c4_61, %c160_62], %43 {strides = array<i32>} : memref<32x288xf32, #tpu.memory_space<vmem>>, vector<4x32xf32>,
    %c18_63 = arith.constant 18 : index
    %c0_64 = arith.constant 0 : index
    %45 = vector.load %arg19[%c18_63, %c0_64] : memref<72x32xf32, #tpu.memory_space<vmem>>, vector<4x32xf32>
    %c8_65 = arith.constant 8 : index
    %c96_66 = arith.constant 96 : index
    %46 = vector.load %arg20[%c8_65, %c96_66] : memref<32x288xf32, #tpu.memory_space<vmem>>, vector<4x32xf32>
    tpu.vector_store %arg20[%c8_65, %c96_66], %45 {strides = array<i32>} : memref<32x288xf32, #tpu.memory_space<vmem>>, vector<4x32xf32>,
    %c19_67 = arith.constant 19 : index
    %c0_68 = arith.constant 0 : index
    %47 = vector.load %arg19[%c19_67, %c0_68] : memref<72x32xf32, #tpu.memory_space<vmem>>, vector<4x32xf32>
    %c8_69 = arith.constant 8 : index
    %c128_70 = arith.constant 128 : index
    %48 = vector.load %arg20[%c8_69, %c128_70] : memref<32x288xf32, #tpu.memory_space<vmem>>, vector<4x32xf32>
    tpu.vector_store %arg20[%c8_69, %c128_70], %47 {strides = array<i32>} : memref<32x288xf32, #tpu.memory_space<vmem>>, vector<4x32xf32>,
    %c20_71 = arith.constant 20 : index
    %c0_72 = arith.constant 0 : index
    %49 = vector.load %arg19[%c20_71, %c0_72] : memref<72x32xf32, #tpu.memory_space<vmem>>, vector<4x32xf32>
    %c8_73 = arith.constant 8 : index
    %c160_74 = arith.constant 160 : index
    %50 = vector.load %arg20[%c8_73, %c160_74] : memref<32x288xf32, #tpu.memory_space<vmem>>, vector<4x32xf32>
    tpu.vector_store %arg20[%c8_73, %c160_74], %49 {strides = array<i32>} : memref<32x288xf32, #tpu.memory_space<vmem>>, vector<4x32xf32>,
    %c24 = arith.constant 24 : index
    %c0_75 = arith.constant 0 : index
    %51 = vector.load %arg19[%c24, %c0_75] : memref<72x32xf32, #tpu.memory_space<vmem>>, vector<4x32xf32>
    %c12_76 = arith.constant 12 : index
    %c96_77 = arith.constant 96 : index
    %52 = vector.load %arg20[%c12_76, %c96_77] : memref<32x288xf32, #tpu.memory_space<vmem>>, vector<4x32xf32>
    tpu.vector_store %arg20[%c12_76, %c96_77], %51 {strides = array<i32>} : memref<32x288xf32, #tpu.memory_space<vmem>>, vector<4x32xf32>,
    %c25 = arith.constant 25 : index
    %c0_78 = arith.constant 0 : index
    %53 = vector.load %arg19[%c25, %c0_78] : memref<72x32xf32, #tpu.memory_space<vmem>>, vector<4x32xf32>
    %c12_79 = arith.constant 12 : index
    %c128_80 = arith.constant 128 : index
    %54 = vector.load %arg20[%c12_79, %c128_80] : memref<32x288xf32, #tpu.memory_space<vmem>>, vector<4x32xf32>
    tpu.vector_store %arg20[%c12_79, %c128_80], %53 {strides = array<i32>} : memref<32x288xf32, #tpu.memory_space<vmem>>, vector<4x32xf32>,
    %c26 = arith.constant 26 : index
    %c0_81 = arith.constant 0 : index
    %55 = vector.load %arg19[%c26, %c0_81] : memref<72x32xf32, #tpu.memory_space<vmem>>, vector<4x32xf32>
    %c12_82 = arith.constant 12 : index
    %c160_83 = arith.constant 160 : index
    %56 = vector.load %arg20[%c12_82, %c160_83] : memref<32x288xf32, #tpu.memory_space<vmem>>, vector<4x32xf32>
    tpu.vector_store %arg20[%c12_82, %c160_83], %55 {strides = array<i32>} : memref<32x288xf32, #tpu.memory_space<vmem>>, vector<4x32xf32>,
    %c12_84 = arith.constant 12 : index
    %c0_85 = arith.constant 0 : index
    %57 = vector.load %arg19[%c12_84, %c0_85] : memref<72x32xf32, #tpu.memory_space<vmem>>, vector<4x32xf32>
    %c0_86 = arith.constant 0 : index
    %c192 = arith.constant 192 : index
    %58 = vector.load %arg20[%c0_86, %c192] : memref<32x288xf32, #tpu.memory_space<vmem>>, vector<4x32xf32>
    tpu.vector_store %arg20[%c0_86, %c192], %57 {strides = array<i32>} : memref<32x288xf32, #tpu.memory_space<vmem>>, vector<4x32xf32>,
    %c13_87 = arith.constant 13 : index
    %c0_88 = arith.constant 0 : index
    %59 = vector.load %arg19[%c13_87, %c0_88] : memref<72x32xf32, #tpu.memory_space<vmem>>, vector<4x32xf32>
    %c0_89 = arith.constant 0 : index
    %c224 = arith.constant 224 : index
    %60 = vector.load %arg20[%c0_89, %c224] : memref<32x288xf32, #tpu.memory_space<vmem>>, vector<4x32xf32>
    tpu.vector_store %arg20[%c0_89, %c224], %59 {strides = array<i32>} : memref<32x288xf32, #tpu.memory_space<vmem>>, vector<4x32xf32>,
    %c14_90 = arith.constant 14 : index
    %c0_91 = arith.constant 0 : index
    %61 = vector.load %arg19[%c14_90, %c0_91] : memref<72x32xf32, #tpu.memory_space<vmem>>, vector<4x32xf32>
    %c0_92 = arith.constant 0 : index
    %c256 = arith.constant 256 : index
    %62 = vector.load %arg20[%c0_92, %c256] : memref<32x288xf32, #tpu.memory_space<vmem>>, vector<4x32xf32>
    tpu.vector_store %arg20[%c0_92, %c256], %61 {strides = array<i32>} : memref<32x288xf32, #tpu.memory_space<vmem>>, vector<4x32xf32>,
    %c18_93 = arith.constant 18 : index
    %c0_94 = arith.constant 0 : index
    %63 = vector.load %arg19[%c18_93, %c0_94] : memref<72x32xf32, #tpu.memory_space<vmem>>, vector<4x32xf32>
    %c4_95 = arith.constant 4 : index
    %c192_96 = arith.constant 192 : index
    %64 = vector.load %arg20[%c4_95, %c192_96] : memref<32x288xf32, #tpu.memory_space<vmem>>, vector<4x32xf32>
    tpu.vector_store %arg20[%c4_95, %c192_96], %63 {strides = array<i32>} : memref<32x288xf32, #tpu.memory_space<vmem>>, vector<4x32xf32>,
    %c19_97 = arith.constant 19 : index
    %c0_98 = arith.constant 0 : index
    %65 = vector.load %arg19[%c19_97, %c0_98] : memref<72x32xf32, #tpu.memory_space<vmem>>, vector<4x32xf32>
    %c4_99 = arith.constant 4 : index
    %c224_100 = arith.constant 224 : index
    %66 = vector.load %arg20[%c4_99, %c224_100] : memref<32x288xf32, #tpu.memory_space<vmem>>, vector<4x32xf32>
    tpu.vector_store %arg20[%c4_99, %c224_100], %65 {strides = array<i32>} : memref<32x288xf32, #tpu.memory_space<vmem>>, vector<4x32xf32>,
    %c20_101 = arith.constant 20 : index
    %c0_102 = arith.constant 0 : index
    %67 = vector.load %arg19[%c20_101, %c0_102] : memref<72x32xf32, #tpu.memory_space<vmem>>, vector<4x32xf32>
    %c4_103 = arith.constant 4 : index
    %c256_104 = arith.constant 256 : index
    %68 = vector.load %arg20[%c4_103, %c256_104] : memref<32x288xf32, #tpu.memory_space<vmem>>, vector<4x32xf32>
    tpu.vector_store %arg20[%c4_103, %c256_104], %67 {strides = array<i32>} : memref<32x288xf32, #tpu.memory_space<vmem>>, vector<4x32xf32>,
    %c24_105 = arith.constant 24 : index
    %c0_106 = arith.constant 0 : index
    %69 = vector.load %arg19[%c24_105, %c0_106] : memref<72x32xf32, #tpu.memory_space<vmem>>, vector<4x32xf32>
    %c8_107 = arith.constant 8 : index
    %c192_108 = arith.constant 192 : index
    %70 = vector.load %arg20[%c8_107, %c192_108] : memref<32x288xf32, #tpu.memory_space<vmem>>, vector<4x32xf32>
    tpu.vector_store %arg20[%c8_107, %c192_108], %69 {strides = array<i32>} : memref<32x288xf32, #tpu.memory_space<vmem>>, vector<4x32xf32>,
    %c25_109 = arith.constant 25 : index
    %c0_110 = arith.constant 0 : index
    %71 = vector.load %arg19[%c25_109, %c0_110] : memref<72x32xf32, #tpu.memory_space<vmem>>, vector<4x32xf32>
    %c8_111 = arith.constant 8 : index
    %c224_112 = arith.constant 224 : index
    %72 = vector.load %arg20[%c8_111, %c224_112] : memref<32x288xf32, #tpu.memory_space<vmem>>, vector<4x32xf32>
    tpu.vector_store %arg20[%c8_111, %c224_112], %71 {strides = array<i32>} : memref<32x288xf32, #tpu.memory_space<vmem>>, vector<4x32xf32>,
    %c26_113 = arith.constant 26 : index
    %c0_114 = arith.constant 0 : index
    %73 = vector.load %arg19[%c26_113, %c0_114] : memref<72x32xf32, #tpu.memory_space<vmem>>, vector<4x32xf32>
    %c8_115 = arith.constant 8 : index
    %c256_116 = arith.constant 256 : index
    %74 = vector.load %arg20[%c8_115, %c256_116] : memref<32x288xf32, #tpu.memory_space<vmem>>, vector<4x32xf32>
    tpu.vector_store %arg20[%c8_115, %c256_116], %73 {strides = array<i32>} : memref<32x288xf32, #tpu.memory_space<vmem>>, vector<4x32xf32>,
    %c30 = arith.constant 30 : index
    %c0_117 = arith.constant 0 : index
    %75 = vector.load %arg19[%c30, %c0_117] : memref<72x32xf32, #tpu.memory_space<vmem>>, vector<4x32xf32>
    %c12_118 = arith.constant 12 : index
    %c192_119 = arith.constant 192 : index
    %76 = vector.load %arg20[%c12_118, %c192_119] : memref<32x288xf32, #tpu.memory_space<vmem>>, vector<4x32xf32>
    tpu.vector_store %arg20[%c12_118, %c192_119], %75 {strides = array<i32>} : memref<32x288xf32, #tpu.memory_space<vmem>>, vector<4x32xf32>,
    %c31 = arith.constant 31 : index
    %c0_120 = arith.constant 0 : index
    %77 = vector.load %arg19[%c31, %c0_120] : memref<72x32xf32, #tpu.memory_space<vmem>>, vector<4x32xf32>
    %c12_121 = arith.constant 12 : index
    %c224_122 = arith.constant 224 : index
    %78 = vector.load %arg20[%c12_121, %c224_122] : memref<32x288xf32, #tpu.memory_space<vmem>>, vector<4x32xf32>
    tpu.vector_store %arg20[%c12_121, %c224_122], %77 {strides = array<i32>} : memref<32x288xf32, #tpu.memory_space<vmem>>, vector<4x32xf32>,
    %c32_123 = arith.constant 32 : index
    %c0_124 = arith.constant 0 : index
    %79 = vector.load %arg19[%c32_123, %c0_124] : memref<72x32xf32, #tpu.memory_space<vmem>>, vector<4x32xf32>
    %c12_125 = arith.constant 12 : index
    %c256_126 = arith.constant 256 : index
    %80 = vector.load %arg20[%c12_125, %c256_126] : memref<32x288xf32, #tpu.memory_space<vmem>>, vector<4x32xf32>
    tpu.vector_store %arg20[%c12_125, %c256_126], %79 {strides = array<i32>} : memref<32x288xf32, #tpu.memory_space<vmem>>, vector<4x32xf32>,
    %c36 = arith.constant 36 : index
    %c0_127 = arith.constant 0 : index
    %81 = vector.load %arg19[%c36, %c0_127] : memref<72x32xf32, #tpu.memory_space<vmem>>, vector<4x32xf32>
    %c16 = arith.constant 16 : index
    %c0_128 = arith.constant 0 : index
    %82 = vector.load %arg20[%c16, %c0_128] : memref<32x288xf32, #tpu.memory_space<vmem>>, vector<4x32xf32>
    tpu.vector_store %arg20[%c16, %c0_128], %81 {strides = array<i32>} : memref<32x288xf32, #tpu.memory_space<vmem>>, vector<4x32xf32>,
    %c37 = arith.constant 37 : index
    %c0_129 = arith.constant 0 : index
    %83 = vector.load %arg19[%c37, %c0_129] : memref<72x32xf32, #tpu.memory_space<vmem>>, vector<4x32xf32>
    %c16_130 = arith.constant 16 : index
    %c32_131 = arith.constant 32 : index
    %84 = vector.load %arg20[%c16_130, %c32_131] : memref<32x288xf32, #tpu.memory_space<vmem>>, vector<4x32xf32>
    tpu.vector_store %arg20[%c16_130, %c32_131], %83 {strides = array<i32>} : memref<32x288xf32, #tpu.memory_space<vmem>>, vector<4x32xf32>,
    %c38 = arith.constant 38 : index
    %c0_132 = arith.constant 0 : index
    %85 = vector.load %arg19[%c38, %c0_132] : memref<72x32xf32, #tpu.memory_space<vmem>>, vector<4x32xf32>
    %c16_133 = arith.constant 16 : index
    %c64_134 = arith.constant 64 : index
    %86 = vector.load %arg20[%c16_133, %c64_134] : memref<32x288xf32, #tpu.memory_space<vmem>>, vector<4x32xf32>
    tpu.vector_store %arg20[%c16_133, %c64_134], %85 {strides = array<i32>} : memref<32x288xf32, #tpu.memory_space<vmem>>, vector<4x32xf32>,
    %c42 = arith.constant 42 : index
    %c0_135 = arith.constant 0 : index
    %87 = vector.load %arg19[%c42, %c0_135] : memref<72x32xf32, #tpu.memory_space<vmem>>, vector<4x32xf32>
    %c20_136 = arith.constant 20 : index
    %c0_137 = arith.constant 0 : index
    %88 = vector.load %arg20[%c20_136, %c0_137] : memref<32x288xf32, #tpu.memory_space<vmem>>, vector<4x32xf32>
    tpu.vector_store %arg20[%c20_136, %c0_137], %87 {strides = array<i32>} : memref<32x288xf32, #tpu.memory_space<vmem>>, vector<4x32xf32>,
    %c43 = arith.constant 43 : index
    %c0_138 = arith.constant 0 : index
    %89 = vector.load %arg19[%c43, %c0_138] : memref<72x32xf32, #tpu.memory_space<vmem>>, vector<4x32xf32>
    %c20_139 = arith.constant 20 : index
    %c32_140 = arith.constant 32 : index
    %90 = vector.load %arg20[%c20_139, %c32_140] : memref<32x288xf32, #tpu.memory_space<vmem>>, vector<4x32xf32>
    tpu.vector_store %arg20[%c20_139, %c32_140], %89 {strides = array<i32>} : memref<32x288xf32, #tpu.memory_space<vmem>>, vector<4x32xf32>,
    %c44 = arith.constant 44 : index
    %c0_141 = arith.constant 0 : index
    %91 = vector.load %arg19[%c44, %c0_141] : memref<72x32xf32, #tpu.memory_space<vmem>>, vector<4x32xf32>
    %c20_142 = arith.constant 20 : index
    %c64_143 = arith.constant 64 : index
    %92 = vector.load %arg20[%c20_142, %c64_143] : memref<32x288xf32, #tpu.memory_space<vmem>>, vector<4x32xf32>
    tpu.vector_store %arg20[%c20_142, %c64_143], %91 {strides = array<i32>} : memref<32x288xf32, #tpu.memory_space<vmem>>, vector<4x32xf32>,
    %c48 = arith.constant 48 : index
    %c0_144 = arith.constant 0 : index
    %93 = vector.load %arg19[%c48, %c0_144] : memref<72x32xf32, #tpu.memory_space<vmem>>, vector<4x32xf32>
    %c24_145 = arith.constant 24 : index
    %c0_146 = arith.constant 0 : index
    %94 = vector.load %arg20[%c24_145, %c0_146] : memref<32x288xf32, #tpu.memory_space<vmem>>, vector<4x32xf32>
    tpu.vector_store %arg20[%c24_145, %c0_146], %93 {strides = array<i32>} : memref<32x288xf32, #tpu.memory_space<vmem>>, vector<4x32xf32>,
    %c49 = arith.constant 49 : index
    %c0_147 = arith.constant 0 : index
    %95 = vector.load %arg19[%c49, %c0_147] : memref<72x32xf32, #tpu.memory_space<vmem>>, vector<4x32xf32>
    %c24_148 = arith.constant 24 : index
    %c32_149 = arith.constant 32 : index
    %96 = vector.load %arg20[%c24_148, %c32_149] : memref<32x288xf32, #tpu.memory_space<vmem>>, vector<4x32xf32>
    tpu.vector_store %arg20[%c24_148, %c32_149], %95 {strides = array<i32>} : memref<32x288xf32, #tpu.memory_space<vmem>>, vector<4x32xf32>,
    %c50 = arith.constant 50 : index
    %c0_150 = arith.constant 0 : index
    %97 = vector.load %arg19[%c50, %c0_150] : memref<72x32xf32, #tpu.memory_space<vmem>>, vector<4x32xf32>
    %c24_151 = arith.constant 24 : index
    %c64_152 = arith.constant 64 : index
    %98 = vector.load %arg20[%c24_151, %c64_152] : memref<32x288xf32, #tpu.memory_space<vmem>>, vector<4x32xf32>
    tpu.vector_store %arg20[%c24_151, %c64_152], %97 {strides = array<i32>} : memref<32x288xf32, #tpu.memory_space<vmem>>, vector<4x32xf32>,
    %c54 = arith.constant 54 : index
    %c0_153 = arith.constant 0 : index
    %99 = vector.load %arg19[%c54, %c0_153] : memref<72x32xf32, #tpu.memory_space<vmem>>, vector<4x32xf32>
    %c28 = arith.constant 28 : index
    %c0_154 = arith.constant 0 : index
    %100 = vector.load %arg20[%c28, %c0_154] : memref<32x288xf32, #tpu.memory_space<vmem>>, vector<4x32xf32>
    tpu.vector_store %arg20[%c28, %c0_154], %99 {strides = array<i32>} : memref<32x288xf32, #tpu.memory_space<vmem>>, vector<4x32xf32>,
    %c55 = arith.constant 55 : index
    %c0_155 = arith.constant 0 : index
    %101 = vector.load %arg19[%c55, %c0_155] : memref<72x32xf32, #tpu.memory_space<vmem>>, vector<4x32xf32>
    %c28_156 = arith.constant 28 : index
    %c32_157 = arith.constant 32 : index
    %102 = vector.load %arg20[%c28_156, %c32_157] : memref<32x288xf32, #tpu.memory_space<vmem>>, vector<4x32xf32>
    tpu.vector_store %arg20[%c28_156, %c32_157], %101 {strides = array<i32>} : memref<32x288xf32, #tpu.memory_space<vmem>>, vector<4x32xf32>,
    %c56 = arith.constant 56 : index
    %c0_158 = arith.constant 0 : index
    %103 = vector.load %arg19[%c56, %c0_158] : memref<72x32xf32, #tpu.memory_space<vmem>>, vector<4x32xf32>
    %c28_159 = arith.constant 28 : index
    %c64_160 = arith.constant 64 : index
    %104 = vector.load %arg20[%c28_159, %c64_160] : memref<32x288xf32, #tpu.memory_space<vmem>>, vector<4x32xf32>
    tpu.vector_store %arg20[%c28_159, %c64_160], %103 {strides = array<i32>} : memref<32x288xf32, #tpu.memory_space<vmem>>, vector<4x32xf32>,
    %c42_161 = arith.constant 42 : index
    %c0_162 = arith.constant 0 : index
    %105 = vector.load %arg19[%c42_161, %c0_162] : memref<72x32xf32, #tpu.memory_space<vmem>>, vector<4x32xf32>
    %c16_163 = arith.constant 16 : index
    %c96_164 = arith.constant 96 : index
    %106 = vector.load %arg20[%c16_163, %c96_164] : memref<32x288xf32, #tpu.memory_space<vmem>>, vector<4x32xf32>
    tpu.vector_store %arg20[%c16_163, %c96_164], %105 {strides = array<i32>} : memref<32x288xf32, #tpu.memory_space<vmem>>, vector<4x32xf32>,
    %c43_165 = arith.constant 43 : index
    %c0_166 = arith.constant 0 : index
    %107 = vector.load %arg19[%c43_165, %c0_166] : memref<72x32xf32, #tpu.memory_space<vmem>>, vector<4x32xf32>
    %c16_167 = arith.constant 16 : index
    %c128_168 = arith.constant 128 : index
    %108 = vector.load %arg20[%c16_167, %c128_168] : memref<32x288xf32, #tpu.memory_space<vmem>>, vector<4x32xf32>
    tpu.vector_store %arg20[%c16_167, %c128_168], %107 {strides = array<i32>} : memref<32x288xf32, #tpu.memory_space<vmem>>, vector<4x32xf32>,
    %c44_169 = arith.constant 44 : index
    %c0_170 = arith.constant 0 : index
    %109 = vector.load %arg19[%c44_169, %c0_170] : memref<72x32xf32, #tpu.memory_space<vmem>>, vector<4x32xf32>
    %c16_171 = arith.constant 16 : index
    %c160_172 = arith.constant 160 : index
    %110 = vector.load %arg20[%c16_171, %c160_172] : memref<32x288xf32, #tpu.memory_space<vmem>>, vector<4x32xf32>
    tpu.vector_store %arg20[%c16_171, %c160_172], %109 {strides = array<i32>} : memref<32x288xf32, #tpu.memory_space<vmem>>, vector<4x32xf32>,
    %c48_173 = arith.constant 48 : index
    %c0_174 = arith.constant 0 : index
    %111 = vector.load %arg19[%c48_173, %c0_174] : memref<72x32xf32, #tpu.memory_space<vmem>>, vector<4x32xf32>
    %c20_175 = arith.constant 20 : index
    %c96_176 = arith.constant 96 : index
    %112 = vector.load %arg20[%c20_175, %c96_176] : memref<32x288xf32, #tpu.memory_space<vmem>>, vector<4x32xf32>
    tpu.vector_store %arg20[%c20_175, %c96_176], %111 {strides = array<i32>} : memref<32x288xf32, #tpu.memory_space<vmem>>, vector<4x32xf32>,
    %c49_177 = arith.constant 49 : index
    %c0_178 = arith.constant 0 : index
    %113 = vector.load %arg19[%c49_177, %c0_178] : memref<72x32xf32, #tpu.memory_space<vmem>>, vector<4x32xf32>
    %c20_179 = arith.constant 20 : index
    %c128_180 = arith.constant 128 : index
    %114 = vector.load %arg20[%c20_179, %c128_180] : memref<32x288xf32, #tpu.memory_space<vmem>>, vector<4x32xf32>
    tpu.vector_store %arg20[%c20_179, %c128_180], %113 {strides = array<i32>} : memref<32x288xf32, #tpu.memory_space<vmem>>, vector<4x32xf32>,
    %c50_181 = arith.constant 50 : index
    %c0_182 = arith.constant 0 : index
    %115 = vector.load %arg19[%c50_181, %c0_182] : memref<72x32xf32, #tpu.memory_space<vmem>>, vector<4x32xf32>
    %c20_183 = arith.constant 20 : index
    %c160_184 = arith.constant 160 : index
    %116 = vector.load %arg20[%c20_183, %c160_184] : memref<32x288xf32, #tpu.memory_space<vmem>>, vector<4x32xf32>
    tpu.vector_store %arg20[%c20_183, %c160_184], %115 {strides = array<i32>} : memref<32x288xf32, #tpu.memory_space<vmem>>, vector<4x32xf32>,
    %c54_185 = arith.constant 54 : index
    %c0_186 = arith.constant 0 : index
    %117 = vector.load %arg19[%c54_185, %c0_186] : memref<72x32xf32, #tpu.memory_space<vmem>>, vector<4x32xf32>
    %c24_187 = arith.constant 24 : index
    %c96_188 = arith.constant 96 : index
    %118 = vector.load %arg20[%c24_187, %c96_188] : memref<32x288xf32, #tpu.memory_space<vmem>>, vector<4x32xf32>
    tpu.vector_store %arg20[%c24_187, %c96_188], %117 {strides = array<i32>} : memref<32x288xf32, #tpu.memory_space<vmem>>, vector<4x32xf32>,
    %c55_189 = arith.constant 55 : index
    %c0_190 = arith.constant 0 : index
    %119 = vector.load %arg19[%c55_189, %c0_190] : memref<72x32xf32, #tpu.memory_space<vmem>>, vector<4x32xf32>
    %c24_191 = arith.constant 24 : index
    %c128_192 = arith.constant 128 : index
    %120 = vector.load %arg20[%c24_191, %c128_192] : memref<32x288xf32, #tpu.memory_space<vmem>>, vector<4x32xf32>
    tpu.vector_store %arg20[%c24_191, %c128_192], %119 {strides = array<i32>} : memref<32x288xf32, #tpu.memory_space<vmem>>, vector<4x32xf32>,
    %c56_193 = arith.constant 56 : index
    %c0_194 = arith.constant 0 : index
    %121 = vector.load %arg19[%c56_193, %c0_194] : memref<72x32xf32, #tpu.memory_space<vmem>>, vector<4x32xf32>
    %c24_195 = arith.constant 24 : index
    %c160_196 = arith.constant 160 : index
    %122 = vector.load %arg20[%c24_195, %c160_196] : memref<32x288xf32, #tpu.memory_space<vmem>>, vector<4x32xf32>
    tpu.vector_store %arg20[%c24_195, %c160_196], %121 {strides = array<i32>} : memref<32x288xf32, #tpu.memory_space<vmem>>, vector<4x32xf32>,
    %c60 = arith.constant 60 : index
    %c0_197 = arith.constant 0 : index
    %123 = vector.load %arg19[%c60, %c0_197] : memref<72x32xf32, #tpu.memory_space<vmem>>, vector<4x32xf32>
    %c28_198 = arith.constant 28 : index
    %c96_199 = arith.constant 96 : index
    %124 = vector.load %arg20[%c28_198, %c96_199] : memref<32x288xf32, #tpu.memory_space<vmem>>, vector<4x32xf32>
    tpu.vector_store %arg20[%c28_198, %c96_199], %123 {strides = array<i32>} : memref<32x288xf32, #tpu.memory_space<vmem>>, vector<4x32xf32>,
    %c61 = arith.constant 61 : index
    %c0_200 = arith.constant 0 : index
    %125 = vector.load %arg19[%c61, %c0_200] : memref<72x32xf32, #tpu.memory_space<vmem>>, vector<4x32xf32>
    %c28_201 = arith.constant 28 : index
    %c128_202 = arith.constant 128 : index
    %126 = vector.load %arg20[%c28_201, %c128_202] : memref<32x288xf32, #tpu.memory_space<vmem>>, vector<4x32xf32>
    tpu.vector_store %arg20[%c28_201, %c128_202], %125 {strides = array<i32>} : memref<32x288xf32, #tpu.memory_space<vmem>>, vector<4x32xf32>,
    %c62 = arith.constant 62 : index
    %c0_203 = arith.constant 0 : index
    %127 = vector.load %arg19[%c62, %c0_203] : memref<72x32xf32, #tpu.memory_space<vmem>>, vector<4x32xf32>
    %c28_204 = arith.constant 28 : index
    %c160_205 = arith.constant 160 : index
    %128 = vector.load %arg20[%c28_204, %c160_205] : memref<32x288xf32, #tpu.memory_space<vmem>>, vector<4x32xf32>
    tpu.vector_store %arg20[%c28_204, %c160_205], %127 {strides = array<i32>} : memref<32x288xf32, #tpu.memory_space<vmem>>, vector<4x32xf32>,
    %c48_206 = arith.constant 48 : index
    %c0_207 = arith.constant 0 : index
    %129 = vector.load %arg19[%c48_206, %c0_207] : memref<72x32xf32, #tpu.memory_space<vmem>>, vector<4x32xf32>
    %c16_208 = arith.constant 16 : index
    %c192_209 = arith.constant 192 : index
    %130 = vector.load %arg20[%c16_208, %c192_209] : memref<32x288xf32, #tpu.memory_space<vmem>>, vector<4x32xf32>
    tpu.vector_store %arg20[%c16_208, %c192_209], %129 {strides = array<i32>} : memref<32x288xf32, #tpu.memory_space<vmem>>, vector<4x32xf32>,
    %c49_210 = arith.constant 49 : index
    %c0_211 = arith.constant 0 : index
    %131 = vector.load %arg19[%c49_210, %c0_211] : memref<72x32xf32, #tpu.memory_space<vmem>>, vector<4x32xf32>
    %c16_212 = arith.constant 16 : index
    %c224_213 = arith.constant 224 : index
    %132 = vector.load %arg20[%c16_212, %c224_213] : memref<32x288xf32, #tpu.memory_space<vmem>>, vector<4x32xf32>
    tpu.vector_store %arg20[%c16_212, %c224_213], %131 {strides = array<i32>} : memref<32x288xf32, #tpu.memory_space<vmem>>, vector<4x32xf32>,
    %c50_214 = arith.constant 50 : index
    %c0_215 = arith.constant 0 : index
    %133 = vector.load %arg19[%c50_214, %c0_215] : memref<72x32xf32, #tpu.memory_space<vmem>>, vector<4x32xf32>
    %c16_216 = arith.constant 16 : index
    %c256_217 = arith.constant 256 : index
    %134 = vector.load %arg20[%c16_216, %c256_217] : memref<32x288xf32, #tpu.memory_space<vmem>>, vector<4x32xf32>
    tpu.vector_store %arg20[%c16_216, %c256_217], %133 {strides = array<i32>} : memref<32x288xf32, #tpu.memory_space<vmem>>, vector<4x32xf32>,
    %c54_218 = arith.constant 54 : index
    %c0_219 = arith.constant 0 : index
    %135 = vector.load %arg19[%c54_218, %c0_219] : memref<72x32xf32, #tpu.memory_space<vmem>>, vector<4x32xf32>
    %c20_220 = arith.constant 20 : index
    %c192_221 = arith.constant 192 : index
    %136 = vector.load %arg20[%c20_220, %c192_221] : memref<32x288xf32, #tpu.memory_space<vmem>>, vector<4x32xf32>
    tpu.vector_store %arg20[%c20_220, %c192_221], %135 {strides = array<i32>} : memref<32x288xf32, #tpu.memory_space<vmem>>, vector<4x32xf32>,
    %c55_222 = arith.constant 55 : index
    %c0_223 = arith.constant 0 : index
    %137 = vector.load %arg19[%c55_222, %c0_223] : memref<72x32xf32, #tpu.memory_space<vmem>>, vector<4x32xf32>
    %c20_224 = arith.constant 20 : index
    %c224_225 = arith.constant 224 : index
    %138 = vector.load %arg20[%c20_224, %c224_225] : memref<32x288xf32, #tpu.memory_space<vmem>>, vector<4x32xf32>
    tpu.vector_store %arg20[%c20_224, %c224_225], %137 {strides = array<i32>} : memref<32x288xf32, #tpu.memory_space<vmem>>, vector<4x32xf32>,
    %c56_226 = arith.constant 56 : index
    %c0_227 = arith.constant 0 : index
    %139 = vector.load %arg19[%c56_226, %c0_227] : memref<72x32xf32, #tpu.memory_space<vmem>>, vector<4x32xf32>
    %c20_228 = arith.constant 20 : index
    %c256_229 = arith.constant 256 : index
    %140 = vector.load %arg20[%c20_228, %c256_229] : memref<32x288xf32, #tpu.memory_space<vmem>>, vector<4x32xf32>
    tpu.vector_store %arg20[%c20_228, %c256_229], %139 {strides = array<i32>} : memref<32x288xf32, #tpu.memory_space<vmem>>, vector<4x32xf32>,
    %c60_230 = arith.constant 60 : index
    %c0_231 = arith.constant 0 : index
    %141 = vector.load %arg19[%c60_230, %c0_231] : memref<72x32xf32, #tpu.memory_space<vmem>>, vector<4x32xf32>
    %c24_232 = arith.constant 24 : index
    %c192_233 = arith.constant 192 : index
    %142 = vector.load %arg20[%c24_232, %c192_233] : memref<32x288xf32, #tpu.memory_space<vmem>>, vector<4x32xf32>
    tpu.vector_store %arg20[%c24_232, %c192_233], %141 {strides = array<i32>} : memref<32x288xf32, #tpu.memory_space<vmem>>, vector<4x32xf32>,
    %c61_234 = arith.constant 61 : index
    %c0_235 = arith.constant 0 : index
    %143 = vector.load %arg19[%c61_234, %c0_235] : memref<72x32xf32, #tpu.memory_space<vmem>>, vector<4x32xf32>
    %c24_236 = arith.constant 24 : index
    %c224_237 = arith.constant 224 : index
    %144 = vector.load %arg20[%c24_236, %c224_237] : memref<32x288xf32, #tpu.memory_space<vmem>>, vector<4x32xf32>
    tpu.vector_store %arg20[%c24_236, %c224_237], %143 {strides = array<i32>} : memref<32x288xf32, #tpu.memory_space<vmem>>, vector<4x32xf32>,
    %c62_238 = arith.constant 62 : index
    %c0_239 = arith.constant 0 : index
    %145 = vector.load %arg19[%c62_238, %c0_239] : memref<72x32xf32, #tpu.memory_space<vmem>>, vector<4x32xf32>
    %c24_240 = arith.constant 24 : index
    %c256_241 = arith.constant 256 : index
    %146 = vector.load %arg20[%c24_240, %c256_241] : memref<32x288xf32, #tpu.memory_space<vmem>>, vector<4x32xf32>
    tpu.vector_store %arg20[%c24_240, %c256_241], %145 {strides = array<i32>} : memref<32x288xf32, #tpu.memory_space<vmem>>, vector<4x32xf32>,
    %c66 = arith.constant 66 : index
    %c0_242 = arith.constant 0 : index
    %147 = vector.load %arg19[%c66, %c0_242] : memref<72x32xf32, #tpu.memory_space<vmem>>, vector<4x32xf32>
    %c28_243 = arith.constant 28 : index
    %c192_244 = arith.constant 192 : index
    %148 = vector.load %arg20[%c28_243, %c192_244] : memref<32x288xf32, #tpu.memory_space<vmem>>, vector<4x32xf32>
    tpu.vector_store %arg20[%c28_243, %c192_244], %147 {strides = array<i32>} : memref<32x288xf32, #tpu.memory_space<vmem>>, vector<4x32xf32>,
    %c67 = arith.constant 67 : index
    %c0_245 = arith.constant 0 : index
    %149 = vector.load %arg19[%c67, %c0_245] : memref<72x32xf32, #tpu.memory_space<vmem>>, vector<4x32xf32>
    %c28_246 = arith.constant 28 : index
    %c224_247 = arith.constant 224 : index
    %150 = vector.load %arg20[%c28_246, %c224_247] : memref<32x288xf32, #tpu.memory_space<vmem>>, vector<4x32xf32>
    tpu.vector_store %arg20[%c28_246, %c224_247], %149 {strides = array<i32>} : memref<32x288xf32, #tpu.memory_space<vmem>>, vector<4x32xf32>,
    %c68 = arith.constant 68 : index
    %c0_248 = arith.constant 0 : index
    %151 = vector.load %arg19[%c68, %c0_248] : memref<72x32xf32, #tpu.memory_space<vmem>>, vector<4x32xf32>
    %c28_249 = arith.constant 28 : index
    %c256_250 = arith.constant 256 : index
    %152 = vector.load %arg20[%c28_249, %c256_250] : memref<32x288xf32, #tpu.memory_space<vmem>>, vector<4x32xf32>
    tpu.vector_store %arg20[%c28_249, %c256_250], %151 {strides = array<i32>} : memref<32x288xf32, #tpu.memory_space<vmem>>, vector<4x32xf32>,
    %c0_251 = arith.constant 0 : index
    %c0_252 = arith.constant 0 : index
    %153 = vector.load %arg6[%c0_251, %c0_252] : memref<288x64xbf16, #tpu.memory_space<vmem>>, vector<288x64xbf16>
    %154 = arith.extf %153 : vector<288x64xbf16> to vector<288x64xf32>
    %c0_253 = arith.constant 0 : index
    %c0_254 = arith.constant 0 : index
    %155 = vector.load %arg20[%c0_253, %c0_254] : memref<32x288xf32, #tpu.memory_space<vmem>>, vector<32x288xf32>
    %cst_255 = arith.constant dense<0.000000e+00> : vector<32x64xf32>
    %156 = tpu.matmul %155, %154, %cst_255 {dimension_numbers = #tpu.dot_dimension_numbers<[1], [0], [0], [1], [0, 0, 1, 1], [], []>} : vector<32x288xf32>, vector<288x64xf32>, vector<32x64xf32> -> vector<32x64xf32>
    %c0_256 = arith.constant 0 : index
    %c0_257 = arith.constant 0 : index
    %157 = vector.load %arg7[%c0_256, %c0_257] : memref<1x64xf32, #tpu.memory_space<vmem>>, vector<1x64xf32>
    %158 = vector.broadcast %157 : vector<1x64xf32> to vector<32x64xf32>
    %159 = arith.addf %156, %158 : vector<32x64xf32>
    %cst_258 = arith.constant 0.000000e+00 : f32
    %160 = vector.broadcast %cst_258 : f32 to vector<32x64xf32>
    %161 = arith.maximumf %159, %160 : vector<32x64xf32>
    %162 = vector.extract_strided_slice %161 {offsets = [0, 0], sizes = [1, 64], strides = [1, 1]} : vector<32x64xf32> to vector<1x64xf32>
    %c0_259 = arith.constant 0 : index
    %c0_260 = arith.constant 0 : index
    %163 = vector.load %arg21[%c0_259, %c0_260] : memref<2x1024xf32, #tpu.memory_space<vmem>>, vector<1x64xf32>
    tpu.vector_store %arg21[%c0_259, %c0_260], %162 {strides = array<i32>} : memref<2x1024xf32, #tpu.memory_space<vmem>>, vector<1x64xf32>,
    %164 = vector.extract_strided_slice %161 {offsets = [1, 0], sizes = [1, 64], strides = [1, 1]} : vector<32x64xf32> to vector<1x64xf32>
    %c0_261 = arith.constant 0 : index
    %c64_262 = arith.constant 64 : index
    %165 = vector.load %arg21[%c0_261, %c64_262] : memref<2x1024xf32, #tpu.memory_space<vmem>>, vector<1x64xf32>
    tpu.vector_store %arg21[%c0_261, %c64_262], %164 {strides = array<i32>} : memref<2x1024xf32, #tpu.memory_space<vmem>>, vector<1x64xf32>,
    %166 = vector.extract_strided_slice %161 {offsets = [2, 0], sizes = [1, 64], strides = [1, 1]} : vector<32x64xf32> to vector<1x64xf32>
    %c0_263 = arith.constant 0 : index
    %c128_264 = arith.constant 128 : index
    %167 = vector.load %arg21[%c0_263, %c128_264] : memref<2x1024xf32, #tpu.memory_space<vmem>>, vector<1x64xf32>
    tpu.vector_store %arg21[%c0_263, %c128_264], %166 {strides = array<i32>} : memref<2x1024xf32, #tpu.memory_space<vmem>>, vector<1x64xf32>,
    %168 = vector.extract_strided_slice %161 {offsets = [3, 0], sizes = [1, 64], strides = [1, 1]} : vector<32x64xf32> to vector<1x64xf32>
    %c0_265 = arith.constant 0 : index
    %c192_266 = arith.constant 192 : index
    %169 = vector.load %arg21[%c0_265, %c192_266] : memref<2x1024xf32, #tpu.memory_space<vmem>>, vector<1x64xf32>
    tpu.vector_store %arg21[%c0_265, %c192_266], %168 {strides = array<i32>} : memref<2x1024xf32, #tpu.memory_space<vmem>>, vector<1x64xf32>,
    %170 = vector.extract_strided_slice %161 {offsets = [4, 0], sizes = [1, 64], strides = [1, 1]} : vector<32x64xf32> to vector<1x64xf32>
    %c0_267 = arith.constant 0 : index
    %c256_268 = arith.constant 256 : index
    %171 = vector.load %arg21[%c0_267, %c256_268] : memref<2x1024xf32, #tpu.memory_space<vmem>>, vector<1x64xf32>
    tpu.vector_store %arg21[%c0_267, %c256_268], %170 {strides = array<i32>} : memref<2x1024xf32, #tpu.memory_space<vmem>>, vector<1x64xf32>,
    %172 = vector.extract_strided_slice %161 {offsets = [5, 0], sizes = [1, 64], strides = [1, 1]} : vector<32x64xf32> to vector<1x64xf32>
    %c0_269 = arith.constant 0 : index
    %c320 = arith.constant 320 : index
    %173 = vector.load %arg21[%c0_269, %c320] : memref<2x1024xf32, #tpu.memory_space<vmem>>, vector<1x64xf32>
    tpu.vector_store %arg21[%c0_269, %c320], %172 {strides = array<i32>} : memref<2x1024xf32, #tpu.memory_space<vmem>>, vector<1x64xf32>,
    %174 = vector.extract_strided_slice %161 {offsets = [6, 0], sizes = [1, 64], strides = [1, 1]} : vector<32x64xf32> to vector<1x64xf32>
    %c0_270 = arith.constant 0 : index
    %c384 = arith.constant 384 : index
    %175 = vector.load %arg21[%c0_270, %c384] : memref<2x1024xf32, #tpu.memory_space<vmem>>, vector<1x64xf32>
    tpu.vector_store %arg21[%c0_270, %c384], %174 {strides = array<i32>} : memref<2x1024xf32, #tpu.memory_space<vmem>>, vector<1x64xf32>,
    %176 = vector.extract_strided_slice %161 {offsets = [7, 0], sizes = [1, 64], strides = [1, 1]} : vector<32x64xf32> to vector<1x64xf32>
    %c0_271 = arith.constant 0 : index
    %c448 = arith.constant 448 : index
    %177 = vector.load %arg21[%c0_271, %c448] : memref<2x1024xf32, #tpu.memory_space<vmem>>, vector<1x64xf32>
    tpu.vector_store %arg21[%c0_271, %c448], %176 {strides = array<i32>} : memref<2x1024xf32, #tpu.memory_space<vmem>>, vector<1x64xf32>,
    %178 = vector.extract_strided_slice %161 {offsets = [8, 0], sizes = [1, 64], strides = [1, 1]} : vector<32x64xf32> to vector<1x64xf32>
    %c0_272 = arith.constant 0 : index
    %c512 = arith.constant 512 : index
    %179 = vector.load %arg21[%c0_272, %c512] : memref<2x1024xf32, #tpu.memory_space<vmem>>, vector<1x64xf32>
    tpu.vector_store %arg21[%c0_272, %c512], %178 {strides = array<i32>} : memref<2x1024xf32, #tpu.memory_space<vmem>>, vector<1x64xf32>,
    %180 = vector.extract_strided_slice %161 {offsets = [9, 0], sizes = [1, 64], strides = [1, 1]} : vector<32x64xf32> to vector<1x64xf32>
    %c0_273 = arith.constant 0 : index
    %c576 = arith.constant 576 : index
    %181 = vector.load %arg21[%c0_273, %c576] : memref<2x1024xf32, #tpu.memory_space<vmem>>, vector<1x64xf32>
    tpu.vector_store %arg21[%c0_273, %c576], %180 {strides = array<i32>} : memref<2x1024xf32, #tpu.memory_space<vmem>>, vector<1x64xf32>,
    %182 = vector.extract_strided_slice %161 {offsets = [10, 0], sizes = [1, 64], strides = [1, 1]} : vector<32x64xf32> to vector<1x64xf32>
    %c0_274 = arith.constant 0 : index
    %c640 = arith.constant 640 : index
    %183 = vector.load %arg21[%c0_274, %c640] : memref<2x1024xf32, #tpu.memory_space<vmem>>, vector<1x64xf32>
    tpu.vector_store %arg21[%c0_274, %c640], %182 {strides = array<i32>} : memref<2x1024xf32, #tpu.memory_space<vmem>>, vector<1x64xf32>,
    %184 = vector.extract_strided_slice %161 {offsets = [11, 0], sizes = [1, 64], strides = [1, 1]} : vector<32x64xf32> to vector<1x64xf32>
    %c0_275 = arith.constant 0 : index
    %c704 = arith.constant 704 : index
    %185 = vector.load %arg21[%c0_275, %c704] : memref<2x1024xf32, #tpu.memory_space<vmem>>, vector<1x64xf32>
    tpu.vector_store %arg21[%c0_275, %c704], %184 {strides = array<i32>} : memref<2x1024xf32, #tpu.memory_space<vmem>>, vector<1x64xf32>,
    %186 = vector.extract_strided_slice %161 {offsets = [12, 0], sizes = [1, 64], strides = [1, 1]} : vector<32x64xf32> to vector<1x64xf32>
    %c0_276 = arith.constant 0 : index
    %c768 = arith.constant 768 : index
    %187 = vector.load %arg21[%c0_276, %c768] : memref<2x1024xf32, #tpu.memory_space<vmem>>, vector<1x64xf32>
    tpu.vector_store %arg21[%c0_276, %c768], %186 {strides = array<i32>} : memref<2x1024xf32, #tpu.memory_space<vmem>>, vector<1x64xf32>,
    %188 = vector.extract_strided_slice %161 {offsets = [13, 0], sizes = [1, 64], strides = [1, 1]} : vector<32x64xf32> to vector<1x64xf32>
    %c0_277 = arith.constant 0 : index
    %c832 = arith.constant 832 : index
    %189 = vector.load %arg21[%c0_277, %c832] : memref<2x1024xf32, #tpu.memory_space<vmem>>, vector<1x64xf32>
    tpu.vector_store %arg21[%c0_277, %c832], %188 {strides = array<i32>} : memref<2x1024xf32, #tpu.memory_space<vmem>>, vector<1x64xf32>,
    %190 = vector.extract_strided_slice %161 {offsets = [14, 0], sizes = [1, 64], strides = [1, 1]} : vector<32x64xf32> to vector<1x64xf32>
    %c0_278 = arith.constant 0 : index
    %c896 = arith.constant 896 : index
    %191 = vector.load %arg21[%c0_278, %c896] : memref<2x1024xf32, #tpu.memory_space<vmem>>, vector<1x64xf32>
    tpu.vector_store %arg21[%c0_278, %c896], %190 {strides = array<i32>} : memref<2x1024xf32, #tpu.memory_space<vmem>>, vector<1x64xf32>,
    %192 = vector.extract_strided_slice %161 {offsets = [15, 0], sizes = [1, 64], strides = [1, 1]} : vector<32x64xf32> to vector<1x64xf32>
    %c0_279 = arith.constant 0 : index
    %c960 = arith.constant 960 : index
    %193 = vector.load %arg21[%c0_279, %c960] : memref<2x1024xf32, #tpu.memory_space<vmem>>, vector<1x64xf32>
    tpu.vector_store %arg21[%c0_279, %c960], %192 {strides = array<i32>} : memref<2x1024xf32, #tpu.memory_space<vmem>>, vector<1x64xf32>,
    %194 = vector.extract_strided_slice %161 {offsets = [16, 0], sizes = [1, 64], strides = [1, 1]} : vector<32x64xf32> to vector<1x64xf32>
    %c1_280 = arith.constant 1 : index
    %c0_281 = arith.constant 0 : index
    %195 = vector.load %arg21[%c1_280, %c0_281] : memref<2x1024xf32, #tpu.memory_space<vmem>>, vector<1x64xf32>
    tpu.vector_store %arg21[%c1_280, %c0_281], %194 {strides = array<i32>} : memref<2x1024xf32, #tpu.memory_space<vmem>>, vector<1x64xf32>,
    %196 = vector.extract_strided_slice %161 {offsets = [17, 0], sizes = [1, 64], strides = [1, 1]} : vector<32x64xf32> to vector<1x64xf32>
    %c1_282 = arith.constant 1 : index
    %c64_283 = arith.constant 64 : index
    %197 = vector.load %arg21[%c1_282, %c64_283] : memref<2x1024xf32, #tpu.memory_space<vmem>>, vector<1x64xf32>
    tpu.vector_store %arg21[%c1_282, %c64_283], %196 {strides = array<i32>} : memref<2x1024xf32, #tpu.memory_space<vmem>>, vector<1x64xf32>,
    %198 = vector.extract_strided_slice %161 {offsets = [18, 0], sizes = [1, 64], strides = [1, 1]} : vector<32x64xf32> to vector<1x64xf32>
    %c1_284 = arith.constant 1 : index
    %c128_285 = arith.constant 128 : index
    %199 = vector.load %arg21[%c1_284, %c128_285] : memref<2x1024xf32, #tpu.memory_space<vmem>>, vector<1x64xf32>
    tpu.vector_store %arg21[%c1_284, %c128_285], %198 {strides = array<i32>} : memref<2x1024xf32, #tpu.memory_space<vmem>>, vector<1x64xf32>,
    %200 = vector.extract_strided_slice %161 {offsets = [19, 0], sizes = [1, 64], strides = [1, 1]} : vector<32x64xf32> to vector<1x64xf32>
    %c1_286 = arith.constant 1 : index
    %c192_287 = arith.constant 192 : index
    %201 = vector.load %arg21[%c1_286, %c192_287] : memref<2x1024xf32, #tpu.memory_space<vmem>>, vector<1x64xf32>
    tpu.vector_store %arg21[%c1_286, %c192_287], %200 {strides = array<i32>} : memref<2x1024xf32, #tpu.memory_space<vmem>>, vector<1x64xf32>,
    %202 = vector.extract_strided_slice %161 {offsets = [20, 0], sizes = [1, 64], strides = [1, 1]} : vector<32x64xf32> to vector<1x64xf32>
    %c1_288 = arith.constant 1 : index
    %c256_289 = arith.constant 256 : index
    %203 = vector.load %arg21[%c1_288, %c256_289] : memref<2x1024xf32, #tpu.memory_space<vmem>>, vector<1x64xf32>
    tpu.vector_store %arg21[%c1_288, %c256_289], %202 {strides = array<i32>} : memref<2x1024xf32, #tpu.memory_space<vmem>>, vector<1x64xf32>,
    %204 = vector.extract_strided_slice %161 {offsets = [21, 0], sizes = [1, 64], strides = [1, 1]} : vector<32x64xf32> to vector<1x64xf32>
    %c1_290 = arith.constant 1 : index
    %c320_291 = arith.constant 320 : index
    %205 = vector.load %arg21[%c1_290, %c320_291] : memref<2x1024xf32, #tpu.memory_space<vmem>>, vector<1x64xf32>
    tpu.vector_store %arg21[%c1_290, %c320_291], %204 {strides = array<i32>} : memref<2x1024xf32, #tpu.memory_space<vmem>>, vector<1x64xf32>,
    %206 = vector.extract_strided_slice %161 {offsets = [22, 0], sizes = [1, 64], strides = [1, 1]} : vector<32x64xf32> to vector<1x64xf32>
    %c1_292 = arith.constant 1 : index
    %c384_293 = arith.constant 384 : index
    %207 = vector.load %arg21[%c1_292, %c384_293] : memref<2x1024xf32, #tpu.memory_space<vmem>>, vector<1x64xf32>
    tpu.vector_store %arg21[%c1_292, %c384_293], %206 {strides = array<i32>} : memref<2x1024xf32, #tpu.memory_space<vmem>>, vector<1x64xf32>,
    %208 = vector.extract_strided_slice %161 {offsets = [23, 0], sizes = [1, 64], strides = [1, 1]} : vector<32x64xf32> to vector<1x64xf32>
    %c1_294 = arith.constant 1 : index
    %c448_295 = arith.constant 448 : index
    %209 = vector.load %arg21[%c1_294, %c448_295] : memref<2x1024xf32, #tpu.memory_space<vmem>>, vector<1x64xf32>
    tpu.vector_store %arg21[%c1_294, %c448_295], %208 {strides = array<i32>} : memref<2x1024xf32, #tpu.memory_space<vmem>>, vector<1x64xf32>,
    %210 = vector.extract_strided_slice %161 {offsets = [24, 0], sizes = [1, 64], strides = [1, 1]} : vector<32x64xf32> to vector<1x64xf32>
    %c1_296 = arith.constant 1 : index
    %c512_297 = arith.constant 512 : index
    %211 = vector.load %arg21[%c1_296, %c512_297] : memref<2x1024xf32, #tpu.memory_space<vmem>>, vector<1x64xf32>
    tpu.vector_store %arg21[%c1_296, %c512_297], %210 {strides = array<i32>} : memref<2x1024xf32, #tpu.memory_space<vmem>>, vector<1x64xf32>,
    %212 = vector.extract_strided_slice %161 {offsets = [25, 0], sizes = [1, 64], strides = [1, 1]} : vector<32x64xf32> to vector<1x64xf32>
    %c1_298 = arith.constant 1 : index
    %c576_299 = arith.constant 576 : index
    %213 = vector.load %arg21[%c1_298, %c576_299] : memref<2x1024xf32, #tpu.memory_space<vmem>>, vector<1x64xf32>
    tpu.vector_store %arg21[%c1_298, %c576_299], %212 {strides = array<i32>} : memref<2x1024xf32, #tpu.memory_space<vmem>>, vector<1x64xf32>,
    %214 = vector.extract_strided_slice %161 {offsets = [26, 0], sizes = [1, 64], strides = [1, 1]} : vector<32x64xf32> to vector<1x64xf32>
    %c1_300 = arith.constant 1 : index
    %c640_301 = arith.constant 640 : index
    %215 = vector.load %arg21[%c1_300, %c640_301] : memref<2x1024xf32, #tpu.memory_space<vmem>>, vector<1x64xf32>
    tpu.vector_store %arg21[%c1_300, %c640_301], %214 {strides = array<i32>} : memref<2x1024xf32, #tpu.memory_space<vmem>>, vector<1x64xf32>,
    %216 = vector.extract_strided_slice %161 {offsets = [27, 0], sizes = [1, 64], strides = [1, 1]} : vector<32x64xf32> to vector<1x64xf32>
    %c1_302 = arith.constant 1 : index
    %c704_303 = arith.constant 704 : index
    %217 = vector.load %arg21[%c1_302, %c704_303] : memref<2x1024xf32, #tpu.memory_space<vmem>>, vector<1x64xf32>
    tpu.vector_store %arg21[%c1_302, %c704_303], %216 {strides = array<i32>} : memref<2x1024xf32, #tpu.memory_space<vmem>>, vector<1x64xf32>,
    %218 = vector.extract_strided_slice %161 {offsets = [28, 0], sizes = [1, 64], strides = [1, 1]} : vector<32x64xf32> to vector<1x64xf32>
    %c1_304 = arith.constant 1 : index
    %c768_305 = arith.constant 768 : index
    %219 = vector.load %arg21[%c1_304, %c768_305] : memref<2x1024xf32, #tpu.memory_space<vmem>>, vector<1x64xf32>
    tpu.vector_store %arg21[%c1_304, %c768_305], %218 {strides = array<i32>} : memref<2x1024xf32, #tpu.memory_space<vmem>>, vector<1x64xf32>,
    %220 = vector.extract_strided_slice %161 {offsets = [29, 0], sizes = [1, 64], strides = [1, 1]} : vector<32x64xf32> to vector<1x64xf32>
    %c1_306 = arith.constant 1 : index
    %c832_307 = arith.constant 832 : index
    %221 = vector.load %arg21[%c1_306, %c832_307] : memref<2x1024xf32, #tpu.memory_space<vmem>>, vector<1x64xf32>
    tpu.vector_store %arg21[%c1_306, %c832_307], %220 {strides = array<i32>} : memref<2x1024xf32, #tpu.memory_space<vmem>>, vector<1x64xf32>,
    %222 = vector.extract_strided_slice %161 {offsets = [30, 0], sizes = [1, 64], strides = [1, 1]} : vector<32x64xf32> to vector<1x64xf32>
    %c1_308 = arith.constant 1 : index
    %c896_309 = arith.constant 896 : index
    %223 = vector.load %arg21[%c1_308, %c896_309] : memref<2x1024xf32, #tpu.memory_space<vmem>>, vector<1x64xf32>
    tpu.vector_store %arg21[%c1_308, %c896_309], %222 {strides = array<i32>} : memref<2x1024xf32, #tpu.memory_space<vmem>>, vector<1x64xf32>,
    %224 = vector.extract_strided_slice %161 {offsets = [31, 0], sizes = [1, 64], strides = [1, 1]} : vector<32x64xf32> to vector<1x64xf32>
    %c1_310 = arith.constant 1 : index
    %c960_311 = arith.constant 960 : index
    %225 = vector.load %arg21[%c1_310, %c960_311] : memref<2x1024xf32, #tpu.memory_space<vmem>>, vector<1x64xf32>
    tpu.vector_store %arg21[%c1_310, %c960_311], %224 {strides = array<i32>} : memref<2x1024xf32, #tpu.memory_space<vmem>>, vector<1x64xf32>,
    %c0_312 = arith.constant 0 : index
    %c0_313 = arith.constant 0 : index
    %226 = vector.load %arg8[%c0_312, %c0_313] : memref<1024x15xbf16, #tpu.memory_space<vmem>>, vector<1024x15xbf16>
    %227 = arith.extf %226 : vector<1024x15xbf16> to vector<1024x15xf32>
    %c0_314 = arith.constant 0 : index
    %c0_315 = arith.constant 0 : index
    %228 = vector.load %arg21[%c0_314, %c0_315] : memref<2x1024xf32, #tpu.memory_space<vmem>>, vector<2x1024xf32>
    %cst_316 = arith.constant dense<0.000000e+00> : vector<2x15xf32>
    %229 = tpu.matmul %228, %227, %cst_316 {dimension_numbers = #tpu.dot_dimension_numbers<[1], [0], [0], [1], [0, 0, 1, 1], [], []>} : vector<2x1024xf32>, vector<1024x15xf32>, vector<2x15xf32> -> vector<2x15xf32>
    %c0_317 = arith.constant 0 : index
    %c0_318 = arith.constant 0 : index
    %230 = vector.load %arg9[%c0_317, %c0_318] : memref<1x15xf32, #tpu.memory_space<vmem>>, vector<1x15xf32>
    %231 = vector.broadcast %230 : vector<1x15xf32> to vector<2x15xf32>
    %232 = arith.addf %229, %231 : vector<2x15xf32>
    %c0_319 = arith.constant 0 : index
    %c0_320 = arith.constant 0 : index
    %233 = vector.load %arg2[%c0_319, %c0_320] : memref<2x16xf32, #tpu.memory_space<vmem>>, vector<2x16xf32>
    %c0_321 = arith.constant 0 : index
    %c0_322 = arith.constant 0 : index
    %234 = vector.load %arg10[%c0_321, %c0_322] : memref<16x64xf32, #tpu.memory_space<vmem>>, vector<16x64xf32>
    %cst_323 = arith.constant dense<0.000000e+00> : vector<2x64xf32>
    %235 = tpu.matmul %233, %234, %cst_323 {dimension_numbers = #tpu.dot_dimension_numbers<[1], [0], [0], [1], [0, 0, 1, 1], [], []>} : vector<2x16xf32>, vector<16x64xf32>, vector<2x64xf32> -> vector<2x64xf32>
    %c0_324 = arith.constant 0 : index
    %c0_325 = arith.constant 0 : index
    %236 = vector.load %arg3[%c0_324, %c0_325] : memref<2x16xf32, #tpu.memory_space<vmem>>, vector<2x16xf32>
    %c0_326 = arith.constant 0 : index
    %c0_327 = arith.constant 0 : index
    %237 = vector.load %arg11[%c0_326, %c0_327] : memref<16x64xf32, #tpu.memory_space<vmem>>, vector<16x64xf32>
    %cst_328 = arith.constant dense<0.000000e+00> : vector<2x64xf32>
    %238 = tpu.matmul %236, %237, %cst_328 {dimension_numbers = #tpu.dot_dimension_numbers<[1], [0], [0], [1], [0, 0, 1, 1], [], []>} : vector<2x16xf32>, vector<16x64xf32>, vector<2x64xf32> -> vector<2x64xf32>
    %239 = arith.addf %235, %238 : vector<2x64xf32>
    %c0_329 = arith.constant 0 : index
    %c0_330 = arith.constant 0 : index
    %240 = vector.load %arg12[%c0_329, %c0_330] : memref<15x64xf32, #tpu.memory_space<vmem>>, vector<15x64xf32>
    %cst_331 = arith.constant dense<0.000000e+00> : vector<2x64xf32>
    %241 = tpu.matmul %232, %240, %cst_331 {dimension_numbers = #tpu.dot_dimension_numbers<[1], [0], [0], [1], [0, 0, 1, 1], [], []>} : vector<2x15xf32>, vector<15x64xf32>, vector<2x64xf32> -> vector<2x64xf32>
    %242 = arith.addf %239, %241 : vector<2x64xf32>
    %c0_332 = arith.constant 0 : index
    %c0_333 = arith.constant 0 : index
    %243 = vector.load %arg13[%c0_332, %c0_333] : memref<1x64xf32, #tpu.memory_space<vmem>>, vector<1x64xf32>
    %244 = vector.broadcast %243 : vector<1x64xf32> to vector<2x64xf32>
    %245 = arith.addf %242, %244 : vector<2x64xf32>
    %cst_334 = arith.constant 0.000000e+00 : f32
    %246 = vector.broadcast %cst_334 : f32 to vector<2x64xf32>
    %247 = arith.maximumf %245, %246 : vector<2x64xf32>
    %c0_335 = arith.constant 0 : index
    %c0_336 = arith.constant 0 : index
    %248 = vector.load %arg14[%c0_335, %c0_336] : memref<64x64xf32, #tpu.memory_space<vmem>>, vector<64x64xf32>
    %cst_337 = arith.constant dense<0.000000e+00> : vector<2x64xf32>
    %249 = tpu.matmul %247, %248, %cst_337 {dimension_numbers = #tpu.dot_dimension_numbers<[1], [0], [0], [1], [0, 0, 1, 1], [], []>} : vector<2x64xf32>, vector<64x64xf32>, vector<2x64xf32> -> vector<2x64xf32>
    %c0_338 = arith.constant 0 : index
    %c0_339 = arith.constant 0 : index
    %250 = vector.load %arg15[%c0_338, %c0_339] : memref<1x64xf32, #tpu.memory_space<vmem>>, vector<1x64xf32>
    %251 = vector.broadcast %250 : vector<1x64xf32> to vector<2x64xf32>
    %252 = arith.addf %249, %251 : vector<2x64xf32>
    %cst_340 = arith.constant 0.000000e+00 : f32
    %253 = vector.broadcast %cst_340 : f32 to vector<2x64xf32>
    %254 = arith.maximumf %252, %253 : vector<2x64xf32>
    %c0_341 = arith.constant 0 : index
    %c0_342 = arith.constant 0 : index
    %255 = vector.load %arg16[%c0_341, %c0_342] : memref<64x8xf32, #tpu.memory_space<vmem>>, vector<64x8xf32>
    %cst_343 = arith.constant dense<0.000000e+00> : vector<2x8xf32>
    %256 = tpu.matmul %254, %255, %cst_343 {dimension_numbers = #tpu.dot_dimension_numbers<[1], [0], [0], [1], [0, 0, 1, 1], [], []>} : vector<2x64xf32>, vector<64x8xf32>, vector<2x8xf32> -> vector<2x8xf32>
    %c0_344 = arith.constant 0 : index
    %c0_345 = arith.constant 0 : index
    %257 = vector.load %arg17[%c0_344, %c0_345] : memref<1x8xf32, #tpu.memory_space<vmem>>, vector<1x8xf32>
    %258 = vector.broadcast %257 : vector<1x8xf32> to vector<2x8xf32>
    %259 = arith.addf %256, %258 : vector<2x8xf32>
    %c0_346 = arith.constant 0 : index
    %c0_347 = arith.constant 0 : index
    %260 = vector.load %arg18[%c0_346, %c0_347] : memref<2x128xf32, #tpu.memory_space<vmem>>, vector<2x8xf32>
    tpu.vector_store %arg18[%c0_346, %c0_347], %259 {strides = array<i32>} : memref<2x128xf32, #tpu.memory_space<vmem>>, vector<2x8xf32>,
    %c0_348 = arith.constant 0 : index
    %c8_349 = arith.constant 8 : index
    %261 = vector.load %arg18[%c0_348, %c8_349] : memref<2x128xf32, #tpu.memory_space<vmem>>, vector<2x64xf32>
    tpu.vector_store %arg18[%c0_348, %c8_349], %254 {strides = array<i32>} : memref<2x128xf32, #tpu.memory_space<vmem>>, vector<2x64xf32>,
    %cst_350 = arith.constant 0.000000e+00 : f32
    %262 = vector.broadcast %cst_350 : f32 to vector<2x56xf32>
    %c0_351 = arith.constant 0 : index
    %c72 = arith.constant 72 : index
    %263 = vector.load %arg18[%c0_351, %c72] : memref<2x128xf32, #tpu.memory_space<vmem>>, vector<2x56xf32>
    tpu.vector_store %arg18[%c0_351, %c72], %262 {strides = array<i32>} : memref<2x128xf32, #tpu.memory_space<vmem>>, vector<2x56xf32>,
    return
  }
  func.func @transform_0(%arg0: i32) -> (i32, i32) {
    %c0_i32 = arith.constant 0 : i32
    %c0_i32_0 = arith.constant 0 : i32
    %c0_i32_1 = arith.constant 0 : i32
    return %c0_i32, %c0_i32_0 : i32, i32
  }
  func.func @transform_1(%arg0: i32) -> (i32, i32) {
    %c0_i32 = arith.constant 0 : i32
    %c0_i32_0 = arith.constant 0 : i32
    %c0_i32_1 = arith.constant 0 : i32
    return %c0_i32, %c0_i32_0 : i32, i32
  }
  func.func @transform_2(%arg0: i32) -> (i32, i32) {
    %c0_i32 = arith.constant 0 : i32
    %c0_i32_0 = arith.constant 0 : i32
    %c0_i32_1 = arith.constant 0 : i32
    return %c0_i32, %c0_i32_0 : i32, i32
  }
  func.func @transform_3(%arg0: i32) -> (i32, i32) {
    %c0_i32 = arith.constant 0 : i32
    %c0_i32_0 = arith.constant 0 : i32
    %c0_i32_1 = arith.constant 0 : i32
    return %c0_i32, %c0_i32_0 : i32, i32
  }
  func.func @transform_4(%arg0: i32) -> (i32, i32) {
    %c0_i32 = arith.constant 0 : i32
    %c0_i32_0 = arith.constant 0 : i32
    %c0_i32_1 = arith.constant 0 : i32
    return %c0_i32, %c0_i32_0 : i32, i32
  }
  func.func @transform_5(%arg0: i32) -> (i32, i32) {
    %c0_i32 = arith.constant 0 : i32
    %c0_i32_0 = arith.constant 0 : i32
    %c0_i32_1 = arith.constant 0 : i32
    return %c0_i32, %c0_i32_0 : i32, i32
  }
  func.func @transform_6(%arg0: i32) -> (i32, i32) {
    %c0_i32 = arith.constant 0 : i32
    %c0_i32_0 = arith.constant 0 : i32
    %c0_i32_1 = arith.constant 0 : i32
    return %c0_i32, %c0_i32_0 : i32, i32
  }
  func.func @transform_7(%arg0: i32) -> (i32, i32) {
    %c0_i32 = arith.constant 0 : i32
    %c0_i32_0 = arith.constant 0 : i32
    %c0_i32_1 = arith.constant 0 : i32
    return %c0_i32, %c0_i32_0 : i32, i32
  }
  func.func @transform_8(%arg0: i32) -> (i32, i32) {
    %c0_i32 = arith.constant 0 : i32
    %c0_i32_0 = arith.constant 0 : i32
    %c0_i32_1 = arith.constant 0 : i32
    return %c0_i32, %c0_i32_0 : i32, i32
  }
  func.func @transform_9(%arg0: i32) -> (i32, i32) {
    %c0_i32 = arith.constant 0 : i32
    %c0_i32_0 = arith.constant 0 : i32
    %c0_i32_1 = arith.constant 0 : i32
    return %c0_i32, %c0_i32_0 : i32, i32
  }
  func.func @transform_10(%arg0: i32) -> (i32, i32) {
    %c0_i32 = arith.constant 0 : i32
    %c0_i32_0 = arith.constant 0 : i32
    %c0_i32_1 = arith.constant 0 : i32
    return %c0_i32, %c0_i32_0 : i32, i32
  }
  func.func @transform_11(%arg0: i32) -> (i32, i32) {
    %c0_i32 = arith.constant 0 : i32
    %c0_i32_0 = arith.constant 0 : i32
    %c0_i32_1 = arith.constant 0 : i32
    return %c0_i32, %c0_i32_0 : i32, i32
  }
  func.func @transform_12(%arg0: i32) -> (i32, i32) {
    %c0_i32 = arith.constant 0 : i32
    %c0_i32_0 = arith.constant 0 : i32
    %c0_i32_1 = arith.constant 0 : i32
    return %c0_i32, %c0_i32_0 : i32, i32
  }
  func.func @transform_13(%arg0: i32) -> (i32, i32) {
    %c0_i32 = arith.constant 0 : i32
    %c0_i32_0 = arith.constant 0 : i32
    %c0_i32_1 = arith.constant 0 : i32
    return %c0_i32, %c0_i32_0 : i32, i32
  }
  func.func @transform_14(%arg0: i32) -> (i32, i32) {
    %c0_i32 = arith.constant 0 : i32
    %c0_i32_0 = arith.constant 0 : i32
    %c0_i32_1 = arith.constant 0 : i32
    return %c0_i32, %c0_i32_0 : i32, i32
  }
  func.func @transform_15(%arg0: i32) -> (i32, i32) {
    %c0_i32 = arith.constant 0 : i32
    %c0_i32_0 = arith.constant 0 : i32
    %c0_i32_1 = arith.constant 0 : i32
    return %c0_i32, %c0_i32_0 : i32, i32
  }
  func.func @transform_16(%arg0: i32) -> (i32, i32) {
    %c0_i32 = arith.constant 0 : i32
    %c0_i32_0 = arith.constant 0 : i32
    %c0_i32_1 = arith.constant 0 : i32
    return %c0_i32, %c0_i32_0 : i32, i32
  }
  func.func @transform_17(%arg0: i32) -> (i32, i32) {
    %c0_i32 = arith.constant 0 : i32
    %c0_i32_0 = arith.constant 0 : i32
    %c0_i32_1 = arith.constant 0 : i32
    return %c0_i32, %c0_i32_0 : i32, i32
  }
}

</mosaic_0001>

<llo_original>
// kernel: actor_forward.1
$region0: #{actor_forward.1}
  #allocation0 [shape = 'u32[]', space=smem, size = 0x4, offset = 0x4, fixed_abs, tag = 'smem constant byte address 0x4 - core index']
  #allocation1 [shape = 'u32[144,128]{1,0:T(1,128)}', space=vmem, size = 0x12000, scoped, tag = 'internal scratch']
  #allocation2 [shape = 'f32[72,32]{1,0:T(8,128)}', space=vmem, size = 0x9000, scoped, tag = 'scratch operand']
  #allocation3 [shape = 'f32[32,288]{1,0:T(8,128)}', space=vmem, size = 0xc000, scoped, tag = 'scratch operand']
  #allocation4 [shape = 'f32[2,1024]{1,0:T(2,128)}', space=vmem, size = 0x2000, scoped, tag = 'scratch operand']
  %s0 = inlined_call_operand.vmem [shape: f32[72,9], index: 0, kind: input, shape index: {}]
  %s1 = inlined_call_operand.vmem [shape: f32[2,16], index: 1, kind: input, shape index: {}]
  %s2 = inlined_call_operand.vmem [shape: f32[2,16], index: 2, kind: input, shape index: {}]
  %s3 = inlined_call_operand.vmem [shape: f32[9,32], index: 3, kind: input, shape index: {}]
  %s4 = inlined_call_operand.vmem [shape: f32[1,32], index: 4, kind: input, shape index: {}]
  %s5 = inlined_call_operand.vmem [shape: bf16[288,64], index: 5, kind: input, shape index: {}]
  %s6 = inlined_call_operand.vmem [shape: f32[1,64], index: 6, kind: input, shape index: {}]
  %s7 = inlined_call_operand.vmem [shape: bf16[1024,15], index: 7, kind: input, shape index: {}]
  %s8 = inlined_call_operand.vmem [shape: f32[1,15], index: 8, kind: input, shape index: {}]
  %s9 = inlined_call_operand.vmem [shape: f32[16,64], index: 9, kind: input, shape index: {}]
  %s10 = inlined_call_operand.vmem [shape: f32[16,64], index: 10, kind: input, shape index: {}]
  %s11 = inlined_call_operand.vmem [shape: f32[15,64], index: 11, kind: input, shape index: {}]
  %s12 = inlined_call_operand.vmem [shape: f32[1,64], index: 12, kind: input, shape index: {}]
  %s13 = inlined_call_operand.vmem [shape: f32[64,64], index: 13, kind: input, shape index: {}]
  %s14 = inlined_call_operand.vmem [shape: f32[1,64], index: 14, kind: input, shape index: {}]
  %s15 = inlined_call_operand.vmem [shape: f32[64,8], index: 15, kind: input, shape index: {}]
  %s16 = inlined_call_operand.vmem [shape: f32[1,8], index: 16, kind: input, shape index: {}]
  %s17 = inlined_call_operand.vmem [shape: f32[2,128], index: 17, kind: output, shape index: {}]
  %s18 = sld [smem:[#allocation0]]
  $region78: #{actor_forward.1} parent=0
    _
  %s20 = ssub.s32 1, %s18
  %s21 = scalar_select 0, %s20, %s18
  // Predicated region
  $region2: #{actor_forward.1} parent=0 // pred_check
    _
  $region3: #{actor_forward.1} parent=0 // pred_check_branch
    %23 = sbr.rel (0) target = $region5
  $region4: #{actor_forward.1} parent=0 // pred_region
    _
  $region5: #{actor_forward.1} parent=0 // pred_fallthru
    _
  // Predicated region
  $region6: #{actor_forward.1} parent=0 // pred_check
    _
  $region7: #{actor_forward.1} parent=0 // pred_check_branch
    %25 = sbr.rel (0) target = $region9
  $region8: #{actor_forward.1} parent=0 // pred_region
    _
  $region9: #{actor_forward.1} parent=0 // pred_fallthru
    _
  // Predicated region
  $region10: #{actor_forward.1} parent=0 // pred_check
    _
  $region11: #{actor_forward.1} parent=0 // pred_check_branch
    %27 = sbr.rel (0) target = $region13
  $region12: #{actor_forward.1} parent=0 // pred_region
    _
  $region13: #{actor_forward.1} parent=0 // pred_fallthru
    _
  // Predicated region
  $region14: #{actor_forward.1} parent=0 // pred_check
    _
  $region15: #{actor_forward.1} parent=0 // pred_check_branch
    %29 = sbr.rel (0) target = $region17
  $region16: #{actor_forward.1} parent=0 // pred_region
    _
  $region17: #{actor_forward.1} parent=0 // pred_fallthru
    _
  // Predicated region
  $region18: #{actor_forward.1} parent=0 // pred_check
    _
  $region19: #{actor_forward.1} parent=0 // pred_check_branch
    %31 = sbr.rel (0) target = $region21
  $region20: #{actor_forward.1} parent=0 // pred_region
    _
  $region21: #{actor_forward.1} parent=0 // pred_fallthru
    _
  // Predicated region
  $region22: #{actor_forward.1} parent=0 // pred_check
    _
  $region23: #{actor_forward.1} parent=0 // pred_check_branch
    %33 = sbr.rel (0) target = $region25
  $region24: #{actor_forward.1} parent=0 // pred_region
    _
  $region25: #{actor_forward.1} parent=0 // pred_fallthru
    _
  // Predicated region
  $region26: #{actor_forward.1} parent=0 // pred_check
    _
  $region27: #{actor_forward.1} parent=0 // pred_check_branch
    %35 = sbr.rel (0) target = $region29
  $region28: #{actor_forward.1} parent=0 // pred_region
    _
  $region29: #{actor_forward.1} parent=0 // pred_fallthru
    _
  // Predicated region
  $region30: #{actor_forward.1} parent=0 // pred_check
    _
  $region31: #{actor_forward.1} parent=0 // pred_check_branch
    %37 = sbr.rel (0) target = $region33
  $region32: #{actor_forward.1} parent=0 // pred_region
    _
  $region33: #{actor_forward.1} parent=0 // pred_fallthru
    _
  // Predicated region
  $region34: #{actor_forward.1} parent=0 // pred_check
    _
  $region35: #{actor_forward.1} parent=0 // pred_check_branch
    %39 = sbr.rel (0) target = $region37
  $region36: #{actor_forward.1} parent=0 // pred_region
    _
  $region37: #{actor_forward.1} parent=0 // pred_fallthru
    _
  // Predicated region
  $region38: #{actor_forward.1} parent=0 // pred_check
    _
  $region39: #{actor_forward.1} parent=0 // pred_check_branch
    %41 = sbr.rel (0) target = $region41
  $region40: #{actor_forward.1} parent=0 // pred_region
    _
  $region41: #{actor_forward.1} parent=0 // pred_fallthru
    _
  // Predicated region
  $region42: #{actor_forward.1} parent=0 // pred_check
    _
  $region43: #{actor_forward.1} parent=0 // pred_check_branch
    %43 = sbr.rel (0) target = $region45
  $region44: #{actor_forward.1} parent=0 // pred_region
    _
  $region45: #{actor_forward.1} parent=0 // pred_fallthru
    _
  // Predicated region
  $region46: #{actor_forward.1} parent=0 // pred_check
    _
  $region47: #{actor_forward.1} parent=0 // pred_check_branch
    %45 = sbr.rel (0) target = $region49
  $region48: #{actor_forward.1} parent=0 // pred_region
    _
  $region49: #{actor_forward.1} parent=0 // pred_fallthru
    _
  // Predicated region
  $region50: #{actor_forward.1} parent=0 // pred_check
    _
  $region51: #{actor_forward.1} parent=0 // pred_check_branch
    %47 = sbr.rel (0) target = $region53
  $region52: #{actor_forward.1} parent=0 // pred_region
    _
  $region53: #{actor_forward.1} parent=0 // pred_fallthru
    _
  // Predicated region
  $region54: #{actor_forward.1} parent=0 // pred_check
    _
  $region55: #{actor_forward.1} parent=0 // pred_check_branch
    %49 = sbr.rel (0) target = $region57
  $region56: #{actor_forward.1} parent=0 // pred_region
    _
  $region57: #{actor_forward.1} parent=0 // pred_fallthru
    _
  // Predicated region
  $region58: #{actor_forward.1} parent=0 // pred_check
    _
  $region59: #{actor_forward.1} parent=0 // pred_check_branch
    %51 = sbr.rel (0) target = $region61
  $region60: #{actor_forward.1} parent=0 // pred_region
    _
  $region61: #{actor_forward.1} parent=0 // pred_fallthru
    _
  // Predicated region
  $region62: #{actor_forward.1} parent=0 // pred_check
    _
  $region63: #{actor_forward.1} parent=0 // pred_check_branch
    %53 = sbr.rel (0) target = $region65
  $region64: #{actor_forward.1} parent=0 // pred_region
    _
  $region65: #{actor_forward.1} parent=0 // pred_fallthru
    _
  // Predicated region
  $region66: #{actor_forward.1} parent=0 // pred_check
    _
  $region67: #{actor_forward.1} parent=0 // pred_check_branch
    %55 = sbr.rel (0) target = $region69
  $region68: #{actor_forward.1} parent=0 // pred_region
    _
  $region69: #{actor_forward.1} parent=0 // pred_fallthru
    _
  %v56 = vld [vmem:[%s0] sm:$0xff]
  %v57 = vld [vmem:[%s0 + $0x8] sm:$0xff]
  %v58 = vld [vmem:[%s0 + $0x10] sm:$0xff]
  %v59 = vld [vmem:[%s0 + $0x18] sm:$0xff]
  %v60 = vld [vmem:[%s0 + $0x20] sm:$0xff]
  %v61 = vld [vmem:[%s0 + $0x28] sm:$0xff]
  %v62 = vld [vmem:[%s0 + $0x30] sm:$0xff]
  %v63 = vld [vmem:[%s0 + $0x38] sm:$0xff]
  %v64 = vld [vmem:[%s0 + $0x40] sm:$0xff]
  %v65 = vld [vmem:[%s3] sm:$0xff]
  %v66 = vld [vmem:[%s3 + $0x8] sm:$0x1]
  %v67 = vld [vmem:[%s4] sm:$0x1]
  %v69 = vlaneseq
  %v70 = vshrl.u32 %v69, 7
  %v71 = vsub.s32 0, %v70
  %v72 = vrot.slane %v67, %v71
  %vm74 = vcmask 72704
  %v76 = vsel %vm74, %v56, 0
  %v79 = vsel %vm74, %v57, 0
  %v82 = vsel %vm74, %v58, 0
  %v85 = vsel %vm74, %v59, 0
  %v88 = vsel %vm74, %v60, 0
  %v91 = vsel %vm74, %v61, 0
  %v94 = vsel %vm74, %v62, 0
  %v97 = vsel %vm74, %v63, 0
  %v100 = vsel %vm74, %v64, 0
  %vm102 = vcmask 1040384
  %v104 = vsel %vm102, %v66, 0
  %106 = vmatprep.subr.mxu0 0.0
  %107 = vmatpush1.msra.mxu0 %v65
  %108 = vmatprep.subr.mxu0 0.0
  %109 = vmatpush1.msra.mxu0 %v104
  %110 = vmatprep.subr.mxu0 0.0
  %111 = vmatpush1.msra.mxu0 0.0
  %112 = vmatprep.subr.mxu0 0.0
  %113 = vmatpush1.msra.mxu0 0.0
  %114 = vmatprep.subr.mxu0 0.0
  %115 = vmatpush1.msra.mxu0 0.0
  %116 = vmatprep.subr.mxu0 0.0
  %117 = vmatpush1.msra.mxu0 0.0
  %118 = vmatprep.subr.mxu0 0.0
  %119 = vmatpush1.msra.mxu0 0.0
  %120 = vmatprep.subr.mxu0 0.0
  %121 = vmatpush1.msra.mxu0 0.0
  %122 = vmatprep.subr.mxu0 0.0
  %123 = vmatpush1.msra.mxu0 0.0
  %124 = vmatprep.subr.mxu0 0.0
  %125 = vmatpush1.msra.mxu0 0.0
  %126 = vmatprep.subr.mxu0 0.0
  %127 = vmatpush1.msra.mxu0 0.0
  %128 = vmatprep.subr.mxu0 0.0
  %129 = vmatpush1.msra.mxu0 0.0
  %130 = vmatprep.subr.mxu0 0.0
  %131 = vmatpush1.msra.mxu0 0.0
  %132 = vmatprep.subr.mxu0 0.0
  %133 = vmatpush1.msra.mxu0 0.0
  %134 = vmatprep.subr.mxu0 0.0
  %135 = vmatpush1.msra.mxu0 0.0
  %136 = vmatprep.subr.mxu0 0.0
  %137 = vmatpush1.msra.mxu0 0.0
  %138 = vmatprep.subr.mxu0 0.0
  %139 = vmatpush1.msra.mxu0 0.0
  %140 = vmatprep.subr.mxu0 0.0
  %141 = vmatpush1.msra.mxu0 0.0
  %142 = vmatprep.subr.mxu0 0.0
  %143 = vmatpush1.msra.mxu0 0.0
  %144 = vmatprep.subr.mxu0 0.0
  %145 = vmatpush1.msra.mxu0 0.0
  %146 = vmatprep.subr.mxu0 0.0
  %147 = vmatpush1.msra.mxu0 0.0
  %148 = vmatprep.subr.mxu0 0.0
  %149 = vmatpush1.msra.mxu0 0.0
  %150 = vmatprep.subr.mxu0 0.0
  %151 = vmatpush1.msra.mxu0 0.0
  %152 = vmatprep.subr.mxu0 0.0
  %153 = vmatpush1.msra.mxu0 0.0
  %154 = vmatprep.subr.mxu0 0.0
  %155 = vmatpush1.msra.mxu0 0.0
  %156 = vmatprep.subr.mxu0 0.0
  %157 = vmatpush1.msra.mxu0 0.0
  %158 = vmatprep.subr.mxu0 0.0
  %159 = vmatpush1.msra.mxu0 0.0
  %160 = vmatprep.subr.mxu0 0.0
  %161 = vmatpush1.msra.mxu0 0.0
  %162 = vmatprep.subr.mxu0 0.0
  %163 = vmatpush1.msra.mxu0 0.0
  %164 = vmatprep.subr.mxu0 0.0
  %165 = vmatpush1.msra.mxu0 0.0
  %166 = vmatprep.subr.mxu0 0.0
  %167 = vmatpush1.msra.mxu0 0.0
  %168 = vmatprep.subr.mxu0 0.0
  %169 = vmatpush1.msra.mxu0 0.0
  %170 = vmatprep.mubr.f32.mxu0 0.0
  %171 = vmatmul.mubr.f32.gmra.mrb[0].mxu0 %v76
  %v172 = vpop.f32.mrb[0].mxu0
  %v173 = vadd.f32 %v72, %v172
  %v174 = vpop.f32.mrb[0].mxu0
  %175 = vmatprep.mubr.f32.mxu0 0.0
  %176 = vmatmul.mubr.f32.gmra.mrb[0].mxu0 %v79
  %v177 = vpop.f32.mrb[0].mxu0
  %v178 = vadd.f32 %v72, %v177
  %v179 = vpop.f32.mrb[0].mxu0
  %180 = vmatprep.mubr.f32.mxu0 0.0
  %181 = vmatmul.mubr.f32.gmra.mrb[0].mxu0 %v82
  %v182 = vpop.f32.mrb[0].mxu0
  %v183 = vadd.f32 %v72, %v182
  %v184 = vpop.f32.mrb[0].mxu0
  %185 = vmatprep.mubr.f32.mxu0 0.0
  %186 = vmatmul.mubr.f32.gmra.mrb[0].mxu0 %v85
  %v187 = vpop.f32.mrb[0].mxu0
  %v188 = vadd.f32 %v72, %v187
  %v189 = vpop.f32.mrb[0].mxu0
  %190 = vmatprep.mubr.f32.mxu0 0.0
  %191 = vmatmul.mubr.f32.gmra.mrb[0].mxu0 %v88
  %v192 = vpop.f32.mrb[0].mxu0
  %v193 = vadd.f32 %v72, %v192
  %v194 = vpop.f32.mrb[0].mxu0
  %195 = vmatprep.mubr.f32.mxu0 0.0
  %196 = vmatmul.mubr.f32.gmra.mrb[0].mxu0 %v91
  %v197 = vpop.f32.mrb[0].mxu0
  %v198 = vadd.f32 %v72, %v197
  %v199 = vpop.f32.mrb[0].mxu0
  %200 = vmatprep.mubr.f32.mxu0 0.0
  %201 = vmatmul.mubr.f32.gmra.mrb[0].mxu0 %v94
  %v202 = vpop.f32.mrb[0].mxu0
  %v203 = vadd.f32 %v72, %v202
  %v204 = vpop.f32.mrb[0].mxu0
  %205 = vmatprep.mubr.f32.mxu0 0.0
  %206 = vmatmul.mubr.f32.gmra.mrb[0].mxu0 %v97
  %v207 = vpop.f32.mrb[0].mxu0
  %v208 = vadd.f32 %v72, %v207
  %v209 = vpop.f32.mrb[0].mxu0
  %210 = vmatprep.mubr.f32.mxu0 0.0
  %211 = vmatmul.mubr.f32.gmra.mrb[0].mxu0 %v100
  %v212 = vpop.f32.mrb[0].mxu0
  %v213 = vadd.f32 %v72, %v212
  %v214 = vpop.f32.mrb[0].mxu0
  %215 = vdwg.mxu0
  %v216 = vmax.f32 %v173, 0.0
  %v217 = vmax.f32 %v178, 0.0
  %v218 = vmax.f32 %v183, 0.0
  %v219 = vmax.f32 %v188, 0.0
  %v220 = vmax.f32 %v193, 0.0
  %v221 = vmax.f32 %v198, 0.0
  %v222 = vmax.f32 %v203, 0.0
  %v223 = vmax.f32 %v208, 0.0
  %v224 = vmax.f32 %v213, 0.0
  %vm225 = vcmask 261120
  %226 = vst.msk [vmem:[#allocation2] sm:$0xff] %vm225, %v216
  %227 = vst.msk [vmem:[#allocation2 + $0x8] sm:$0xff] %vm225, %v217
  %228 = vst.msk [vmem:[#allocation2 + $0x10] sm:$0xff] %vm225, %v218
  %229 = vst.msk [vmem:[#allocation2 + $0x18] sm:$0xff] %vm225, %v219
  %230 = vst.msk [vmem:[#allocation2 + $0x20] sm:$0xff] %vm225, %v220
  %231 = vst.msk [vmem:[#allocation2 + $0x28] sm:$0xff] %vm225, %v221
  %232 = vst.msk [vmem:[#allocation2 + $0x30] sm:$0xff] %vm225, %v222
  %233 = vst.msk [vmem:[#allocation2 + $0x38] sm:$0xff] %vm225, %v223
  %234 = vst.msk [vmem:[#allocation2 + $0x40] sm:$0xff] %vm225, %v224
  %v235 = vld [vmem:[#allocation2] sm:$0xf]
  %vm236 = vcmask 257024
  %237 = vst.msk [vmem:[#allocation3] sm:$0xf] %vm236, %v235
  %v238 = vld [vmem:[#allocation2 + $0x1] sm:$0xf]
  %240 = vrot.lane.b32.xlu0 %v238, 32
  %v241 = vpop.permute.xlu0 %240
  %vm243 = vcmask 519424
  %244 = vst.msk [vmem:[#allocation3] sm:$0xf] %vm243, %v241
  %v245 = vld [vmem:[#allocation2 + $0x2] sm:$0xf]
  %247 = vrot.lane.b32.xlu0 %v245, 64
  %v248 = vpop.permute.xlu0 %247
  %vm250 = vcmask 781824
  %251 = vst.msk [vmem:[#allocation3] sm:$0xf] %vm250, %v248
  %v252 = vld [vmem:[#allocation2 + $0x6] sm:$0xf]
  %v254 = vrot.slane %v252, 4
  %vm256 = vcmask 261124
  %257 = vst.msk [vmem:[#allocation3] sm:$0xf0] %vm256, %v254
  %v258 = vld [vmem:[#allocation2 + $0x7] sm:$0xf]
  %v260 = vrot.slane %v258, 4
  %261 = vrot.lane.b32.xlu0 %v260, 32
  %v262 = vpop.permute.xlu0 %261
  %vm264 = vcmask 523524
  %265 = vst.msk [vmem:[#allocation3] sm:$0xf0] %vm264, %v262
  %v266 = vld [vmem:[#allocation2 + $0x8] sm:$0xf]
  %v268 = vrot.slane %v266, 4
  %269 = vrot.lane.b32.xlu0 %v268, 64
  %v270 = vpop.permute.xlu0 %269
  %vm272 = vcmask 785924
  %273 = vst.msk [vmem:[#allocation3] sm:$0xf0] %vm272, %v270
  %v274 = vld [vmem:[#allocation2 + $0xc] sm:$0xf]
  %275 = vst.msk [vmem:[#allocation3 + $0x18] sm:$0xf] %vm236, %v274
  %v276 = vld [vmem:[#allocation2 + $0xd] sm:$0xf]
  %278 = vrot.lane.b32.xlu0 %v276, 32
  %v279 = vpop.permute.xlu0 %278
  %281 = vst.msk [vmem:[#allocation3 + $0x18] sm:$0xf] %vm243, %v279
  %v282 = vld [vmem:[#allocation2 + $0xe] sm:$0xf]
  %284 = vrot.lane.b32.xlu0 %v282, 64
  %v285 = vpop.permute.xlu0 %284
  %287 = vst.msk [vmem:[#allocation3 + $0x18] sm:$0xf] %vm250, %v285
  %v288 = vld [vmem:[#allocation2 + $0x12] sm:$0xf]
  %v290 = vrot.slane %v288, 4
  %292 = vst.msk [vmem:[#allocation3 + $0x18] sm:$0xf0] %vm256, %v290
  %v293 = vld [vmem:[#allocation2 + $0x13] sm:$0xf]
  %v295 = vrot.slane %v293, 4
  %296 = vrot.lane.b32.xlu0 %v295, 32
  %v297 = vpop.permute.xlu0 %296
  %299 = vst.msk [vmem:[#allocation3 + $0x18] sm:$0xf0] %vm264, %v297
  %v300 = vld [vmem:[#allocation2 + $0x14] sm:$0xf]
  %v302 = vrot.slane %v300, 4
  %303 = vrot.lane.b32.xlu0 %v302, 64
  %v304 = vpop.permute.xlu0 %303
  %306 = vst.msk [vmem:[#allocation3 + $0x18] sm:$0xf0] %vm272, %v304
  %v307 = vld [vmem:[#allocation2 + $0x6] sm:$0xf]
  %309 = vrot.lane.b32.xlu0 %v307, 96
  %v310 = vpop.permute.xlu0 %309
  %vm312 = vcmask 1044224
  %313 = vst.msk [vmem:[#allocation3] sm:$0xf] %vm312, %v310
  %v314 = vld [vmem:[#allocation2 + $0x7] sm:$0xf]
  %315 = vst.msk [vmem:[#allocation3 + $0x8] sm:$0xf] %vm236, %v314
  %v316 = vld [vmem:[#allocation2 + $0x8] sm:$0xf]
  %318 = vrot.lane.b32.xlu0 %v316, 32
  %v319 = vpop.permute.xlu0 %318
  %321 = vst.msk [vmem:[#allocation3 + $0x8] sm:$0xf] %vm243, %v319
  %v322 = vld [vmem:[#allocation2 + $0xc] sm:$0xf]
  %v324 = vrot.slane %v322, 4
  %325 = vrot.lane.b32.xlu0 %v324, 96
  %v326 = vpop.permute.xlu0 %325
  %vm328 = vcmask 1048324
  %329 = vst.msk [vmem:[#allocation3] sm:$0xf0] %vm328, %v326
  %v330 = vld [vmem:[#allocation2 + $0xd] sm:$0xf]
  %v332 = vrot.slane %v330, 4
  %334 = vst.msk [vmem:[#allocation3 + $0x8] sm:$0xf0] %vm256, %v332
  %v335 = vld [vmem:[#allocation2 + $0xe] sm:$0xf]
  %v337 = vrot.slane %v335, 4
  %338 = vrot.lane.b32.xlu0 %v337, 32
  %v339 = vpop.permute.xlu0 %338
  %341 = vst.msk [vmem:[#allocation3 + $0x8] sm:$0xf0] %vm264, %v339
  %v342 = vld [vmem:[#allocation2 + $0x12] sm:$0xf]
  %344 = vrot.lane.b32.xlu0 %v342, 96
  %v345 = vpop.permute.xlu0 %344
  %347 = vst.msk [vmem:[#allocation3 + $0x18] sm:$0xf] %vm312, %v345
  %v348 = vld [vmem:[#allocation2 + $0x13] sm:$0xf]
  %349 = vst.msk [vmem:[#allocation3 + $0x20] sm:$0xf] %vm236, %v348
  %v350 = vld [vmem:[#allocation2 + $0x14] sm:$0xf]
  %352 = vrot.lane.b32.xlu0 %v350, 32
  %v353 = vpop.permute.xlu0 %352
  %355 = vst.msk [vmem:[#allocation3 + $0x20] sm:$0xf] %vm243, %v353
  %v356 = vld [vmem:[#allocation2 + $0x18] sm:$0xf]
  %v358 = vrot.slane %v356, 4
  %359 = vrot.lane.b32.xlu0 %v358, 96
  %v360 = vpop.permute.xlu0 %359
  %362 = vst.msk [vmem:[#allocation3 + $0x18] sm:$0xf0] %vm328, %v360
  %v363 = vld [vmem:[#allocation2 + $0x19] sm:$0xf]
  %v365 = vrot.slane %v363, 4
  %367 = vst.msk [vmem:[#allocation3 + $0x20] sm:$0xf0] %vm256, %v365
  %v368 = vld [vmem:[#allocation2 + $0x1a] sm:$0xf]
  %v370 = vrot.slane %v368, 4
  %371 = vrot.lane.b32.xlu0 %v370, 32
  %v372 = vpop.permute.xlu0 %371
  %374 = vst.msk [vmem:[#allocation3 + $0x20] sm:$0xf0] %vm264, %v372
  %v375 = vld [vmem:[#allocation2 + $0xc] sm:$0xf]
  %377 = vrot.lane.b32.xlu0 %v375, 64
  %v378 = vpop.permute.xlu0 %377
  %380 = vst.msk [vmem:[#allocation3 + $0x8] sm:$0xf] %vm250, %v378
  %v381 = vld [vmem:[#allocation2 + $0xd] sm:$0xf]
  %383 = vrot.lane.b32.xlu0 %v381, 96
  %v384 = vpop.permute.xlu0 %383
  %386 = vst.msk [vmem:[#allocation3 + $0x8] sm:$0xf] %vm312, %v384
  %v387 = vld [vmem:[#allocation2 + $0xe] sm:$0xf]
  %388 = vst.msk [vmem:[#allocation3 + $0x10] sm:$0xf] %vm236, %v387
  %v389 = vld [vmem:[#allocation2 + $0x12] sm:$0xf]
  %v391 = vrot.slane %v389, 4
  %392 = vrot.lane.b32.xlu0 %v391, 64
  %v393 = vpop.permute.xlu0 %392
  %395 = vst.msk [vmem:[#allocation3 + $0x8] sm:$0xf0] %vm272, %v393
  %v396 = vld [vmem:[#allocation2 + $0x13] sm:$0xf]
  %v398 = vrot.slane %v396, 4
  %399 = vrot.lane.b32.xlu0 %v398, 96
  %v400 = vpop.permute.xlu0 %399
  %402 = vst.msk [vmem:[#allocation3 + $0x8] sm:$0xf0] %vm328, %v400
  %v403 = vld [vmem:[#allocation2 + $0x14] sm:$0xf]
  %v405 = vrot.slane %v403, 4
  %407 = vst.msk [vmem:[#allocation3 + $0x10] sm:$0xf0] %vm256, %v405
  %v408 = vld [vmem:[#allocation2 + $0x18] sm:$0xf]
  %410 = vrot.lane.b32.xlu0 %v408, 64
  %v411 = vpop.permute.xlu0 %410
  %413 = vst.msk [vmem:[#allocation3 + $0x20] sm:$0xf] %vm250, %v411
  %v414 = vld [vmem:[#allocation2 + $0x19] sm:$0xf]
  %416 = vrot.lane.b32.xlu0 %v414, 96
  %v417 = vpop.permute.xlu0 %416
  %419 = vst.msk [vmem:[#allocation3 + $0x20] sm:$0xf] %vm312, %v417
  %v420 = vld [vmem:[#allocation2 + $0x1a] sm:$0xf]
  %421 = vst.msk [vmem:[#allocation3 + $0x28] sm:$0xf] %vm236, %v420
  %v422 = vld [vmem:[#allocation2 + $0x1e] sm:$0xf]
  %v424 = vrot.slane %v422, 4
  %425 = vrot.lane.b32.xlu0 %v424, 64
  %v426 = vpop.permute.xlu0 %425
  %428 = vst.msk [vmem:[#allocation3 + $0x20] sm:$0xf0] %vm272, %v426
  %v429 = vld [vmem:[#allocation2 + $0x1f] sm:$0xf]
  %v431 = vrot.slane %v429, 4
  %432 = vrot.lane.b32.xlu0 %v431, 96
  %v433 = vpop.permute.xlu0 %432
  %435 = vst.msk [vmem:[#allocation3 + $0x20] sm:$0xf0] %vm328, %v433
  %v436 = vld [vmem:[#allocation2 + $0x20] sm:$0xf]
  %v438 = vrot.slane %v436, 4
  %440 = vst.msk [vmem:[#allocation3 + $0x28] sm:$0xf0] %vm256, %v438
  %v441 = vld [vmem:[#allocation2 + $0x24] sm:$0xf]
  %442 = vst.msk [vmem:[#allocation3 + $0x30] sm:$0xf] %vm236, %v441
  %v443 = vld [vmem:[#allocation2 + $0x25] sm:$0xf]
  %445 = vrot.lane.b32.xlu0 %v443, 32
  %v446 = vpop.permute.xlu0 %445
  %448 = vst.msk [vmem:[#allocation3 + $0x30] sm:$0xf] %vm243, %v446
  %v449 = vld [vmem:[#allocation2 + $0x26] sm:$0xf]
  %451 = vrot.lane.b32.xlu0 %v449, 64
  %v452 = vpop.permute.xlu0 %451
  %454 = vst.msk [vmem:[#allocation3 + $0x30] sm:$0xf] %vm250, %v452
  %v455 = vld [vmem:[#allocation2 + $0x2a] sm:$0xf]
  %v457 = vrot.slane %v455, 4
  %459 = vst.msk [vmem:[#allocation3 + $0x30] sm:$0xf0] %vm256, %v457
  %v460 = vld [vmem:[#allocation2 + $0x2b] sm:$0xf]
  %v462 = vrot.slane %v460, 4
  %463 = vrot.lane.b32.xlu0 %v462, 32
  %v464 = vpop.permute.xlu0 %463
  %466 = vst.msk [vmem:[#allocation3 + $0x30] sm:$0xf0] %vm264, %v464
  %v467 = vld [vmem:[#allocation2 + $0x2c] sm:$0xf]
  %v469 = vrot.slane %v467, 4
  %470 = vrot.lane.b32.xlu0 %v469, 64
  %v471 = vpop.permute.xlu0 %470
  %473 = vst.msk [vmem:[#allocation3 + $0x30] sm:$0xf0] %vm272, %v471
  %v474 = vld [vmem:[#allocation2 + $0x30] sm:$0xf]
  %475 = vst.msk [vmem:[#allocation3 + $0x48] sm:$0xf] %vm236, %v474
  %v476 = vld [vmem:[#allocation2 + $0x31] sm:$0xf]
  %478 = vrot.lane.b32.xlu0 %v476, 32
  %v479 = vpop.permute.xlu0 %478
  %481 = vst.msk [vmem:[#allocation3 + $0x48] sm:$0xf] %vm243, %v479
  %v482 = vld [vmem:[#allocation2 + $0x32] sm:$0xf]
  %484 = vrot.lane.b32.xlu0 %v482, 64
  %v485 = vpop.permute.xlu0 %484
  %487 = vst.msk [vmem:[#allocation3 + $0x48] sm:$0xf] %vm250, %v485
  %v488 = vld [vmem:[#allocation2 + $0x36] sm:$0xf]
  %v490 = vrot.slane %v488, 4
  %492 = vst.msk [vmem:[#allocation3 + $0x48] sm:$0xf0] %vm256, %v490
  %v493 = vld [vmem:[#allocation2 + $0x37] sm:$0xf]
  %v495 = vrot.slane %v493, 4
  %496 = vrot.lane.b32.xlu0 %v495, 32
  %v497 = vpop.permute.xlu0 %496
  %499 = vst.msk [vmem:[#allocation3 + $0x48] sm:$0xf0] %vm264, %v497
  %v500 = vld [vmem:[#allocation2 + $0x38] sm:$0xf]
  %v502 = vrot.slane %v500, 4
  %503 = vrot.lane.b32.xlu0 %v502, 64
  %v504 = vpop.permute.xlu0 %503
  %506 = vst.msk [vmem:[#allocation3 + $0x48] sm:$0xf0] %vm272, %v504
  %v507 = vld [vmem:[#allocation2 + $0x2a] sm:$0xf]
  %509 = vrot.lane.b32.xlu0 %v507, 96
  %v510 = vpop.permute.xlu0 %509
  %512 = vst.msk [vmem:[#allocation3 + $0x30] sm:$0xf] %vm312, %v510
  %v513 = vld [vmem:[#allocation2 + $0x2b] sm:$0xf]
  %514 = vst.msk [vmem:[#allocation3 + $0x38] sm:$0xf] %vm236, %v513
  %v515 = vld [vmem:[#allocation2 + $0x2c] sm:$0xf]
  %517 = vrot.lane.b32.xlu0 %v515, 32
  %v518 = vpop.permute.xlu0 %517
  %520 = vst.msk [vmem:[#allocation3 + $0x38] sm:$0xf] %vm243, %v518
  %v521 = vld [vmem:[#allocation2 + $0x30] sm:$0xf]
  %v523 = vrot.slane %v521, 4
  %524 = vrot.lane.b32.xlu0 %v523, 96
  %v525 = vpop.permute.xlu0 %524
  %527 = vst.msk [vmem:[#allocation3 + $0x30] sm:$0xf0] %vm328, %v525
  %v528 = vld [vmem:[#allocation2 + $0x31] sm:$0xf]
  %v530 = vrot.slane %v528, 4
  %532 = vst.msk [vmem:[#allocation3 + $0x38] sm:$0xf0] %vm256, %v530
  %v533 = vld [vmem:[#allocation2 + $0x32] sm:$0xf]
  %v535 = vrot.slane %v533, 4
  %536 = vrot.lane.b32.xlu0 %v535, 32
  %v537 = vpop.permute.xlu0 %536
  %539 = vst.msk [vmem:[#allocation3 + $0x38] sm:$0xf0] %vm264, %v537
  %v540 = vld [vmem:[#allocation2 + $0x36] sm:$0xf]
  %542 = vrot.lane.b32.xlu0 %v540, 96
  %v543 = vpop.permute.xlu0 %542
  %545 = vst.msk [vmem:[#allocation3 + $0x48] sm:$0xf] %vm312, %v543
  %v546 = vld [vmem:[#allocation2 + $0x37] sm:$0xf]
  %547 = vst.msk [vmem:[#allocation3 + $0x50] sm:$0xf] %vm236, %v546
  %v548 = vld [vmem:[#allocation2 + $0x38] sm:$0xf]
  %550 = vrot.lane.b32.xlu0 %v548, 32
  %v551 = vpop.permute.xlu0 %550
  %553 = vst.msk [vmem:[#allocation3 + $0x50] sm:$0xf] %vm243, %v551
  %v554 = vld [vmem:[#allocation2 + $0x3c] sm:$0xf]
  %v556 = vrot.slane %v554, 4
  %557 = vrot.lane.b32.xlu0 %v556, 96
  %v558 = vpop.permute.xlu0 %557
  %560 = vst.msk [vmem:[#allocation3 + $0x48] sm:$0xf0] %vm328, %v558
  %v561 = vld [vmem:[#allocation2 + $0x3d] sm:$0xf]
  %v563 = vrot.slane %v561, 4
  %565 = vst.msk [vmem:[#allocation3 + $0x50] sm:$0xf0] %vm256, %v563
  %v566 = vld [vmem:[#allocation2 + $0x3e] sm:$0xf]
  %v568 = vrot.slane %v566, 4
  %569 = vrot.lane.b32.xlu0 %v568, 32
  %v570 = vpop.permute.xlu0 %569
  %572 = vst.msk [vmem:[#allocation3 + $0x50] sm:$0xf0] %vm264, %v570
  %v573 = vld [vmem:[#allocation2 + $0x30] sm:$0xf]
  %575 = vrot.lane.b32.xlu0 %v573, 64
  %v576 = vpop.permute.xlu0 %575
  %578 = vst.msk [vmem:[#allocation3 + $0x38] sm:$0xf] %vm250, %v576
  %v579 = vld [vmem:[#allocation2 + $0x31] sm:$0xf]
  %581 = vrot.lane.b32.xlu0 %v579, 96
  %v582 = vpop.permute.xlu0 %581
  %584 = vst.msk [vmem:[#allocation3 + $0x38] sm:$0xf] %vm312, %v582
  %v585 = vld [vmem:[#allocation2 + $0x32] sm:$0xf]
  %586 = vst.msk [vmem:[#allocation3 + $0x40] sm:$0xf] %vm236, %v585
  %v587 = vld [vmem:[#allocation2 + $0x36] sm:$0xf]
  %v589 = vrot.slane %v587, 4
  %590 = vrot.lane.b32.xlu0 %v589, 64
  %v591 = vpop.permute.xlu0 %590
  %593 = vst.msk [vmem:[#allocation3 + $0x38] sm:$0xf0] %vm272, %v591
  %v594 = vld [vmem:[#allocation2 + $0x37] sm:$0xf]
  %v596 = vrot.slane %v594, 4
  %597 = vrot.lane.b32.xlu0 %v596, 96
  %v598 = vpop.permute.xlu0 %597
  %600 = vst.msk [vmem:[#allocation3 + $0x38] sm:$0xf0] %vm328, %v598
  %v601 = vld [vmem:[#allocation2 + $0x38] sm:$0xf]
  %v603 = vrot.slane %v601, 4
  %605 = vst.msk [vmem:[#allocation3 + $0x40] sm:$0xf0] %vm256, %v603
  %v606 = vld [vmem:[#allocation2 + $0x3c] sm:$0xf]
  %608 = vrot.lane.b32.xlu0 %v606, 64
  %v609 = vpop.permute.xlu0 %608
  %611 = vst.msk [vmem:[#allocation3 + $0x50] sm:$0xf] %vm250, %v609
  %v612 = vld [vmem:[#allocation2 + $0x3d] sm:$0xf]
  %614 = vrot.lane.b32.xlu0 %v612, 96
  %v615 = vpop.permute.xlu0 %614
  %617 = vst.msk [vmem:[#allocation3 + $0x50] sm:$0xf] %vm312, %v615
  %v618 = vld [vmem:[#allocation2 + $0x3e] sm:$0xf]
  %619 = vst.msk [vmem:[#allocation3 + $0x58] sm:$0xf] %vm236, %v618
  %v620 = vld [vmem:[#allocation2 + $0x42] sm:$0xf]
  %v622 = vrot.slane %v620, 4
  %623 = vrot.lane.b32.xlu0 %v622, 64
  %v624 = vpop.permute.xlu0 %623
  %626 = vst.msk [vmem:[#allocation3 + $0x50] sm:$0xf0] %vm272, %v624
  %v627 = vld [vmem:[#allocation2 + $0x43] sm:$0xf]
  %v629 = vrot.slane %v627, 4
  %630 = vrot.lane.b32.xlu0 %v629, 96
  %v631 = vpop.permute.xlu0 %630
  %633 = vst.msk [vmem:[#allocation3 + $0x50] sm:$0xf0] %vm328, %v631
  %v634 = vld [vmem:[#allocation2 + $0x44] sm:$0xf]
  %v636 = vrot.slane %v634, 4
  %638 = vst.msk [vmem:[#allocation3 + $0x58] sm:$0xf0] %vm256, %v636
  %v639 = vld [vmem:[%s5] sm:$0xf]
  %v640 = vld [vmem:[%s5 + $0x4] sm:$0xf]
  %v641 = vld [vmem:[%s5 + $0x8] sm:$0xf]
  %v642 = vld [vmem:[%s5 + $0xc] sm:$0xf]
  %v643 = vld [vmem:[%s5 + $0x10] sm:$0xf]
  %v644 = vld [vmem:[%s5 + $0x14] sm:$0xf]
  %v645 = vld [vmem:[%s5 + $0x18] sm:$0xf]
  %v646 = vld [vmem:[%s5 + $0x1c] sm:$0xf]
  %v647 = vld [vmem:[%s5 + $0x20] sm:$0xf]
  %v648 = vld [vmem:[%s5 + $0x24] sm:$0xf]
  %v649 = vld [vmem:[%s5 + $0x28] sm:$0xf]
  %v650 = vld [vmem:[%s5 + $0x2c] sm:$0xf]
  %v651 = vld [vmem:[%s5 + $0x30] sm:$0xf]
  %v652 = vld [vmem:[%s5 + $0x34] sm:$0xf]
  %v653 = vld [vmem:[%s5 + $0x38] sm:$0xf]
  %v654 = vld [vmem:[%s5 + $0x3c] sm:$0xf]
  %v655 = vld [vmem:[%s5 + $0x40] sm:$0xf]
  %v656 = vld [vmem:[%s5 + $0x44] sm:$0xf]
  %v657 = vld [vmem:[%s5 + $0x48] sm:$0xf]
  %v658 = vld [vmem:[%s5 + $0x4c] sm:$0xf]
  %v659 = vld [vmem:[%s5 + $0x50] sm:$0xf]
  %v660 = vld [vmem:[%s5 + $0x54] sm:$0xf]
  %v661 = vld [vmem:[%s5 + $0x58] sm:$0xf]
  %v662 = vld [vmem:[%s5 + $0x5c] sm:$0xf]
  %v663 = vld [vmem:[%s5 + $0x60] sm:$0xf]
  %v664 = vld [vmem:[%s5 + $0x64] sm:$0xf]
  %v665 = vld [vmem:[%s5 + $0x68] sm:$0xf]
  %v666 = vld [vmem:[%s5 + $0x6c] sm:$0xf]
  %v667 = vld [vmem:[%s5 + $0x70] sm:$0xf]
  %v668 = vld [vmem:[%s5 + $0x74] sm:$0xf]
  %v669 = vld [vmem:[%s5 + $0x78] sm:$0xf]
  %v670 = vld [vmem:[%s5 + $0x7c] sm:$0xf]
  %v671 = vld [vmem:[%s5 + $0x80] sm:$0xf]
  %v672 = vld [vmem:[%s5 + $0x84] sm:$0xf]
  %v673 = vld [vmem:[%s5 + $0x88] sm:$0xf]
  %v674 = vld [vmem:[%s5 + $0x8c] sm:$0xf]
  %v675 = vunpack.c.l.bf16 %v639
  %v676 = vunpack.c.l.bf16 %v640
  %v677 = vunpack.c.l.bf16 %v641
  %v678 = vunpack.c.l.bf16 %v642
  %v679 = vunpack.c.l.bf16 %v643
  %v680 = vunpack.c.l.bf16 %v644
  %v681 = vunpack.c.l.bf16 %v645
  %v682 = vunpack.c.l.bf16 %v646
  %v683 = vunpack.c.l.bf16 %v647
  %v684 = vunpack.c.l.bf16 %v648
  %v685 = vunpack.c.l.bf16 %v649
  %v686 = vunpack.c.l.bf16 %v650
  %v687 = vunpack.c.l.bf16 %v651
  %v688 = vunpack.c.l.bf16 %v652
  %v689 = vunpack.c.l.bf16 %v653
  %v690 = vunpack.c.l.bf16 %v654
  %v691 = vunpack.c.l.bf16 %v655
  %v692 = vunpack.c.l.bf16 %v656
  %v693 = vunpack.c.l.bf16 %v657
  %v694 = vunpack.c.l.bf16 %v658
  %v695 = vunpack.c.l.bf16 %v659
  %v696 = vunpack.c.l.bf16 %v660
  %v697 = vunpack.c.l.bf16 %v661
  %v698 = vunpack.c.l.bf16 %v662
  %v699 = vunpack.c.l.bf16 %v663
  %v700 = vunpack.c.l.bf16 %v664
  %v701 = vunpack.c.l.bf16 %v665
  %v702 = vunpack.c.l.bf16 %v666
  %v703 = vunpack.c.l.bf16 %v667
  %v704 = vunpack.c.l.bf16 %v668
  %v705 = vunpack.c.l.bf16 %v669
  %v706 = vunpack.c.l.bf16 %v670
  %v707 = vunpack.c.l.bf16 %v671
  %v708 = vunpack.c.l.bf16 %v672
  %v709 = vunpack.c.l.bf16 %v673
  %v710 = vunpack.c.l.bf16 %v674
  %v711 = vld [vmem:[#allocation3] sm:$0xff]
  %v712 = vld [vmem:[#allocation3 + $0x8] sm:$0xff]
  %v713 = vld [vmem:[#allocation3 + $0x10] sm:$0xff]
  %v714 = vld [vmem:[#allocation3 + $0x18] sm:$0xff]
  %v715 = vld [vmem:[#allocation3 + $0x20] sm:$0xff]
  %v716 = vld [vmem:[#allocation3 + $0x28] sm:$0xff]
  %v717 = vld [vmem:[#allocation3 + $0x30] sm:$0xff]
  %v718 = vld [vmem:[#allocation3 + $0x38] sm:$0xff]
  %v719 = vld [vmem:[#allocation3 + $0x40] sm:$0xff]
  %v720 = vld [vmem:[#allocation3 + $0x48] sm:$0xff]
  %v721 = vld [vmem:[#allocation3 + $0x50] sm:$0xff]
  %v722 = vld [vmem:[#allocation3 + $0x58] sm:$0xff]
  %v723 = vld [vmem:[%s6] sm:$0x1]
  %v725 = vlaneseq
  %v726 = vshrl.u32 %v725, 7
  %v727 = vsub.s32 0, %v726
  %v728 = vrot.slane %v723, %v727
  %v731 = vsel %vm225, %v713, 0
  %v734 = vsel %vm225, %v716, 0
  %v737 = vsel %vm225, %v719, 0
  %v740 = vsel %vm225, %v722, 0
  %742 = vmatprep.subr.mxu0 0.0
  %743 = vmatpush1.msra.mxu0 %v675
  %744 = vmatprep.subr.mxu0 0.0
  %745 = vmatpush1.msra.mxu0 %v676
  %746 = vmatprep.subr.mxu0 0.0
  %747 = vmatpush1.msra.mxu0 %v677
  %748 = vmatprep.subr.mxu0 0.0
  %749 = vmatpush1.msra.mxu0 %v678
  %750 = vmatprep.subr.mxu0 0.0
  %751 = vmatpush1.msra.mxu0 %v679
  %752 = vmatprep.subr.mxu0 0.0
  %753 = vmatpush1.msra.mxu0 %v680
  %754 = vmatprep.subr.mxu0 0.0
  %755 = vmatpush1.msra.mxu0 %v681
  %756 = vmatprep.subr.mxu0 0.0
  %757 = vmatpush1.msra.mxu0 %v682
  %758 = vmatprep.subr.mxu0 0.0
  %759 = vmatpush1.msra.mxu0 %v683
  %760 = vmatprep.subr.mxu0 0.0
  %761 = vmatpush1.msra.mxu0 %v684
  %762 = vmatprep.subr.mxu0 0.0
  %763 = vmatpush1.msra.mxu0 %v685
  %764 = vmatprep.subr.mxu0 0.0
  %765 = vmatpush1.msra.mxu0 %v686
  %766 = vmatprep.subr.mxu0 0.0
  %767 = vmatpush1.msra.mxu0 %v687
  %768 = vmatprep.subr.mxu0 0.0
  %769 = vmatpush1.msra.mxu0 %v688
  %770 = vmatprep.subr.mxu0 0.0
  %771 = vmatpush1.msra.mxu0 %v689
  %772 = vmatprep.subr.mxu0 0.0
  %773 = vmatpush1.msra.mxu0 %v690
  %774 = vmatprep.subr.mxu0 0.0
  %775 = vmatpush1.msra.mxu0 %v691
  %776 = vmatprep.subr.mxu0 0.0
  %777 = vmatpush1.msra.mxu0 %v692
  %778 = vmatprep.subr.mxu0 0.0
  %779 = vmatpush1.msra.mxu0 %v693
  %780 = vmatprep.subr.mxu0 0.0
  %781 = vmatpush1.msra.mxu0 %v694
  %782 = vmatprep.subr.mxu0 0.0
  %783 = vmatpush1.msra.mxu0 %v695
  %784 = vmatprep.subr.mxu0 0.0
  %785 = vmatpush1.msra.mxu0 %v696
  %786 = vmatprep.subr.mxu0 0.0
  %787 = vmatpush1.msra.mxu0 %v697
  %788 = vmatprep.subr.mxu0 0.0
  %789 = vmatpush1.msra.mxu0 %v698
  %790 = vmatprep.subr.mxu0 0.0
  %791 = vmatpush1.msra.mxu0 %v699
  %792 = vmatprep.subr.mxu0 0.0
  %793 = vmatpush1.msra.mxu0 %v700
  %794 = vmatprep.subr.mxu0 0.0
  %795 = vmatpush1.msra.mxu0 %v701
  %796 = vmatprep.subr.mxu0 0.0
  %797 = vmatpush1.msra.mxu0 %v702
  %798 = vmatprep.subr.mxu0 0.0
  %799 = vmatpush1.msra.mxu0 %v703
  %800 = vmatprep.subr.mxu0 0.0
  %801 = vmatpush1.msra.mxu0 %v704
  %802 = vmatprep.subr.mxu0 0.0
  %803 = vmatpush1.msra.mxu0 %v705
  %804 = vmatprep.subr.mxu0 0.0
  %805 = vmatpush1.msra.mxu0 %v706
  %806 = vmatprep.mubr.f32.mxu0 %v712
  %807 = vmatmul.mubr.f32.gmra.mrb[0].mxu0 %v711
  %v808 = vpop.f32.mrb[0].mxu0
  %v809 = vadd.f32 %v728, %v808
  %v810 = vpop.f32.mrb[0].mxu0
  %811 = vmatprep.mubr.f32.mxu0 %v715
  %812 = vmatmul.mubr.f32.gmra.mrb[0].mxu0 %v714
  %v813 = vpop.f32.mrb[0].mxu0
  %v814 = vadd.f32 %v728, %v813
  %v815 = vpop.f32.mrb[0].mxu0
  %816 = vmatprep.mubr.f32.mxu0 %v718
  %817 = vmatmul.mubr.f32.gmra.mrb[0].mxu0 %v717
  %v818 = vpop.f32.mrb[0].mxu0
  %v819 = vadd.f32 %v728, %v818
  %v820 = vpop.f32.mrb[0].mxu0
  %821 = vmatprep.mubr.f32.mxu0 %v721
  %822 = vmatmul.mubr.f32.gmra.mrb[0].mxu0 %v720
  %v823 = vpop.f32.mrb[0].mxu0
  %v824 = vadd.f32 %v728, %v823
  %v825 = vpop.f32.mrb[0].mxu0
  %826 = vdwg.mxu0
  %827 = vmatprep.subr.mxu0 0.0
  %828 = vmatpush1.msra.mxu0 %v707
  %829 = vmatprep.subr.mxu0 0.0
  %830 = vmatpush1.msra.mxu0 %v708
  %831 = vmatprep.subr.mxu0 0.0
  %832 = vmatpush1.msra.mxu0 %v709
  %833 = vmatprep.subr.mxu0 0.0
  %834 = vmatpush1.msra.mxu0 %v710
  %835 = vmatprep.subr.mxu0 0.0
  %836 = vmatpush1.msra.mxu0 0.0
  %837 = vmatprep.subr.mxu0 0.0
  %838 = vmatpush1.msra.mxu0 0.0
  %839 = vmatprep.subr.mxu0 0.0
  %840 = vmatpush1.msra.mxu0 0.0
  %841 = vmatprep.subr.mxu0 0.0
  %842 = vmatpush1.msra.mxu0 0.0
  %843 = vmatprep.subr.mxu0 0.0
  %844 = vmatpush1.msra.mxu0 0.0
  %845 = vmatprep.subr.mxu0 0.0
  %846 = vmatpush1.msra.mxu0 0.0
  %847 = vmatprep.subr.mxu0 0.0
  %848 = vmatpush1.msra.mxu0 0.0
  %849 = vmatprep.subr.mxu0 0.0
  %850 = vmatpush1.msra.mxu0 0.0
  %851 = vmatprep.subr.mxu0 0.0
  %852 = vmatpush1.msra.mxu0 0.0
  %853 = vmatprep.subr.mxu0 0.0
  %854 = vmatpush1.msra.mxu0 0.0
  %855 = vmatprep.subr.mxu0 0.0
  %856 = vmatpush1.msra.mxu0 0.0
  %857 = vmatprep.subr.mxu0 0.0
  %858 = vmatpush1.msra.mxu0 0.0
  %859 = vmatprep.subr.mxu0 0.0
  %860 = vmatpush1.msra.mxu0 0.0
  %861 = vmatprep.subr.mxu0 0.0
  %862 = vmatpush1.msra.mxu0 0.0
  %863 = vmatprep.subr.mxu0 0.0
  %864 = vmatpush1.msra.mxu0 0.0
  %865 = vmatprep.subr.mxu0 0.0
  %866 = vmatpush1.msra.mxu0 0.0
  %867 = vmatprep.subr.mxu0 0.0
  %868 = vmatpush1.msra.mxu0 0.0
  %869 = vmatprep.subr.mxu0 0.0
  %870 = vmatpush1.msra.mxu0 0.0
  %871 = vmatprep.subr.mxu0 0.0
  %872 = vmatpush1.msra.mxu0 0.0
  %873 = vmatprep.subr.mxu0 0.0
  %874 = vmatpush1.msra.mxu0 0.0
  %875 = vmatprep.subr.mxu0 0.0
  %876 = vmatpush1.msra.mxu0 0.0
  %877 = vmatprep.subr.mxu0 0.0
  %878 = vmatpush1.msra.mxu0 0.0
  %879 = vmatprep.subr.mxu0 0.0
  %880 = vmatpush1.msra.mxu0 0.0
  %881 = vmatprep.subr.mxu0 0.0
  %882 = vmatpush1.msra.mxu0 0.0
  %883 = vmatprep.subr.mxu0 0.0
  %884 = vmatpush1.msra.mxu0 0.0
  %885 = vmatprep.subr.mxu0 0.0
  %886 = vmatpush1.msra.mxu0 0.0
  %887 = vmatprep.subr.mxu0 0.0
  %888 = vmatpush1.msra.mxu0 0.0
  %889 = vmatprep.subr.mxu0 0.0
  %890 = vmatpush1.msra.mxu0 0.0
  %891 = vmatprep.mubr.f32.mxu0 0.0
  %892 = vmatmul.mubr.f32.gmra.mrb[0].mxu0 %v731
  %v893 = vpop.f32.mrb[0].mxu0
  %v894 = vadd.f32 %v809, %v893
  %v895 = vpop.f32.mrb[0].mxu0
  %896 = vmatprep.mubr.f32.mxu0 0.0
  %897 = vmatmul.mubr.f32.gmra.mrb[0].mxu0 %v734
  %v898 = vpop.f32.mrb[0].mxu0
  %v899 = vadd.f32 %v814, %v898
  %v900 = vpop.f32.mrb[0].mxu0
  %901 = vmatprep.mubr.f32.mxu0 0.0
  %902 = vmatmul.mubr.f32.gmra.mrb[0].mxu0 %v737
  %v903 = vpop.f32.mrb[0].mxu0
  %v904 = vadd.f32 %v819, %v903
  %v905 = vpop.f32.mrb[0].mxu0
  %906 = vmatprep.mubr.f32.mxu0 0.0
  %907 = vmatmul.mubr.f32.gmra.mrb[0].mxu0 %v740
  %v908 = vpop.f32.mrb[0].mxu0
  %v909 = vadd.f32 %v824, %v908
  %v910 = vpop.f32.mrb[0].mxu0
  %911 = vdwg.mxu0
  %v912 = vmax.f32 %v894, 0.0
  %v913 = vmax.f32 %v899, 0.0
  %v914 = vmax.f32 %v904, 0.0
  %v915 = vmax.f32 %v909, 0.0
  %vm916 = vcmask 516096
  %917 = vst.msk [vmem:[#allocation4] sm:$0x1] %vm916, %v912
  %v920 = vunpack.c.l.s4 1983009808
  %v921 = vunpack.c.0.s8 %v920
  %v922 = vlaneseq
  %v923 = vshrl.u32 %v922, 7
  %v924 = vsub.s32 %v921, %v923
  %v925 = vrot.slane %v912, %v924
  %v926 = vrot.slane %v925, 7
  %v927 = vrot.slane %v926, 2
  %928 = vrot.lane.b32.xlu0 %v927, 64
  %v929 = vpop.permute.xlu0 %928
  %vm931 = vcmask 1040896
  %932 = vst.msk [vmem:[#allocation4] sm:$0x1] %vm931, %v929
  %v933 = vcombine.high %v925, %v925
  %935 = vst.msk [vmem:[#allocation4 + $0x2] sm:$0x1] %vm916, %v933
  %v936 = vrot.slane %v933, 7
  %v937 = vrot.slane %v936, 2
  %938 = vrot.lane.b32.xlu0 %v937, 64
  %v939 = vpop.permute.xlu0 %938
  %941 = vst.msk [vmem:[#allocation4 + $0x2] sm:$0x1] %vm931, %v939
  %v942 = vcombine.high %v912, %v912
  %v944 = vunpack.c.l.s4 1983009808
  %v945 = vunpack.c.0.s8 %v944
  %v946 = vlaneseq
  %v947 = vshrl.u32 %v946, 7
  %v948 = vsub.s32 %v945, %v947
  %v949 = vrot.slane %v942, %v948
  %951 = vst.msk [vmem:[#allocation4 + $0x4] sm:$0x1] %vm916, %v949
  %v952 = vrot.slane %v949, 7
  %v953 = vrot.slane %v952, 2
  %954 = vrot.lane.b32.xlu0 %v953, 64
  %v955 = vpop.permute.xlu0 %954
  %957 = vst.msk [vmem:[#allocation4 + $0x4] sm:$0x1] %vm931, %v955
  %v958 = vcombine.high %v949, %v949
  %960 = vst.msk [vmem:[#allocation4 + $0x6] sm:$0x1] %vm916, %v958
  %v961 = vrot.slane %v958, 7
  %v962 = vrot.slane %v961, 2
  %963 = vrot.lane.b32.xlu0 %v962, 64
  %v964 = vpop.permute.xlu0 %963
  %966 = vst.msk [vmem:[#allocation4 + $0x6] sm:$0x1] %vm931, %v964
  %967 = vst.msk [vmem:[#allocation4 + $0x8] sm:$0x1] %vm916, %v913
  %v970 = vunpack.c.l.s4 1983009808
  %v971 = vunpack.c.0.s8 %v970
  %v972 = vlaneseq
  %v973 = vshrl.u32 %v972, 7
  %v974 = vsub.s32 %v971, %v973
  %v975 = vrot.slane %v913, %v974
  %v976 = vrot.slane %v975, 7
  %v977 = vrot.slane %v976, 2
  %978 = vrot.lane.b32.xlu0 %v977, 64
  %v979 = vpop.permute.xlu0 %978
  %981 = vst.msk [vmem:[#allocation4 + $0x8] sm:$0x1] %vm931, %v979
  %v982 = vcombine.high %v975, %v975
  %984 = vst.msk [vmem:[#allocation4 + $0xa] sm:$0x1] %vm916, %v982
  %v985 = vrot.slane %v982, 7
  %v986 = vrot.slane %v985, 2
  %987 = vrot.lane.b32.xlu0 %v986, 64
  %v988 = vpop.permute.xlu0 %987
  %990 = vst.msk [vmem:[#allocation4 + $0xa] sm:$0x1] %vm931, %v988
  %v991 = vcombine.high %v913, %v913
  %v993 = vunpack.c.l.s4 1983009808
  %v994 = vunpack.c.0.s8 %v993
  %v995 = vlaneseq
  %v996 = vshrl.u32 %v995, 7
  %v997 = vsub.s32 %v994, %v996
  %v998 = vrot.slane %v991, %v997
  %1000 = vst.msk [vmem:[#allocation4 + $0xc] sm:$0x1] %vm916, %v998
  %v1001 = vrot.slane %v998, 7
  %v1002 = vrot.slane %v1001, 2
  %1003 = vrot.lane.b32.xlu0 %v1002, 64
  %v1004 = vpop.permute.xlu0 %1003
  %1006 = vst.msk [vmem:[#allocation4 + $0xc] sm:$0x1] %vm931, %v1004
  %v1007 = vcombine.high %v998, %v998
  %1009 = vst.msk [vmem:[#allocation4 + $0xe] sm:$0x1] %vm916, %v1007
  %v1010 = vrot.slane %v1007, 7
  %v1011 = vrot.slane %v1010, 2
  %1012 = vrot.lane.b32.xlu0 %v1011, 64
  %v1013 = vpop.permute.xlu0 %1012
  %1015 = vst.msk [vmem:[#allocation4 + $0xe] sm:$0x1] %vm931, %v1013
  %1016 = vst.msk [vmem:[#allocation4 + $0x1] sm:$0x1] %vm916, %v914
  %v1019 = vunpack.c.l.s4 1983009808
  %v1020 = vunpack.c.0.s8 %v1019
  %v1021 = vlaneseq
  %v1022 = vshrl.u32 %v1021, 7
  %v1023 = vsub.s32 %v1020, %v1022
  %v1024 = vrot.slane %v914, %v1023
  %v1025 = vrot.slane %v1024, 7
  %v1026 = vrot.slane %v1025, 2
  %1027 = vrot.lane.b32.xlu0 %v1026, 64
  %v1028 = vpop.permute.xlu0 %1027
  %1030 = vst.msk [vmem:[#allocation4 + $0x1] sm:$0x1] %vm931, %v1028
  %v1031 = vcombine.high %v1024, %v1024
  %1033 = vst.msk [vmem:[#allocation4 + $0x3] sm:$0x1] %vm916, %v1031
  %v1034 = vrot.slane %v1031, 7
  %v1035 = vrot.slane %v1034, 2
  %1036 = vrot.lane.b32.xlu0 %v1035, 64
  %v1037 = vpop.permute.xlu0 %1036
  %1039 = vst.msk [vmem:[#allocation4 + $0x3] sm:$0x1] %vm931, %v1037
  %v1040 = vcombine.high %v914, %v914
  %v1042 = vunpack.c.l.s4 1983009808
  %v1043 = vunpack.c.0.s8 %v1042
  %v1044 = vlaneseq
  %v1045 = vshrl.u32 %v1044, 7
  %v1046 = vsub.s32 %v1043, %v1045
  %v1047 = vrot.slane %v1040, %v1046
  %1049 = vst.msk [vmem:[#allocation4 + $0x5] sm:$0x1] %vm916, %v1047
  %v1050 = vrot.slane %v1047, 7
  %v1051 = vrot.slane %v1050, 2
  %1052 = vrot.lane.b32.xlu0 %v1051, 64
  %v1053 = vpop.permute.xlu0 %1052
  %1055 = vst.msk [vmem:[#allocation4 + $0x5] sm:$0x1] %vm931, %v1053
  %v1056 = vcombine.high %v1047, %v1047
  %1058 = vst.msk [vmem:[#allocation4 + $0x7] sm:$0x1] %vm916, %v1056
  %v1059 = vrot.slane %v1056, 7
  %v1060 = vrot.slane %v1059, 2
  %1061 = vrot.lane.b32.xlu0 %v1060, 64
  %v1062 = vpop.permute.xlu0 %1061
  %1064 = vst.msk [vmem:[#allocation4 + $0x7] sm:$0x1] %vm931, %v1062
  %1065 = vst.msk [vmem:[#allocation4 + $0x9] sm:$0x1] %vm916, %v915
  %v1068 = vunpack.c.l.s4 1983009808
  %v1069 = vunpack.c.0.s8 %v1068
  %v1070 = vlaneseq
  %v1071 = vshrl.u32 %v1070, 7
  %v1072 = vsub.s32 %v1069, %v1071
  %v1073 = vrot.slane %v915, %v1072
  %v1074 = vrot.slane %v1073, 7
  %v1075 = vrot.slane %v1074, 2
  %1076 = vrot.lane.b32.xlu0 %v1075, 64
  %v1077 = vpop.permute.xlu0 %1076
  %1079 = vst.msk [vmem:[#allocation4 + $0x9] sm:$0x1] %vm931, %v1077
  %v1080 = vcombine.high %v1073, %v1073
  %1082 = vst.msk [vmem:[#allocation4 + $0xb] sm:$0x1] %vm916, %v1080
  %v1083 = vrot.slane %v1080, 7
  %v1084 = vrot.slane %v1083, 2
  %1085 = vrot.lane.b32.xlu0 %v1084, 64
  %v1086 = vpop.permute.xlu0 %1085
  %1088 = vst.msk [vmem:[#allocation4 + $0xb] sm:$0x1] %vm931, %v1086
  %v1089 = vcombine.high %v915, %v915
  %v1091 = vunpack.c.l.s4 1983009808
  %v1092 = vunpack.c.0.s8 %v1091
  %v1093 = vlaneseq
  %v1094 = vshrl.u32 %v1093, 7
  %v1095 = vsub.s32 %v1092, %v1094
  %v1096 = vrot.slane %v1089, %v1095
  %1098 = vst.msk [vmem:[#allocation4 + $0xd] sm:$0x1] %vm916, %v1096
  %v1099 = vrot.slane %v1096, 7
  %v1100 = vrot.slane %v1099, 2
  %1101 = vrot.lane.b32.xlu0 %v1100, 64
  %v1102 = vpop.permute.xlu0 %1101
  %1104 = vst.msk [vmem:[#allocation4 + $0xd] sm:$0x1] %vm931, %v1102
  %v1105 = vcombine.high %v1096, %v1096
  %1107 = vst.msk [vmem:[#allocation4 + $0xf] sm:$0x1] %vm916, %v1105
  %v1108 = vrot.slane %v1105, 7
  %v1109 = vrot.slane %v1108, 2
  %1110 = vrot.lane.b32.xlu0 %v1109, 64
  %v1111 = vpop.permute.xlu0 %1110
  %1113 = vst.msk [vmem:[#allocation4 + $0xf] sm:$0x1] %vm931, %v1111
  %v1114 = vld [vmem:[%s7] sm:$0xf]
  %v1115 = vld [vmem:[%s7 + $0x4] sm:$0xf]
  %v1116 = vld [vmem:[%s7 + $0x8] sm:$0xf]
  %v1117 = vld [vmem:[%s7 + $0xc] sm:$0xf]
  %v1118 = vld [vmem:[%s7 + $0x10] sm:$0xf]
  %v1119 = vld [vmem:[%s7 + $0x14] sm:$0xf]
  %v1120 = vld [vmem:[%s7 + $0x18] sm:$0xf]
  %v1121 = vld [vmem:[%s7 + $0x1c] sm:$0xf]
  %v1122 = vld [vmem:[%s7 + $0x20] sm:$0xf]
  %v1123 = vld [vmem:[%s7 + $0x24] sm:$0xf]
  %v1124 = vld [vmem:[%s7 + $0x28] sm:$0xf]
  %v1125 = vld [vmem:[%s7 + $0x2c] sm:$0xf]
  %v1126 = vld [vmem:[%s7 + $0x30] sm:$0xf]
  %v1127 = vld [vmem:[%s7 + $0x34] sm:$0xf]
  %v1128 = vld [vmem:[%s7 + $0x38] sm:$0xf]
  %v1129 = vld [vmem:[%s7 + $0x3c] sm:$0xf]
  %v1130 = vld [vmem:[%s7 + $0x40] sm:$0xf]
  %v1131 = vld [vmem:[%s7 + $0x44] sm:$0xf]
  %v1132 = vld [vmem:[%s7 + $0x48] sm:$0xf]
  %v1133 = vld [vmem:[%s7 + $0x4c] sm:$0xf]
  %v1134 = vld [vmem:[%s7 + $0x50] sm:$0xf]
  %v1135 = vld [vmem:[%s7 + $0x54] sm:$0xf]
  %v1136 = vld [vmem:[%s7 + $0x58] sm:$0xf]
  %v1137 = vld [vmem:[%s7 + $0x5c] sm:$0xf]
  %v1138 = vld [vmem:[%s7 + $0x60] sm:$0xf]
  %v1139 = vld [vmem:[%s7 + $0x64] sm:$0xf]
  %v1140 = vld [vmem:[%s7 + $0x68] sm:$0xf]
  %v1141 = vld [vmem:[%s7 + $0x6c] sm:$0xf]
  %v1142 = vld [vmem:[%s7 + $0x70] sm:$0xf]
  %v1143 = vld [vmem:[%s7 + $0x74] sm:$0xf]
  %v1144 = vld [vmem:[%s7 + $0x78] sm:$0xf]
  %v1145 = vld [vmem:[%s7 + $0x7c] sm:$0xf]
  %v1146 = vld [vmem:[%s7 + $0x80] sm:$0xf]
  %v1147 = vld [vmem:[%s7 + $0x84] sm:$0xf]
  %v1148 = vld [vmem:[%s7 + $0x88] sm:$0xf]
  %v1149 = vld [vmem:[%s7 + $0x8c] sm:$0xf]
  %v1150 = vld [vmem:[%s7 + $0x90] sm:$0xf]
  %v1151 = vld [vmem:[%s7 + $0x94] sm:$0xf]
  %v1152 = vld [vmem:[%s7 + $0x98] sm:$0xf]
  %v1153 = vld [vmem:[%s7 + $0x9c] sm:$0xf]
  %v1154 = vld [vmem:[%s7 + $0xa0] sm:$0xf]
  %v1155 = vld [vmem:[%s7 + $0xa4] sm:$0xf]
  %v1156 = vld [vmem:[%s7 + $0xa8] sm:$0xf]
  %v1157 = vld [vmem:[%s7 + $0xac] sm:$0xf]
  %v1158 = vld [vmem:[%s7 + $0xb0] sm:$0xf]
  %v1159 = vld [vmem:[%s7 + $0xb4] sm:$0xf]
  %v1160 = vld [vmem:[%s7 + $0xb8] sm:$0xf]
  %v1161 = vld [vmem:[%s7 + $0xbc] sm:$0xf]
  %v1162 = vld [vmem:[%s7 + $0xc0] sm:$0xf]
  %v1163 = vld [vmem:[%s7 + $0xc4] sm:$0xf]
  %v1164 = vld [vmem:[%s7 + $0xc8] sm:$0xf]
  %v1165 = vld [vmem:[%s7 + $0xcc] sm:$0xf]
  %v1166 = vld [vmem:[%s7 + $0xd0] sm:$0xf]
  %v1167 = vld [vmem:[%s7 + $0xd4] sm:$0xf]
  %v1168 = vld [vmem:[%s7 + $0xd8] sm:$0xf]
  %v1169 = vld [vmem:[%s7 + $0xdc] sm:$0xf]
  %v1170 = vld [vmem:[%s7 + $0xe0] sm:$0xf]
  %v1171 = vld [vmem:[%s7 + $0xe4] sm:$0xf]
  %v1172 = vld [vmem:[%s7 + $0xe8] sm:$0xf]
  %v1173 = vld [vmem:[%s7 + $0xec] sm:$0xf]
  %v1174 = vld [vmem:[%s7 + $0xf0] sm:$0xf]
  %v1175 = vld [vmem:[%s7 + $0xf4] sm:$0xf]
  %v1176 = vld [vmem:[%s7 + $0xf8] sm:$0xf]
  %v1177 = vld [vmem:[%s7 + $0xfc] sm:$0xf]
  %v1178 = vld [vmem:[%s7 + $0x100] sm:$0xf]
  %v1179 = vld [vmem:[%s7 + $0x104] sm:$0xf]
  %v1180 = vld [vmem:[%s7 + $0x108] sm:$0xf]
  %v1181 = vld [vmem:[%s7 + $0x10c] sm:$0xf]
  %v1182 = vld [vmem:[%s7 + $0x110] sm:$0xf]
  %v1183 = vld [vmem:[%s7 + $0x114] sm:$0xf]
  %v1184 = vld [vmem:[%s7 + $0x118] sm:$0xf]
  %v1185 = vld [vmem:[%s7 + $0x11c] sm:$0xf]
  %v1186 = vld [vmem:[%s7 + $0x120] sm:$0xf]
  %v1187 = vld [vmem:[%s7 + $0x124] sm:$0xf]
  %v1188 = vld [vmem:[%s7 + $0x128] sm:$0xf]
  %v1189 = vld [vmem:[%s7 + $0x12c] sm:$0xf]
  %v1190 = vld [vmem:[%s7 + $0x130] sm:$0xf]
  %v1191 = vld [vmem:[%s7 + $0x134] sm:$0xf]
  %v1192 = vld [vmem:[%s7 + $0x138] sm:$0xf]
  %v1193 = vld [vmem:[%s7 + $0x13c] sm:$0xf]
  %v1194 = vld [vmem:[%s7 + $0x140] sm:$0xf]
  %v1195 = vld [vmem:[%s7 + $0x144] sm:$0xf]
  %v1196 = vld [vmem:[%s7 + $0x148] sm:$0xf]
  %v1197 = vld [vmem:[%s7 + $0x14c] sm:$0xf]
  %v1198 = vld [vmem:[%s7 + $0x150] sm:$0xf]
  %v1199 = vld [vmem:[%s7 + $0x154] sm:$0xf]
  %v1200 = vld [vmem:[%s7 + $0x158] sm:$0xf]
  %v1201 = vld [vmem:[%s7 + $0x15c] sm:$0xf]
  %v1202 = vld [vmem:[%s7 + $0x160] sm:$0xf]
  %v1203 = vld [vmem:[%s7 + $0x164] sm:$0xf]
  %v1204 = vld [vmem:[%s7 + $0x168] sm:$0xf]
  %v1205 = vld [vmem:[%s7 + $0x16c] sm:$0xf]
  %v1206 = vld [vmem:[%s7 + $0x170] sm:$0xf]
  %v1207 = vld [vmem:[%s7 + $0x174] sm:$0xf]
  %v1208 = vld [vmem:[%s7 + $0x178] sm:$0xf]
  %v1209 = vld [vmem:[%s7 + $0x17c] sm:$0xf]
  %v1210 = vld [vmem:[%s7 + $0x180] sm:$0xf]
  %v1211 = vld [vmem:[%s7 + $0x184] sm:$0xf]
  %v1212 = vld [vmem:[%s7 + $0x188] sm:$0xf]
  %v1213 = vld [vmem:[%s7 + $0x18c] sm:$0xf]
  %v1214 = vld [vmem:[%s7 + $0x190] sm:$0xf]
  %v1215 = vld [vmem:[%s7 + $0x194] sm:$0xf]
  %v1216 = vld [vmem:[%s7 + $0x198] sm:$0xf]
  %v1217 = vld [vmem:[%s7 + $0x19c] sm:$0xf]
  %v1218 = vld [vmem:[%s7 + $0x1a0] sm:$0xf]
  %v1219 = vld [vmem:[%s7 + $0x1a4] sm:$0xf]
  %v1220 = vld [vmem:[%s7 + $0x1a8] sm:$0xf]
  %v1221 = vld [vmem:[%s7 + $0x1ac] sm:$0xf]
  %v1222 = vld [vmem:[%s7 + $0x1b0] sm:$0xf]
  %v1223 = vld [vmem:[%s7 + $0x1b4] sm:$0xf]
  %v1224 = vld [vmem:[%s7 + $0x1b8] sm:$0xf]
  %v1225 = vld [vmem:[%s7 + $0x1bc] sm:$0xf]
  %v1226 = vld [vmem:[%s7 + $0x1c0] sm:$0xf]
  %v1227 = vld [vmem:[%s7 + $0x1c4] sm:$0xf]
  %v1228 = vld [vmem:[%s7 + $0x1c8] sm:$0xf]
  %v1229 = vld [vmem:[%s7 + $0x1cc] sm:$0xf]
  %v1230 = vld [vmem:[%s7 + $0x1d0] sm:$0xf]
  %v1231 = vld [vmem:[%s7 + $0x1d4] sm:$0xf]
  %v1232 = vld [vmem:[%s7 + $0x1d8] sm:$0xf]
  %v1233 = vld [vmem:[%s7 + $0x1dc] sm:$0xf]
  %v1234 = vld [vmem:[%s7 + $0x1e0] sm:$0xf]
  %v1235 = vld [vmem:[%s7 + $0x1e4] sm:$0xf]
  %v1236 = vld [vmem:[%s7 + $0x1e8] sm:$0xf]
  %v1237 = vld [vmem:[%s7 + $0x1ec] sm:$0xf]
  %v1238 = vld [vmem:[%s7 + $0x1f0] sm:$0xf]
  %v1239 = vld [vmem:[%s7 + $0x1f4] sm:$0xf]
  %v1240 = vld [vmem:[%s7 + $0x1f8] sm:$0xf]
  %v1241 = vld [vmem:[%s7 + $0x1fc] sm:$0xf]
  %v1242 = vunpack.c.l.bf16 %v1114
  %v1243 = vunpack.c.l.bf16 %v1115
  %v1244 = vunpack.c.l.bf16 %v1116
  %v1245 = vunpack.c.l.bf16 %v1117
  %v1246 = vunpack.c.l.bf16 %v1118
  %v1247 = vunpack.c.l.bf16 %v1119
  %v1248 = vunpack.c.l.bf16 %v1120
  %v1249 = vunpack.c.l.bf16 %v1121
  %v1250 = vunpack.c.l.bf16 %v1122
  %v1251 = vunpack.c.l.bf16 %v1123
  %v1252 = vunpack.c.l.bf16 %v1124
  %v1253 = vunpack.c.l.bf16 %v1125
  %v1254 = vunpack.c.l.bf16 %v1126
  %v1255 = vunpack.c.l.bf16 %v1127
  %v1256 = vunpack.c.l.bf16 %v1128
  %v1257 = vunpack.c.l.bf16 %v1129
  %v1258 = vunpack.c.l.bf16 %v1130
  %v1259 = vunpack.c.l.bf16 %v1131
  %v1260 = vunpack.c.l.bf16 %v1132
  %v1261 = vunpack.c.l.bf16 %v1133
  %v1262 = vunpack.c.l.bf16 %v1134
  %v1263 = vunpack.c.l.bf16 %v1135
  %v1264 = vunpack.c.l.bf16 %v1136
  %v1265 = vunpack.c.l.bf16 %v1137
  %v1266 = vunpack.c.l.bf16 %v1138
  %v1267 = vunpack.c.l.bf16 %v1139
  %v1268 = vunpack.c.l.bf16 %v1140
  %v1269 = vunpack.c.l.bf16 %v1141
  %v1270 = vunpack.c.l.bf16 %v1142
  %v1271 = vunpack.c.l.bf16 %v1143
  %v1272 = vunpack.c.l.bf16 %v1144
  %v1273 = vunpack.c.l.bf16 %v1145
  %v1274 = vunpack.c.l.bf16 %v1146
  %v1275 = vunpack.c.l.bf16 %v1147
  %v1276 = vunpack.c.l.bf16 %v1148
  %v1277 = vunpack.c.l.bf16 %v1149
  %v1278 = vunpack.c.l.bf16 %v1150
  %v1279 = vunpack.c.l.bf16 %v1151
  %v1280 = vunpack.c.l.bf16 %v1152
  %v1281 = vunpack.c.l.bf16 %v1153
  %v1282 = vunpack.c.l.bf16 %v1154
  %v1283 = vunpack.c.l.bf16 %v1155
  %v1284 = vunpack.c.l.bf16 %v1156
  %v1285 = vunpack.c.l.bf16 %v1157
  %v1286 = vunpack.c.l.bf16 %v1158
  %v1287 = vunpack.c.l.bf16 %v1159
  %v1288 = vunpack.c.l.bf16 %v1160
  %v1289 = vunpack.c.l.bf16 %v1161
  %v1290 = vunpack.c.l.bf16 %v1162
  %v1291 = vunpack.c.l.bf16 %v1163
  %v1292 = vunpack.c.l.bf16 %v1164
  %v1293 = vunpack.c.l.bf16 %v1165
  %v1294 = vunpack.c.l.bf16 %v1166
  %v1295 = vunpack.c.l.bf16 %v1167
  %v1296 = vunpack.c.l.bf16 %v1168
  %v1297 = vunpack.c.l.bf16 %v1169
  %v1298 = vunpack.c.l.bf16 %v1170
  %v1299 = vunpack.c.l.bf16 %v1171
  %v1300 = vunpack.c.l.bf16 %v1172
  %v1301 = vunpack.c.l.bf16 %v1173
  %v1302 = vunpack.c.l.bf16 %v1174
  %v1303 = vunpack.c.l.bf16 %v1175
  %v1304 = vunpack.c.l.bf16 %v1176
  %v1305 = vunpack.c.l.bf16 %v1177
  %v1306 = vunpack.c.l.bf16 %v1178
  %v1307 = vunpack.c.l.bf16 %v1179
  %v1308 = vunpack.c.l.bf16 %v1180
  %v1309 = vunpack.c.l.bf16 %v1181
  %v1310 = vunpack.c.l.bf16 %v1182
  %v1311 = vunpack.c.l.bf16 %v1183
  %v1312 = vunpack.c.l.bf16 %v1184
  %v1313 = vunpack.c.l.bf16 %v1185
  %v1314 = vunpack.c.l.bf16 %v1186
  %v1315 = vunpack.c.l.bf16 %v1187
  %v1316 = vunpack.c.l.bf16 %v1188
  %v1317 = vunpack.c.l.bf16 %v1189
  %v1318 = vunpack.c.l.bf16 %v1190
  %v1319 = vunpack.c.l.bf16 %v1191
  %v1320 = vunpack.c.l.bf16 %v1192
  %v1321 = vunpack.c.l.bf16 %v1193
  %v1322 = vunpack.c.l.bf16 %v1194
  %v1323 = vunpack.c.l.bf16 %v1195
  %v1324 = vunpack.c.l.bf16 %v1196
  %v1325 = vunpack.c.l.bf16 %v1197
  %v1326 = vunpack.c.l.bf16 %v1198
  %v1327 = vunpack.c.l.bf16 %v1199
  %v1328 = vunpack.c.l.bf16 %v1200
  %v1329 = vunpack.c.l.bf16 %v1201
  %v1330 = vunpack.c.l.bf16 %v1202
  %v1331 = vunpack.c.l.bf16 %v1203
  %v1332 = vunpack.c.l.bf16 %v1204
  %v1333 = vunpack.c.l.bf16 %v1205
  %v1334 = vunpack.c.l.bf16 %v1206
  %v1335 = vunpack.c.l.bf16 %v1207
  %v1336 = vunpack.c.l.bf16 %v1208
  %v1337 = vunpack.c.l.bf16 %v1209
  %v1338 = vunpack.c.l.bf16 %v1210
  %v1339 = vunpack.c.l.bf16 %v1211
  %v1340 = vunpack.c.l.bf16 %v1212
  %v1341 = vunpack.c.l.bf16 %v1213
  %v1342 = vunpack.c.l.bf16 %v1214
  %v1343 = vunpack.c.l.bf16 %v1215
  %v1344 = vunpack.c.l.bf16 %v1216
  %v1345 = vunpack.c.l.bf16 %v1217
  %v1346 = vunpack.c.l.bf16 %v1218
  %v1347 = vunpack.c.l.bf16 %v1219
  %v1348 = vunpack.c.l.bf16 %v1220
  %v1349 = vunpack.c.l.bf16 %v1221
  %v1350 = vunpack.c.l.bf16 %v1222
  %v1351 = vunpack.c.l.bf16 %v1223
  %v1352 = vunpack.c.l.bf16 %v1224
  %v1353 = vunpack.c.l.bf16 %v1225
  %v1354 = vunpack.c.l.bf16 %v1226
  %v1355 = vunpack.c.l.bf16 %v1227
  %v1356 = vunpack.c.l.bf16 %v1228
  %v1357 = vunpack.c.l.bf16 %v1229
  %v1358 = vunpack.c.l.bf16 %v1230
  %v1359 = vunpack.c.l.bf16 %v1231
  %v1360 = vunpack.c.l.bf16 %v1232
  %v1361 = vunpack.c.l.bf16 %v1233
  %v1362 = vunpack.c.l.bf16 %v1234
  %v1363 = vunpack.c.l.bf16 %v1235
  %v1364 = vunpack.c.l.bf16 %v1236
  %v1365 = vunpack.c.l.bf16 %v1237
  %v1366 = vunpack.c.l.bf16 %v1238
  %v1367 = vunpack.c.l.bf16 %v1239
  %v1368 = vunpack.c.l.bf16 %v1240
  %v1369 = vunpack.c.l.bf16 %v1241
  %v1370 = vld [vmem:[#allocation4] sm:$0xff]
  %v1371 = vld [vmem:[#allocation4 + $0x8] sm:$0xff]
  %v1372 = vld [vmem:[%s8] sm:$0x1]
  %v1374 = vlaneseq
  %v1375 = vshrl.u32 %v1374, 7
  %v1376 = vsub.s32 0, %v1375
  %v1377 = vrot.slane %v1372, %v1376
  %v1381 = vcombine.high %v1370, %v1370
  %v1383 = vunpack.c.l.s4 1983009808
  %v1384 = vunpack.c.0.s8 %v1383
  %v1385 = vlaneseq
  %v1386 = vshrl.u32 %v1385, 7
  %v1387 = vsub.s32 %v1384, %v1386
  %v1388 = vrot.slane %v1370, %v1387
  %v1390 = vunpack.c.l.s4 1983009808
  %v1391 = vunpack.c.0.s8 %v1390
  %v1392 = vlaneseq
  %v1393 = vshrl.u32 %v1392, 7
  %v1394 = vsub.s32 %v1391, %v1393
  %v1395 = vrot.slane %v1381, %v1394
  %v1396 = vcombine.high %v1388, %v1388
  %v1397 = vcombine.high %v1395, %v1395
  %v1398 = vcombine.high %v1371, %v1371
  %v1400 = vunpack.c.l.s4 1983009808
  %v1401 = vunpack.c.0.s8 %v1400
  %v1402 = vlaneseq
  %v1403 = vshrl.u32 %v1402, 7
  %v1404 = vsub.s32 %v1401, %v1403
  %v1405 = vrot.slane %v1371, %v1404
  %v1407 = vunpack.c.l.s4 1983009808
  %v1408 = vunpack.c.0.s8 %v1407
  %v1409 = vlaneseq
  %v1410 = vshrl.u32 %v1409, 7
  %v1411 = vsub.s32 %v1408, %v1410
  %v1412 = vrot.slane %v1398, %v1411
  %v1413 = vcombine.high %v1405, %v1405
  %v1414 = vcombine.high %v1412, %v1412
  %1423 = vmatprep.subr.mxu0 0.0
  %1424 = vmatpush1.msra.mxu0 %v1242
  %1425 = vmatprep.subr.mxu0 0.0
  %1426 = vmatpush1.msra.mxu0 %v1243
  %1427 = vmatprep.subr.mxu0 0.0
  %1428 = vmatpush1.msra.mxu0 %v1244
  %1429 = vmatprep.subr.mxu0 0.0
  %1430 = vmatpush1.msra.mxu0 %v1245
  %1431 = vmatprep.subr.mxu0 0.0
  %1432 = vmatpush1.msra.mxu0 %v1246
  %1433 = vmatprep.subr.mxu0 0.0
  %1434 = vmatpush1.msra.mxu0 %v1247
  %1435 = vmatprep.subr.mxu0 0.0
  %1436 = vmatpush1.msra.mxu0 %v1248
  %1437 = vmatprep.subr.mxu0 0.0
  %1438 = vmatpush1.msra.mxu0 %v1249
  %1439 = vmatprep.subr.mxu0 0.0
  %1440 = vmatpush1.msra.mxu0 %v1250
  %1441 = vmatprep.subr.mxu0 0.0
  %1442 = vmatpush1.msra.mxu0 %v1251
  %1443 = vmatprep.subr.mxu0 0.0
  %1444 = vmatpush1.msra.mxu0 %v1252
  %1445 = vmatprep.subr.mxu0 0.0
  %1446 = vmatpush1.msra.mxu0 %v1253
  %1447 = vmatprep.subr.mxu0 0.0
  %1448 = vmatpush1.msra.mxu0 %v1254
  %1449 = vmatprep.subr.mxu0 0.0
  %1450 = vmatpush1.msra.mxu0 %v1255
  %1451 = vmatprep.subr.mxu0 0.0
  %1452 = vmatpush1.msra.mxu0 %v1256
  %1453 = vmatprep.subr.mxu0 0.0
  %1454 = vmatpush1.msra.mxu0 %v1257
  %1455 = vmatprep.subr.mxu0 0.0
  %1456 = vmatpush1.msra.mxu0 %v1258
  %1457 = vmatprep.subr.mxu0 0.0
  %1458 = vmatpush1.msra.mxu0 %v1259
  %1459 = vmatprep.subr.mxu0 0.0
  %1460 = vmatpush1.msra.mxu0 %v1260
  %1461 = vmatprep.subr.mxu0 0.0
  %1462 = vmatpush1.msra.mxu0 %v1261
  %1463 = vmatprep.subr.mxu0 0.0
  %1464 = vmatpush1.msra.mxu0 %v1262
  %1465 = vmatprep.subr.mxu0 0.0
  %1466 = vmatpush1.msra.mxu0 %v1263
  %1467 = vmatprep.subr.mxu0 0.0
  %1468 = vmatpush1.msra.mxu0 %v1264
  %1469 = vmatprep.subr.mxu0 0.0
  %1470 = vmatpush1.msra.mxu0 %v1265
  %1471 = vmatprep.subr.mxu0 0.0
  %1472 = vmatpush1.msra.mxu0 %v1266
  %1473 = vmatprep.subr.mxu0 0.0
  %1474 = vmatpush1.msra.mxu0 %v1267
  %1475 = vmatprep.subr.mxu0 0.0
  %1476 = vmatpush1.msra.mxu0 %v1268
  %1477 = vmatprep.subr.mxu0 0.0
  %1478 = vmatpush1.msra.mxu0 %v1269
  %1479 = vmatprep.subr.mxu0 0.0
  %1480 = vmatpush1.msra.mxu0 %v1270
  %1481 = vmatprep.subr.mxu0 0.0
  %1482 = vmatpush1.msra.mxu0 %v1271
  %1483 = vmatprep.subr.mxu0 0.0
  %1484 = vmatpush1.msra.mxu0 %v1272
  %1485 = vmatprep.subr.mxu0 0.0
  %1486 = vmatpush1.msra.mxu0 %v1273
  %1487 = vmatprep.mubr.f32.mxu0 %v1396
  %1488 = vmatmul.mubr.f32.gmra.mrb[0].mxu0 %v1388
  %v1489 = vpop.f32.mrb[0].mxu0
  %v1490 = vadd.f32 %v1377, %v1489
  %v1491 = vpop.f32.mrb[0].mxu0
  %1492 = vdwg.mxu0
  %1493 = vmatprep.subr.mxu0 0.0
  %1494 = vmatpush1.msra.mxu0 %v1274
  %1495 = vmatprep.subr.mxu0 0.0
  %1496 = vmatpush1.msra.mxu0 %v1275
  %1497 = vmatprep.subr.mxu0 0.0
  %1498 = vmatpush1.msra.mxu0 %v1276
  %1499 = vmatprep.subr.mxu0 0.0
  %1500 = vmatpush1.msra.mxu0 %v1277
  %1501 = vmatprep.subr.mxu0 0.0
  %1502 = vmatpush1.msra.mxu0 %v1278
  %1503 = vmatprep.subr.mxu0 0.0
  %1504 = vmatpush1.msra.mxu0 %v1279
  %1505 = vmatprep.subr.mxu0 0.0
  %1506 = vmatpush1.msra.mxu0 %v1280
  %1507 = vmatprep.subr.mxu0 0.0
  %1508 = vmatpush1.msra.mxu0 %v1281
  %1509 = vmatprep.subr.mxu0 0.0
  %1510 = vmatpush1.msra.mxu0 %v1282
  %1511 = vmatprep.subr.mxu0 0.0
  %1512 = vmatpush1.msra.mxu0 %v1283
  %1513 = vmatprep.subr.mxu0 0.0
  %1514 = vmatpush1.msra.mxu0 %v1284
  %1515 = vmatprep.subr.mxu0 0.0
  %1516 = vmatpush1.msra.mxu0 %v1285
  %1517 = vmatprep.subr.mxu0 0.0
  %1518 = vmatpush1.msra.mxu0 %v1286
  %1519 = vmatprep.subr.mxu0 0.0
  %1520 = vmatpush1.msra.mxu0 %v1287
  %1521 = vmatprep.subr.mxu0 0.0
  %1522 = vmatpush1.msra.mxu0 %v1288
  %1523 = vmatprep.subr.mxu0 0.0
  %1524 = vmatpush1.msra.mxu0 %v1289
  %1525 = vmatprep.subr.mxu0 0.0
  %1526 = vmatpush1.msra.mxu0 %v1290
  %1527 = vmatprep.subr.mxu0 0.0
  %1528 = vmatpush1.msra.mxu0 %v1291
  %1529 = vmatprep.subr.mxu0 0.0
  %1530 = vmatpush1.msra.mxu0 %v1292
  %1531 = vmatprep.subr.mxu0 0.0
  %1532 = vmatpush1.msra.mxu0 %v1293
  %1533 = vmatprep.subr.mxu0 0.0
  %1534 = vmatpush1.msra.mxu0 %v1294
  %1535 = vmatprep.subr.mxu0 0.0
  %1536 = vmatpush1.msra.mxu0 %v1295
  %1537 = vmatprep.subr.mxu0 0.0
  %1538 = vmatpush1.msra.mxu0 %v1296
  %1539 = vmatprep.subr.mxu0 0.0
  %1540 = vmatpush1.msra.mxu0 %v1297
  %1541 = vmatprep.subr.mxu0 0.0
  %1542 = vmatpush1.msra.mxu0 %v1298
  %1543 = vmatprep.subr.mxu0 0.0
  %1544 = vmatpush1.msra.mxu0 %v1299
  %1545 = vmatprep.subr.mxu0 0.0
  %1546 = vmatpush1.msra.mxu0 %v1300
  %1547 = vmatprep.subr.mxu0 0.0
  %1548 = vmatpush1.msra.mxu0 %v1301
  %1549 = vmatprep.subr.mxu0 0.0
  %1550 = vmatpush1.msra.mxu0 %v1302
  %1551 = vmatprep.subr.mxu0 0.0
  %1552 = vmatpush1.msra.mxu0 %v1303
  %1553 = vmatprep.subr.mxu0 0.0
  %1554 = vmatpush1.msra.mxu0 %v1304
  %1555 = vmatprep.subr.mxu0 0.0
  %1556 = vmatpush1.msra.mxu0 %v1305
  %1557 = vmatprep.mubr.f32.mxu0 %v1397
  %1558 = vmatmul.mubr.f32.gmra.mrb[0].mxu0 %v1395
  %v1559 = vpop.f32.mrb[0].mxu0
  %v1560 = vadd.f32 %v1490, %v1559
  %v1561 = vpop.f32.mrb[0].mxu0
  %1562 = vdwg.mxu0
  %1563 = vmatprep.subr.mxu0 0.0
  %1564 = vmatpush1.msra.mxu0 %v1306
  %1565 = vmatprep.subr.mxu0 0.0
  %1566 = vmatpush1.msra.mxu0 %v1307
  %1567 = vmatprep.subr.mxu0 0.0
  %1568 = vmatpush1.msra.mxu0 %v1308
  %1569 = vmatprep.subr.mxu0 0.0
  %1570 = vmatpush1.msra.mxu0 %v1309
  %1571 = vmatprep.subr.mxu0 0.0
  %1572 = vmatpush1.msra.mxu0 %v1310
  %1573 = vmatprep.subr.mxu0 0.0
  %1574 = vmatpush1.msra.mxu0 %v1311
  %1575 = vmatprep.subr.mxu0 0.0
  %1576 = vmatpush1.msra.mxu0 %v1312
  %1577 = vmatprep.subr.mxu0 0.0
  %1578 = vmatpush1.msra.mxu0 %v1313
  %1579 = vmatprep.subr.mxu0 0.0
  %1580 = vmatpush1.msra.mxu0 %v1314
  %1581 = vmatprep.subr.mxu0 0.0
  %1582 = vmatpush1.msra.mxu0 %v1315
  %1583 = vmatprep.subr.mxu0 0.0
  %1584 = vmatpush1.msra.mxu0 %v1316
  %1585 = vmatprep.subr.mxu0 0.0
  %1586 = vmatpush1.msra.mxu0 %v1317
  %1587 = vmatprep.subr.mxu0 0.0
  %1588 = vmatpush1.msra.mxu0 %v1318
  %1589 = vmatprep.subr.mxu0 0.0
  %1590 = vmatpush1.msra.mxu0 %v1319
  %1591 = vmatprep.subr.mxu0 0.0
  %1592 = vmatpush1.msra.mxu0 %v1320
  %1593 = vmatprep.subr.mxu0 0.0
  %1594 = vmatpush1.msra.mxu0 %v1321
  %1595 = vmatprep.subr.mxu0 0.0
  %1596 = vmatpush1.msra.mxu0 %v1322
  %1597 = vmatprep.subr.mxu0 0.0
  %1598 = vmatpush1.msra.mxu0 %v1323
  %1599 = vmatprep.subr.mxu0 0.0
  %1600 = vmatpush1.msra.mxu0 %v1324
  %1601 = vmatprep.subr.mxu0 0.0
  %1602 = vmatpush1.msra.mxu0 %v1325
  %1603 = vmatprep.subr.mxu0 0.0
  %1604 = vmatpush1.msra.mxu0 %v1326
  %1605 = vmatprep.subr.mxu0 0.0
  %1606 = vmatpush1.msra.mxu0 %v1327
  %1607 = vmatprep.subr.mxu0 0.0
  %1608 = vmatpush1.msra.mxu0 %v1328
  %1609 = vmatprep.subr.mxu0 0.0
  %1610 = vmatpush1.msra.mxu0 %v1329
  %1611 = vmatprep.subr.mxu0 0.0
  %1612 = vmatpush1.msra.mxu0 %v1330
  %1613 = vmatprep.subr.mxu0 0.0
  %1614 = vmatpush1.msra.mxu0 %v1331
  %1615 = vmatprep.subr.mxu0 0.0
  %1616 = vmatpush1.msra.mxu0 %v1332
  %1617 = vmatprep.subr.mxu0 0.0
  %1618 = vmatpush1.msra.mxu0 %v1333
  %1619 = vmatprep.subr.mxu0 0.0
  %1620 = vmatpush1.msra.mxu0 %v1334
  %1621 = vmatprep.subr.mxu0 0.0
  %1622 = vmatpush1.msra.mxu0 %v1335
  %1623 = vmatprep.subr.mxu0 0.0
  %1624 = vmatpush1.msra.mxu0 %v1336
  %1625 = vmatprep.subr.mxu0 0.0
  %1626 = vmatpush1.msra.mxu0 %v1337
  %1627 = vmatprep.mubr.f32.mxu0 %v1413
  %1628 = vmatmul.mubr.f32.gmra.mrb[0].mxu0 %v1405
  %v1629 = vpop.f32.mrb[0].mxu0
  %v1630 = vadd.f32 %v1560, %v1629
  %v1631 = vpop.f32.mrb[0].mxu0
  %1632 = vdwg.mxu0
  %1633 = vmatprep.subr.mxu0 0.0
  %1634 = vmatpush1.msra.mxu0 %v1338
  %1635 = vmatprep.subr.mxu0 0.0
  %1636 = vmatpush1.msra.mxu0 %v1339
  %1637 = vmatprep.subr.mxu0 0.0
  %1638 = vmatpush1.msra.mxu0 %v1340
  %1639 = vmatprep.subr.mxu0 0.0
  %1640 = vmatpush1.msra.mxu0 %v1341
  %1641 = vmatprep.subr.mxu0 0.0
  %1642 = vmatpush1.msra.mxu0 %v1342
  %1643 = vmatprep.subr.mxu0 0.0
  %1644 = vmatpush1.msra.mxu0 %v1343
  %1645 = vmatprep.subr.mxu0 0.0
  %1646 = vmatpush1.msra.mxu0 %v1344
  %1647 = vmatprep.subr.mxu0 0.0
  %1648 = vmatpush1.msra.mxu0 %v1345
  %1649 = vmatprep.subr.mxu0 0.0
  %1650 = vmatpush1.msra.mxu0 %v1346
  %1651 = vmatprep.subr.mxu0 0.0
  %1652 = vmatpush1.msra.mxu0 %v1347
  %1653 = vmatprep.subr.mxu0 0.0
  %1654 = vmatpush1.msra.mxu0 %v1348
  %1655 = vmatprep.subr.mxu0 0.0
  %1656 = vmatpush1.msra.mxu0 %v1349
  %1657 = vmatprep.subr.mxu0 0.0
  %1658 = vmatpush1.msra.mxu0 %v1350
  %1659 = vmatprep.subr.mxu0 0.0
  %1660 = vmatpush1.msra.mxu0 %v1351
  %1661 = vmatprep.subr.mxu0 0.0
  %1662 = vmatpush1.msra.mxu0 %v1352
  %1663 = vmatprep.subr.mxu0 0.0
  %1664 = vmatpush1.msra.mxu0 %v1353
  %1665 = vmatprep.subr.mxu0 0.0
  %1666 = vmatpush1.msra.mxu0 %v1354
  %1667 = vmatprep.subr.mxu0 0.0
  %1668 = vmatpush1.msra.mxu0 %v1355
  %1669 = vmatprep.subr.mxu0 0.0
  %1670 = vmatpush1.msra.mxu0 %v1356
  %1671 = vmatprep.subr.mxu0 0.0
  %1672 = vmatpush1.msra.mxu0 %v1357
  %1673 = vmatprep.subr.mxu0 0.0
  %1674 = vmatpush1.msra.mxu0 %v1358
  %1675 = vmatprep.subr.mxu0 0.0
  %1676 = vmatpush1.msra.mxu0 %v1359
  %1677 = vmatprep.subr.mxu0 0.0
  %1678 = vmatpush1.msra.mxu0 %v1360
  %1679 = vmatprep.subr.mxu0 0.0
  %1680 = vmatpush1.msra.mxu0 %v1361
  %1681 = vmatprep.subr.mxu0 0.0
  %1682 = vmatpush1.msra.mxu0 %v1362
  %1683 = vmatprep.subr.mxu0 0.0
  %1684 = vmatpush1.msra.mxu0 %v1363
  %1685 = vmatprep.subr.mxu0 0.0
  %1686 = vmatpush1.msra.mxu0 %v1364
  %1687 = vmatprep.subr.mxu0 0.0
  %1688 = vmatpush1.msra.mxu0 %v1365
  %1689 = vmatprep.subr.mxu0 0.0
  %1690 = vmatpush1.msra.mxu0 %v1366
  %1691 = vmatprep.subr.mxu0 0.0
  %1692 = vmatpush1.msra.mxu0 %v1367
  %1693 = vmatprep.subr.mxu0 0.0
  %1694 = vmatpush1.msra.mxu0 %v1368
  %1695 = vmatprep.subr.mxu0 0.0
  %1696 = vmatpush1.msra.mxu0 %v1369
  %1697 = vmatprep.mubr.f32.mxu0 %v1414
  %1698 = vmatmul.mubr.f32.gmra.mrb[0].mxu0 %v1412
  %v1699 = vpop.f32.mrb[0].mxu0
  %v1700 = vadd.f32 %v1630, %v1699
  %v1701 = vpop.f32.mrb[0].mxu0
  %1702 = vdwg.mxu0
  %v1703 = vld [vmem:[%s1] sm:$0x3]
  %v1704 = vld [vmem:[%s9] sm:$0xff]
  %v1705 = vld [vmem:[%s9 + $0x8] sm:$0xff]
  %v1706 = vld [vmem:[%s2] sm:$0x3]
  %v1707 = vld [vmem:[%s10] sm:$0xff]
  %v1708 = vld [vmem:[%s10 + $0x8] sm:$0xff]
  %vm1709 = vcmask 130048
  %v1711 = vsel %vm1709, %v1706, 0
  %1713 = vmatprep.subr.mxu0 0.0
  %1714 = vmatpush1.msra.mxu0 %v1707
  %1715 = vmatprep.subr.mxu0 0.0
  %1716 = vmatpush1.msra.mxu0 %v1708
  %1717 = vmatprep.subr.mxu0 0.0
  %1718 = vmatpush1.msra.mxu0 0.0
  %1719 = vmatprep.subr.mxu0 0.0
  %1720 = vmatpush1.msra.mxu0 0.0
  %1721 = vmatprep.subr.mxu0 0.0
  %1722 = vmatpush1.msra.mxu0 0.0
  %1723 = vmatprep.subr.mxu0 0.0
  %1724 = vmatpush1.msra.mxu0 0.0
  %1725 = vmatprep.subr.mxu0 0.0
  %1726 = vmatpush1.msra.mxu0 0.0
  %1727 = vmatprep.subr.mxu0 0.0
  %1728 = vmatpush1.msra.mxu0 0.0
  %1729 = vmatprep.subr.mxu0 0.0
  %1730 = vmatpush1.msra.mxu0 0.0
  %1731 = vmatprep.subr.mxu0 0.0
  %1732 = vmatpush1.msra.mxu0 0.0
  %1733 = vmatprep.subr.mxu0 0.0
  %1734 = vmatpush1.msra.mxu0 0.0
  %1735 = vmatprep.subr.mxu0 0.0
  %1736 = vmatpush1.msra.mxu0 0.0
  %1737 = vmatprep.subr.mxu0 0.0
  %1738 = vmatpush1.msra.mxu0 0.0
  %1739 = vmatprep.subr.mxu0 0.0
  %1740 = vmatpush1.msra.mxu0 0.0
  %1741 = vmatprep.subr.mxu0 0.0
  %1742 = vmatpush1.msra.mxu0 0.0
  %1743 = vmatprep.subr.mxu0 0.0
  %1744 = vmatpush1.msra.mxu0 0.0
  %1745 = vmatprep.subr.mxu0 0.0
  %1746 = vmatpush1.msra.mxu0 0.0
  %1747 = vmatprep.subr.mxu0 0.0
  %1748 = vmatpush1.msra.mxu0 0.0
  %1749 = vmatprep.subr.mxu0 0.0
  %1750 = vmatpush1.msra.mxu0 0.0
  %1751 = vmatprep.subr.mxu0 0.0
  %1752 = vmatpush1.msra.mxu0 0.0
  %1753 = vmatprep.subr.mxu0 0.0
  %1754 = vmatpush1.msra.mxu0 0.0
  %1755 = vmatprep.subr.mxu0 0.0
  %1756 = vmatpush1.msra.mxu0 0.0
  %1757 = vmatprep.subr.mxu0 0.0
  %1758 = vmatpush1.msra.mxu0 0.0
  %1759 = vmatprep.subr.mxu0 0.0
  %1760 = vmatpush1.msra.mxu0 0.0
  %1761 = vmatprep.subr.mxu0 0.0
  %1762 = vmatpush1.msra.mxu0 0.0
  %1763 = vmatprep.subr.mxu0 0.0
  %1764 = vmatpush1.msra.mxu0 0.0
  %1765 = vmatprep.subr.mxu0 0.0
  %1766 = vmatpush1.msra.mxu0 0.0
  %1767 = vmatprep.subr.mxu0 0.0
  %1768 = vmatpush1.msra.mxu0 0.0
  %1769 = vmatprep.subr.mxu0 0.0
  %1770 = vmatpush1.msra.mxu0 0.0
  %1771 = vmatprep.subr.mxu0 0.0
  %1772 = vmatpush1.msra.mxu0 0.0
  %1773 = vmatprep.subr.mxu0 0.0
  %1774 = vmatpush1.msra.mxu0 0.0
  %1775 = vmatprep.subr.mxu0 0.0
  %1776 = vmatpush1.msra.mxu0 0.0
  %1777 = vmatprep.mubr.f32.mxu0 0.0
  %1778 = vmatmul.mubr.f32.gmra.mrb[0].mxu0 %v1711
  %v1779 = vpop.f32.mrb[0].mxu0
  %v1780 = vadd.f32 0.0, %v1779
  %v1781 = vpop.f32.mrb[0].mxu0
  %1782 = vdwg.mxu0
  %v1784 = vsel %vm1709, %v1703, 0
  %1786 = vmatprep.subr.mxu0 0.0
  %1787 = vmatpush1.msra.mxu0 %v1704
  %1788 = vmatprep.subr.mxu0 0.0
  %1789 = vmatpush1.msra.mxu0 %v1705
  %1790 = vmatprep.subr.mxu0 0.0
  %1791 = vmatpush1.msra.mxu0 0.0
  %1792 = vmatprep.subr.mxu0 0.0
  %1793 = vmatpush1.msra.mxu0 0.0
  %1794 = vmatprep.subr.mxu0 0.0
  %1795 = vmatpush1.msra.mxu0 0.0
  %1796 = vmatprep.subr.mxu0 0.0
  %1797 = vmatpush1.msra.mxu0 0.0
  %1798 = vmatprep.subr.mxu0 0.0
  %1799 = vmatpush1.msra.mxu0 0.0
  %1800 = vmatprep.subr.mxu0 0.0
  %1801 = vmatpush1.msra.mxu0 0.0
  %1802 = vmatprep.subr.mxu0 0.0
  %1803 = vmatpush1.msra.mxu0 0.0
  %1804 = vmatprep.subr.mxu0 0.0
  %1805 = vmatpush1.msra.mxu0 0.0
  %1806 = vmatprep.subr.mxu0 0.0
  %1807 = vmatpush1.msra.mxu0 0.0
  %1808 = vmatprep.subr.mxu0 0.0
  %1809 = vmatpush1.msra.mxu0 0.0
  %1810 = vmatprep.subr.mxu0 0.0
  %1811 = vmatpush1.msra.mxu0 0.0
  %1812 = vmatprep.subr.mxu0 0.0
  %1813 = vmatpush1.msra.mxu0 0.0
  %1814 = vmatprep.subr.mxu0 0.0
  %1815 = vmatpush1.msra.mxu0 0.0
  %1816 = vmatprep.subr.mxu0 0.0
  %1817 = vmatpush1.msra.mxu0 0.0
  %1818 = vmatprep.subr.mxu0 0.0
  %1819 = vmatpush1.msra.mxu0 0.0
  %1820 = vmatprep.subr.mxu0 0.0
  %1821 = vmatpush1.msra.mxu0 0.0
  %1822 = vmatprep.subr.mxu0 0.0
  %1823 = vmatpush1.msra.mxu0 0.0
  %1824 = vmatprep.subr.mxu0 0.0
  %1825 = vmatpush1.msra.mxu0 0.0
  %1826 = vmatprep.subr.mxu0 0.0
  %1827 = vmatpush1.msra.mxu0 0.0
  %1828 = vmatprep.subr.mxu0 0.0
  %1829 = vmatpush1.msra.mxu0 0.0
  %1830 = vmatprep.subr.mxu0 0.0
  %1831 = vmatpush1.msra.mxu0 0.0
  %1832 = vmatprep.subr.mxu0 0.0
  %1833 = vmatpush1.msra.mxu0 0.0
  %1834 = vmatprep.subr.mxu0 0.0
  %1835 = vmatpush1.msra.mxu0 0.0
  %1836 = vmatprep.subr.mxu0 0.0
  %1837 = vmatpush1.msra.mxu0 0.0
  %1838 = vmatprep.subr.mxu0 0.0
  %1839 = vmatpush1.msra.mxu0 0.0
  %1840 = vmatprep.subr.mxu0 0.0
  %1841 = vmatpush1.msra.mxu0 0.0
  %1842 = vmatprep.subr.mxu0 0.0
  %1843 = vmatpush1.msra.mxu0 0.0
  %1844 = vmatprep.subr.mxu0 0.0
  %1845 = vmatpush1.msra.mxu0 0.0
  %1846 = vmatprep.subr.mxu0 0.0
  %1847 = vmatpush1.msra.mxu0 0.0
  %1848 = vmatprep.subr.mxu0 0.0
  %1849 = vmatpush1.msra.mxu0 0.0
  %1850 = vmatprep.mubr.f32.mxu0 0.0
  %1851 = vmatmul.mubr.f32.gmra.mrb[0].mxu0 %v1784
  %v1852 = vpop.f32.mrb[0].mxu0
  %v1853 = vadd.f32 %v1780, %v1852
  %v1854 = vpop.f32.mrb[0].mxu0
  %1855 = vdwg.mxu0
  %v1856 = vld [vmem:[%s11] sm:$0xff]
  %v1857 = vld [vmem:[%s11 + $0x8] sm:$0x7f]
  %vm1858 = vcmask 121856
  %v1860 = vsel %vm1858, %v1700, 0
  %vm1862 = vcmask 1046528
  %v1864 = vsel %vm1862, %v1857, 0
  %1866 = vmatprep.subr.mxu0 0.0
  %1867 = vmatpush1.msra.mxu0 %v1856
  %1868 = vmatprep.subr.mxu0 0.0
  %1869 = vmatpush1.msra.mxu0 %v1864
  %1870 = vmatprep.subr.mxu0 0.0
  %1871 = vmatpush1.msra.mxu0 0.0
  %1872 = vmatprep.subr.mxu0 0.0
  %1873 = vmatpush1.msra.mxu0 0.0
  %1874 = vmatprep.subr.mxu0 0.0
  %1875 = vmatpush1.msra.mxu0 0.0
  %1876 = vmatprep.subr.mxu0 0.0
  %1877 = vmatpush1.msra.mxu0 0.0
  %1878 = vmatprep.subr.mxu0 0.0
  %1879 = vmatpush1.msra.mxu0 0.0
  %1880 = vmatprep.subr.mxu0 0.0
  %1881 = vmatpush1.msra.mxu0 0.0
  %1882 = vmatprep.subr.mxu0 0.0
  %1883 = vmatpush1.msra.mxu0 0.0
  %1884 = vmatprep.subr.mxu0 0.0
  %1885 = vmatpush1.msra.mxu0 0.0
  %1886 = vmatprep.subr.mxu0 0.0
  %1887 = vmatpush1.msra.mxu0 0.0
  %1888 = vmatprep.subr.mxu0 0.0
  %1889 = vmatpush1.msra.mxu0 0.0
  %1890 = vmatprep.subr.mxu0 0.0
  %1891 = vmatpush1.msra.mxu0 0.0
  %1892 = vmatprep.subr.mxu0 0.0
  %1893 = vmatpush1.msra.mxu0 0.0
  %1894 = vmatprep.subr.mxu0 0.0
  %1895 = vmatpush1.msra.mxu0 0.0
  %1896 = vmatprep.subr.mxu0 0.0
  %1897 = vmatpush1.msra.mxu0 0.0
  %1898 = vmatprep.subr.mxu0 0.0
  %1899 = vmatpush1.msra.mxu0 0.0
  %1900 = vmatprep.subr.mxu0 0.0
  %1901 = vmatpush1.msra.mxu0 0.0
  %1902 = vmatprep.subr.mxu0 0.0
  %1903 = vmatpush1.msra.mxu0 0.0
  %1904 = vmatprep.subr.mxu0 0.0
  %1905 = vmatpush1.msra.mxu0 0.0
  %1906 = vmatprep.subr.mxu0 0.0
  %1907 = vmatpush1.msra.mxu0 0.0
  %1908 = vmatprep.subr.mxu0 0.0
  %1909 = vmatpush1.msra.mxu0 0.0
  %1910 = vmatprep.subr.mxu0 0.0
  %1911 = vmatpush1.msra.mxu0 0.0
  %1912 = vmatprep.subr.mxu0 0.0
  %1913 = vmatpush1.msra.mxu0 0.0
  %1914 = vmatprep.subr.mxu0 0.0
  %1915 = vmatpush1.msra.mxu0 0.0
  %1916 = vmatprep.subr.mxu0 0.0
  %1917 = vmatpush1.msra.mxu0 0.0
  %1918 = vmatprep.subr.mxu0 0.0
  %1919 = vmatpush1.msra.mxu0 0.0
  %1920 = vmatprep.subr.mxu0 0.0
  %1921 = vmatpush1.msra.mxu0 0.0
  %1922 = vmatprep.subr.mxu0 0.0
  %1923 = vmatpush1.msra.mxu0 0.0
  %1924 = vmatprep.subr.mxu0 0.0
  %1925 = vmatpush1.msra.mxu0 0.0
  %1926 = vmatprep.subr.mxu0 0.0
  %1927 = vmatpush1.msra.mxu0 0.0
  %1928 = vmatprep.subr.mxu0 0.0
  %1929 = vmatpush1.msra.mxu0 0.0
  %1930 = vmatprep.mubr.f32.mxu0 0.0
  %1931 = vmatmul.mubr.f32.gmra.mrb[0].mxu0 %v1860
  %v1932 = vpop.f32.mrb[0].mxu0
  %v1933 = vadd.f32 0.0, %v1932
  %v1934 = vpop.f32.mrb[0].mxu0
  %1935 = vdwg.mxu0
  %v1936 = vadd.f32 %v1853, %v1933
  %v1937 = vld [vmem:[%s12] sm:$0x1]
  %v1939 = vlaneseq
  %v1940 = vshrl.u32 %v1939, 7
  %v1941 = vsub.s32 0, %v1940
  %v1942 = vrot.slane %v1937, %v1941
  %v1944 = vadd.f32 %v1936, %v1942
  %v1945 = vmax.f32 %v1944, 0.0
  %v1946 = vld [vmem:[%s13] sm:$0xff]
  %v1947 = vld [vmem:[%s13 + $0x8] sm:$0xff]
  %v1948 = vld [vmem:[%s13 + $0x10] sm:$0xff]
  %v1949 = vld [vmem:[%s13 + $0x18] sm:$0xff]
  %v1950 = vld [vmem:[%s13 + $0x20] sm:$0xff]
  %v1951 = vld [vmem:[%s13 + $0x28] sm:$0xff]
  %v1952 = vld [vmem:[%s13 + $0x30] sm:$0xff]
  %v1953 = vld [vmem:[%s13 + $0x38] sm:$0xff]
  %v1954 = vld [vmem:[%s14] sm:$0x1]
  %v1956 = vlaneseq
  %v1957 = vshrl.u32 %v1956, 7
  %v1958 = vsub.s32 0, %v1957
  %v1959 = vrot.slane %v1954, %v1958
  %vm1961 = vcmask 523264
  %v1963 = vsel %vm1961, %v1945, 0
  %1965 = vmatprep.subr.mxu0 0.0
  %1966 = vmatpush1.msra.mxu0 %v1946
  %1967 = vmatprep.subr.mxu0 0.0
  %1968 = vmatpush1.msra.mxu0 %v1947
  %1969 = vmatprep.subr.mxu0 0.0
  %1970 = vmatpush1.msra.mxu0 %v1948
  %1971 = vmatprep.subr.mxu0 0.0
  %1972 = vmatpush1.msra.mxu0 %v1949
  %1973 = vmatprep.subr.mxu0 0.0
  %1974 = vmatpush1.msra.mxu0 %v1950
  %1975 = vmatprep.subr.mxu0 0.0
  %1976 = vmatpush1.msra.mxu0 %v1951
  %1977 = vmatprep.subr.mxu0 0.0
  %1978 = vmatpush1.msra.mxu0 %v1952
  %1979 = vmatprep.subr.mxu0 0.0
  %1980 = vmatpush1.msra.mxu0 %v1953
  %1981 = vmatprep.subr.mxu0 0.0
  %1982 = vmatpush1.msra.mxu0 0.0
  %1983 = vmatprep.subr.mxu0 0.0
  %1984 = vmatpush1.msra.mxu0 0.0
  %1985 = vmatprep.subr.mxu0 0.0
  %1986 = vmatpush1.msra.mxu0 0.0
  %1987 = vmatprep.subr.mxu0 0.0
  %1988 = vmatpush1.msra.mxu0 0.0
  %1989 = vmatprep.subr.mxu0 0.0
  %1990 = vmatpush1.msra.mxu0 0.0
  %1991 = vmatprep.subr.mxu0 0.0
  %1992 = vmatpush1.msra.mxu0 0.0
  %1993 = vmatprep.subr.mxu0 0.0
  %1994 = vmatpush1.msra.mxu0 0.0
  %1995 = vmatprep.subr.mxu0 0.0
  %1996 = vmatpush1.msra.mxu0 0.0
  %1997 = vmatprep.subr.mxu0 0.0
  %1998 = vmatpush1.msra.mxu0 0.0
  %1999 = vmatprep.subr.mxu0 0.0
  %2000 = vmatpush1.msra.mxu0 0.0
  %2001 = vmatprep.subr.mxu0 0.0
  %2002 = vmatpush1.msra.mxu0 0.0
  %2003 = vmatprep.subr.mxu0 0.0
  %2004 = vmatpush1.msra.mxu0 0.0
  %2005 = vmatprep.subr.mxu0 0.0
  %2006 = vmatpush1.msra.mxu0 0.0
  %2007 = vmatprep.subr.mxu0 0.0
  %2008 = vmatpush1.msra.mxu0 0.0
  %2009 = vmatprep.subr.mxu0 0.0
  %2010 = vmatpush1.msra.mxu0 0.0
  %2011 = vmatprep.subr.mxu0 0.0
  %2012 = vmatpush1.msra.mxu0 0.0
  %2013 = vmatprep.subr.mxu0 0.0
  %2014 = vmatpush1.msra.mxu0 0.0
  %2015 = vmatprep.subr.mxu0 0.0
  %2016 = vmatpush1.msra.mxu0 0.0
  %2017 = vmatprep.subr.mxu0 0.0
  %2018 = vmatpush1.msra.mxu0 0.0
  %2019 = vmatprep.subr.mxu0 0.0
  %2020 = vmatpush1.msra.mxu0 0.0
  %2021 = vmatprep.subr.mxu0 0.0
  %2022 = vmatpush1.msra.mxu0 0.0
  %2023 = vmatprep.subr.mxu0 0.0
  %2024 = vmatpush1.msra.mxu0 0.0
  %2025 = vmatprep.subr.mxu0 0.0
  %2026 = vmatpush1.msra.mxu0 0.0
  %2027 = vmatprep.subr.mxu0 0.0
  %2028 = vmatpush1.msra.mxu0 0.0
  %2029 = vmatprep.mubr.f32.mxu0 0.0
  %2030 = vmatmul.mubr.f32.gmra.mrb[0].mxu0 %v1963
  %v2031 = vpop.f32.mrb[0].mxu0
  %v2032 = vadd.f32 %v1959, %v2031
  %v2033 = vpop.f32.mrb[0].mxu0
  %2034 = vdwg.mxu0
  %v2035 = vmax.f32 %v2032, 0.0
  %v2036 = vld [vmem:[%s15] sm:$0xff]
  %v2037 = vld [vmem:[%s15 + $0x8] sm:$0xff]
  %v2038 = vld [vmem:[%s15 + $0x10] sm:$0xff]
  %v2039 = vld [vmem:[%s15 + $0x18] sm:$0xff]
  %v2040 = vld [vmem:[%s15 + $0x20] sm:$0xff]
  %v2041 = vld [vmem:[%s15 + $0x28] sm:$0xff]
  %v2042 = vld [vmem:[%s15 + $0x30] sm:$0xff]
  %v2043 = vld [vmem:[%s15 + $0x38] sm:$0xff]
  %v2044 = vld [vmem:[%s16] sm:$0x1]
  %v2046 = vlaneseq
  %v2047 = vshrl.u32 %v2046, 7
  %v2048 = vsub.s32 0, %v2047
  %v2049 = vrot.slane %v2044, %v2048
  %v2052 = vsel %vm1961, %v2035, 0
  %2054 = vmatprep.subr.mxu0 0.0
  %2055 = vmatpush1.msra.mxu0 %v2036
  %2056 = vmatprep.subr.mxu0 0.0
  %2057 = vmatpush1.msra.mxu0 %v2037
  %2058 = vmatprep.subr.mxu0 0.0
  %2059 = vmatpush1.msra.mxu0 %v2038
  %2060 = vmatprep.subr.mxu0 0.0
  %2061 = vmatpush1.msra.mxu0 %v2039
  %2062 = vmatprep.subr.mxu0 0.0
  %2063 = vmatpush1.msra.mxu0 %v2040
  %2064 = vmatprep.subr.mxu0 0.0
  %2065 = vmatpush1.msra.mxu0 %v2041
  %2066 = vmatprep.subr.mxu0 0.0
  %2067 = vmatpush1.msra.mxu0 %v2042
  %2068 = vmatprep.subr.mxu0 0.0
  %2069 = vmatpush1.msra.mxu0 %v2043
  %2070 = vmatprep.subr.mxu0 0.0
  %2071 = vmatpush1.msra.mxu0 0.0
  %2072 = vmatprep.subr.mxu0 0.0
  %2073 = vmatpush1.msra.mxu0 0.0
  %2074 = vmatprep.subr.mxu0 0.0
  %2075 = vmatpush1.msra.mxu0 0.0
  %2076 = vmatprep.subr.mxu0 0.0
  %2077 = vmatpush1.msra.mxu0 0.0
  %2078 = vmatprep.subr.mxu0 0.0
  %2079 = vmatpush1.msra.mxu0 0.0
  %2080 = vmatprep.subr.mxu0 0.0
  %2081 = vmatpush1.msra.mxu0 0.0
  %2082 = vmatprep.subr.mxu0 0.0
  %2083 = vmatpush1.msra.mxu0 0.0
  %2084 = vmatprep.subr.mxu0 0.0
  %2085 = vmatpush1.msra.mxu0 0.0
  %2086 = vmatprep.subr.mxu0 0.0
  %2087 = vmatpush1.msra.mxu0 0.0
  %2088 = vmatprep.subr.mxu0 0.0
  %2089 = vmatpush1.msra.mxu0 0.0
  %2090 = vmatprep.subr.mxu0 0.0
  %2091 = vmatpush1.msra.mxu0 0.0
  %2092 = vmatprep.subr.mxu0 0.0
  %2093 = vmatpush1.msra.mxu0 0.0
  %2094 = vmatprep.subr.mxu0 0.0
  %2095 = vmatpush1.msra.mxu0 0.0
  %2096 = vmatprep.subr.mxu0 0.0
  %2097 = vmatpush1.msra.mxu0 0.0
  %2098 = vmatprep.subr.mxu0 0.0
  %2099 = vmatpush1.msra.mxu0 0.0
  %2100 = vmatprep.subr.mxu0 0.0
  %2101 = vmatpush1.msra.mxu0 0.0
  %2102 = vmatprep.subr.mxu0 0.0
  %2103 = vmatpush1.msra.mxu0 0.0
  %2104 = vmatprep.subr.mxu0 0.0
  %2105 = vmatpush1.msra.mxu0 0.0
  %2106 = vmatprep.subr.mxu0 0.0
  %2107 = vmatpush1.msra.mxu0 0.0
  %2108 = vmatprep.subr.mxu0 0.0
  %2109 = vmatpush1.msra.mxu0 0.0
  %2110 = vmatprep.subr.mxu0 0.0
  %2111 = vmatpush1.msra.mxu0 0.0
  %2112 = vmatprep.subr.mxu0 0.0
  %2113 = vmatpush1.msra.mxu0 0.0
  %2114 = vmatprep.subr.mxu0 0.0
  %2115 = vmatpush1.msra.mxu0 0.0
  %2116 = vmatprep.subr.mxu0 0.0
  %2117 = vmatpush1.msra.mxu0 0.0
  %2118 = vmatprep.mubr.f32.mxu0 0.0
  %2119 = vmatmul.mubr.f32.gmra.mrb[0].mxu0 %v2052
  %v2120 = vpop.f32.mrb[0].mxu0
  %v2121 = vadd.f32 %v2049, %v2120
  %v2122 = vpop.f32.mrb[0].mxu0
  %2123 = vdwg.mxu0
  %vm2124 = vcmask 58368
  %2125 = vst.msk [vmem:[%s17] sm:$0x3] %vm2124, %v2121
  %2126 = vrot.lane.b32.xlu0 %v2035, 8
  %v2127 = vpop.permute.xlu0 %2126
  %vm2129 = vcmask 582720
  %2130 = vst.msk [vmem:[%s17] sm:$0x3] %vm2129, %v2127
  %vm2131 = vcmask 1041984
  %2132 = vst.msk [vmem:[%s17] sm:$0x3] %vm2131, 0.0
  // Predicated region
  $region70: #{actor_forward.1} parent=0 // pred_check
    _
  $region71: #{actor_forward.1} parent=0 // pred_check_branch
    %2134 = sbr.rel (0) target = $region73
  $region72: #{actor_forward.1} parent=0 // pred_region
    _
  $region73: #{actor_forward.1} parent=0 // pred_fallthru
    _
  // Predicated region
  $region74: #{actor_forward.1} parent=0 // pred_check
    _
  $region75: #{actor_forward.1} parent=0 // pred_check_branch
    %2136 = sbr.rel (0) target = $region77
  $region76: #{actor_forward.1} parent=0 // pred_region
    _
  $region77: #{actor_forward.1} parent=0 // pred_fallthru
    _

</llo_original>
